<compile_context>
chip_gen: v7x
topology: tpu7x:2x2x1
jax: 0.10.0
libtpu: 0.0.40
codegen_flags: <defaults>
</compile_context>

<pallas_src>
import functools
import math

import jax
import jax.numpy as jnp
from jax import lax
from jax.experimental import pallas as pl
from jax.experimental.pallas import tpu as pltpu


def encoder_layer_kernel(
    x_ref,
    wqkv_ref, bqkv_ref,
    wo_ref, bo_ref,
    g1_ref, be1_ref,
    w1_ref, b1_ref, w2_ref, b2_ref,
    g2_ref, be2_ref,
    out_ref,
    *, nhead, causal, eps, batch_block, seq,
):
    Bt, S = batch_block, seq
    D = x_ref.shape[-1]
    dh = D // nhead
    scale = 1.0 / math.sqrt(dh)
    M = Bt * S

    # Flatten (Bt, S, D) -> (Bt*S, D): layout-preserving, gives M = Bt*S matmuls.
    x = x_ref[...].reshape(M, D)                     # f32
    xb = x.astype(jnp.bfloat16)

    # ---- fused Q/K/V projection: one (M, D) x (D, 3D) MXU matmul --------------
    qkv = jnp.dot(xb, wqkv_ref[...],
                  preferred_element_type=jnp.float32) + bqkv_ref[...]

    # Fold 1/sqrt(dh) into Q once; mirror the module's .half() with bf16 on TPU.
    q = (qkv[:, :D] * scale).astype(jnp.bfloat16)
    k = qkv[:, D:2 * D].astype(jnp.bfloat16)
    v = qkv[:, 2 * D:].astype(jnp.bfloat16)

    # Hoisted causal mask (built once, reused across heads / batch rows).
    if causal:
        row = lax.broadcasted_iota(jnp.int32, (S, S), 0)
        col = lax.broadcasted_iota(jnp.int32, (S, S), 1)
        causal_ok = row >= col

    # ---- multi-head attention --------------------------------------------------
    # TODO(synk): for large nhead/S switch to lax.fori_loop(unroll=True) with
    #             pl.ds head slicing to bound live ranges (fine at demo scale).
    attn_rows = []
    for b in range(Bt):
        qr = q[b * S:(b + 1) * S]
        kr = k[b * S:(b + 1) * S]
        vr = v[b * S:(b + 1) * S]
        head_outs = []
        for h in range(nhead):
            qh = qr[:, h * dh:(h + 1) * dh]          # (S, dh) bf16
            kh = kr[:, h * dh:(h + 1) * dh]
            vh = vr[:, h * dh:(h + 1) * dh]

            # scores: contract dim 1 of both operands (no explicit transpose)
            s = lax.dot_general(qh, kh, (((1,), (1,)), ((), ())),
                                preferred_element_type=jnp.float32)   # (S, S)
            if causal:
                s = jnp.where(causal_ok, s, jnp.float32(-1e30))

            m = jnp.max(s, axis=-1, keepdims=True)
            p = jnp.exp(s - m)                        # unnormalized, p <= 1
            l = jnp.sum(p, axis=-1, keepdims=True)
            oh = jnp.dot(p.astype(jnp.bfloat16), vh,
                         preferred_element_type=jnp.float32)          # (S, dh)
            # deferred softmax normalization on the narrow (S, dh) result
            oh = oh * pl.reciprocal(l, approx=True)
            head_outs.append(oh.astype(jnp.bfloat16))
        attn_rows.append(jnp.concatenate(head_outs, axis=-1))         # (S, D)

    attn = attn_rows[0] if Bt == 1 else jnp.concatenate(attn_rows, axis=0)

    # ---- out_proj + residual + LayerNorm1 --------------------------------------
    attn_out = jnp.dot(attn, wo_ref[...],
                       preferred_element_type=jnp.float32) + bo_ref[...]
    h1 = x + attn_out                                 # dropout = identity
    mu1 = jnp.mean(h1, axis=-1, keepdims=True)
    var1 = jnp.mean(jnp.square(h1 - mu1), axis=-1, keepdims=True)
    h1n = (h1 - mu1) * lax.rsqrt(var1 + eps) * g1_ref[...] + be1_ref[...]

    # ---- FFN: Linear -> ReLU -> Linear ------------------------------------------
    f = jnp.dot(h1n.astype(jnp.bfloat16), w1_ref[...],
                preferred_element_type=jnp.float32) + b1_ref[...]
    f = jnp.maximum(f, 0.0)
    f = jnp.dot(f.astype(jnp.bfloat16), w2_ref[...],
                preferred_element_type=jnp.float32) + b2_ref[...]

    # ---- residual + LayerNorm2 ---------------------------------------------------
    h2 = h1n + f
    mu2 = jnp.mean(h2, axis=-1, keepdims=True)
    var2 = jnp.mean(jnp.square(h2 - mu2), axis=-1, keepdims=True)
    out = (h2 - mu2) * lax.rsqrt(var2 + eps) * g2_ref[...] + be2_ref[...]

    out_ref[...] = out.reshape(Bt, S, D).astype(out_ref.dtype)


def flash_encoder_layer(x, params, *, nhead, causal=False, eps=1e-5,
                        batch_block=1):
    """Forward pass of FlashTransformerEncoderLayer (inference).

    x: [B, S, D] float32.
    params: (wq,bq, wk,bk, wv,bv, wo,bo, g1,be1, w1,b1, w2,b2, g2,be2)
            weights [in, out] f32; biases / LN params [1, dim] f32.
    batch_block: batch rows per grid step.  1 keeps B parallel grid steps
                 (v7x megacore at small B); 2 gives M=2S matmuls that fill the
                 v6e/v7x 256-wide MXU and halve per-step overhead.
    """
    B, S, D = x.shape
    assert B % batch_block == 0 and D % nhead == 0
    (wq, bq, wk, bk, wv, bv, wo, bo,
     g1, be1, w1, b1, w2, b2, g2, be2) = params
    F = w1.shape[1]

    bf16 = jnp.bfloat16
    # Fused QKV weight/bias; weights stored bf16 (halves weight DMA bytes).
    wqkv = jnp.concatenate([wq, wk, wv], axis=1).astype(bf16)   # (D, 3D)
    bqkv = jnp.concatenate([bq, bk, bv], axis=1)                # (1, 3D) f32

    args = [
        x,
        wqkv, bqkv,
        wo.astype(bf16), bo,
        g1, be1,
        w1.astype(bf16), b1, w2.astype(bf16), b2,
        g2, be2,
    ]

    def resident(p):
        # Whole-array block, constant index map -> DMA'd once, VMEM-resident.
        # TODO(synk): at large D/F add pipeline_mode=pl.Buffered(1) so constant
        #             blocks are single-buffered (halves weight VMEM on v7x).
        return pl.BlockSpec(p.shape, lambda b: (0,) * p.ndim)

    in_specs = [pl.BlockSpec((batch_block, S, D), lambda b: (b, 0, 0))]
    in_specs += [resident(a) for a in args[1:]]

    # Advisory cost estimate so XLA schedules the custom call sensibly.
    flops = B * (2 * S * D * (3 * D)          # fused QKV projection
                 + 2 * 2 * S * S * D          # QK^T and PV
                 + 2 * S * D * D              # out_proj
                 + 2 * 2 * S * D * F)         # FFN
    bytes_accessed = (2 * B * S * D * 4                     # x in, out
                      + (4 * D * D + 2 * D * F) * 2         # bf16 weights
                      + (3 * D + 4 * D + F + 2 * D) * 4)    # biases + LN params
    cost = pl.CostEstimate(flops=flops,
                           transcendentals=B * nhead * S * S,
                           bytes_accessed=bytes_accessed)

    kernel = functools.partial(
        encoder_layer_kernel, nhead=nhead, causal=causal, eps=eps,
        batch_block=batch_block, seq=S)

    return pl.pallas_call(
        kernel,
        out_shape=jax.ShapeDtypeStruct((B, S, D), jnp.float32),
        grid=(B // batch_block,),
        in_specs=in_specs,
        out_specs=pl.BlockSpec((batch_block, S, D), lambda b: (b, 0, 0)),
        compiler_params=pltpu.CompilerParams(
            dimension_semantics=("parallel",),
            vmem_limit_bytes=48 * 1024 * 1024),
        cost_estimate=cost,
    )(*args)


# ----------------------------- pure-JAX reference -------------------------------
def reference_forward(x, params, *, nhead, causal=False, eps=1e-5):
    (wq, bq, wk, bk, wv, bv, wo, bo,
     g1, be1, w1, b1, w2, b2, g2, be2) = params
    B, S, D = x.shape
    dh = D // nhead
    bf16 = jnp.bfloat16

    def ln(h, g, b):
        mu = jnp.mean(h, axis=-1, keepdims=True)
        var = jnp.mean(jnp.square(h - mu), axis=-1, keepdims=True)
        return (h - mu) * lax.rsqrt(var + eps) * g + b

    xb = x.astype(bf16)
    q = jnp.dot(xb, wq.astype(bf16), preferred_element_type=jnp.float32) + bq
    k = jnp.dot(xb, wk.astype(bf16), preferred_element_type=jnp.float32) + bk
    v = jnp.dot(xb, wv.astype(bf16), preferred_element_type=jnp.float32) + bv

    q = q.reshape(B, S, nhead, dh).astype(bf16)
    k = k.reshape(B, S, nhead, dh).astype(bf16)
    v = v.reshape(B, S, nhead, dh).astype(bf16)

    s = jnp.einsum("bqhd,bkhd->bhqk", q, k,
                   preferred_element_type=jnp.float32) / jnp.sqrt(jnp.float32(dh))
    if causal:
        row = lax.broadcasted_iota(jnp.int32, (S, S), 0)
        col = lax.broadcasted_iota(jnp.int32, (S, S), 1)
        s = jnp.where(row >= col, s, jnp.float32(-1e30))
    p = jax.nn.softmax(s, axis=-1)
    o = jnp.einsum("bhqk,bkhd->bqhd", p.astype(bf16), v,
                   preferred_element_type=jnp.float32)
    attn = o.reshape(B, S, D)

    attn = jnp.dot(attn.astype(bf16), wo.astype(bf16),
                   preferred_element_type=jnp.float32) + bo
    h1 = ln(x + attn, g1, be1)

    f = jnp.dot(h1.astype(bf16), w1.astype(bf16),
                preferred_element_type=jnp.float32) + b1
    f = jnp.maximum(f, 0.0)
    f = jnp.dot(f.astype(bf16), w2.astype(bf16),
                preferred_element_type=jnp.float32) + b2
    return ln(h1 + f, g2, be2)


if __name__ == "__main__":
    # Small but lane-dense shapes (last dims multiples of 128).
    batch = 2
    seq = 128
    d_model = 128
    nhead = 4
    dim_feedforward = 256
    causal = False

    key = jax.random.PRNGKey(0)
    keys = jax.random.split(key, 20)

    def w(k, shape, s=0.05):
        return jax.random.normal(k, shape, dtype=jnp.float32) * s

    x = jax.random.normal(keys[0], (batch, seq, d_model), dtype=jnp.float32)

    params = (
        w(keys[1], (d_model, d_model)),  w(keys[2], (1, d_model)),           # q_proj
        w(keys[3], (d_model, d_model)),  w(keys[4], (1, d_model)),           # k_proj
        w(keys[5], (d_model, d_model)),  w(keys[6], (1, d_model)),           # v_proj
        w(keys[7], (d_model, d_model)),  w(keys[8], (1, d_model)),           # out_proj
        1.0 + w(keys[9], (1, d_model)),  w(keys[10], (1, d_model)),          # norm1
        w(keys[11], (d_model, dim_feedforward)), w(keys[12], (1, dim_feedforward)),  # ff[0]
        w(keys[13], (dim_feedforward, d_model)), w(keys[14], (1, d_model)),          # ff[3]
        1.0 + w(keys[15], (1, d_model)), w(keys[16], (1, d_model)),          # norm2
    )

    ref = reference_forward(x, params, nhead=nhead, causal=causal)

    # batch_block=1: 2 parallel grid steps (v7x megacore-friendly at B=2).
    out = flash_encoder_layer(x, params, nhead=nhead, causal=causal,
                              batch_block=1)
    jax.block_until_ready(out)
    assert out.shape == (batch, seq, d_model)
    assert bool(jnp.all(jnp.isfinite(out)))
    assert jnp.allclose(out, ref, atol=2e-2, rtol=2e-2), \
        f"max abs err {float(jnp.max(jnp.abs(out - ref)))}"

    # batch_block=2: M = 2*S = 256 matmuls (fills the v6e/v7x 256-wide MXU).
    out2 = flash_encoder_layer(x, params, nhead=nhead, causal=causal,
                               batch_block=2)
    jax.block_until_ready(out2)
    assert jnp.allclose(out2, ref, atol=2e-2, rtol=2e-2), \
        f"max abs err {float(jnp.max(jnp.abs(out2 - ref)))}"

    print("KERNEL_OK")
</pallas_src>

<mosaic_0001>
module attributes {stable_mosaic.version = 11 : i64} {
  func.func @encoder_layer_kernel(%arg0: i32, %arg1: memref<1x128x128xf32, #tpu.memory_space<vmem>>, %arg2: memref<128x384xbf16, #tpu.memory_space<vmem>>, %arg3: memref<1x384xf32, #tpu.memory_space<vmem>>, %arg4: memref<128x128xbf16, #tpu.memory_space<vmem>>, %arg5: memref<1x128xf32, #tpu.memory_space<vmem>>, %arg6: memref<1x128xf32, #tpu.memory_space<vmem>>, %arg7: memref<1x128xf32, #tpu.memory_space<vmem>>, %arg8: memref<128x256xbf16, #tpu.memory_space<vmem>>, %arg9: memref<1x256xf32, #tpu.memory_space<vmem>>, %arg10: memref<256x128xbf16, #tpu.memory_space<vmem>>, %arg11: memref<1x128xf32, #tpu.memory_space<vmem>>, %arg12: memref<1x128xf32, #tpu.memory_space<vmem>>, %arg13: memref<1x128xf32, #tpu.memory_space<vmem>>, %arg14: memref<1x128x128xf32, #tpu.memory_space<vmem>>) attributes {dimension_semantics = [#tpu.dimension_semantics<parallel>], iteration_bounds = array<i64: 2>, scalar_prefetch = 0 : i64, scratch_operands = 0 : i64, tpu.core_type = #tpu.core_type<tc>, window_params = [{transform_indices = @transform_0, window_bounds = array<i64: 1, 128, 128>}, {pipeline_mode = #tpu.pipeline_mode<synchronous>, transform_indices = @transform_1, window_bounds = array<i64: 128, 384>}, {pipeline_mode = #tpu.pipeline_mode<synchronous>, transform_indices = @transform_2, window_bounds = array<i64: 1, 384>}, {pipeline_mode = #tpu.pipeline_mode<synchronous>, transform_indices = @transform_3, window_bounds = array<i64: 128, 128>}, {pipeline_mode = #tpu.pipeline_mode<synchronous>, transform_indices = @transform_4, window_bounds = array<i64: 1, 128>}, {pipeline_mode = #tpu.pipeline_mode<synchronous>, transform_indices = @transform_5, window_bounds = array<i64: 1, 128>}, {pipeline_mode = #tpu.pipeline_mode<synchronous>, transform_indices = @transform_6, window_bounds = array<i64: 1, 128>}, {pipeline_mode = #tpu.pipeline_mode<synchronous>, transform_indices = @transform_7, window_bounds = array<i64: 128, 256>}, {pipeline_mode = #tpu.pipeline_mode<synchronous>, transform_indices = @transform_8, window_bounds = array<i64: 1, 256>}, {pipeline_mode = #tpu.pipeline_mode<synchronous>, transform_indices = @transform_9, window_bounds = array<i64: 256, 128>}, {pipeline_mode = #tpu.pipeline_mode<synchronous>, transform_indices = @transform_10, window_bounds = array<i64: 1, 128>}, {pipeline_mode = #tpu.pipeline_mode<synchronous>, transform_indices = @transform_11, window_bounds = array<i64: 1, 128>}, {pipeline_mode = #tpu.pipeline_mode<synchronous>, transform_indices = @transform_12, window_bounds = array<i64: 1, 128>}, {transform_indices = @transform_13, window_bounds = array<i64: 1, 128, 128>}]} {
    %c0 = arith.constant 0 : index
    %c0_0 = arith.constant 0 : index
    %c0_1 = arith.constant 0 : index
    %0 = vector.load %arg1[%c0, %c0_0, %c0_1] : memref<1x128x128xf32, #tpu.memory_space<vmem>>, vector<1x128x128xf32>
    %1 = vector.shape_cast %0 : vector<1x128x128xf32> to vector<128x128xf32>
    %2 = arith.truncf %1 : vector<128x128xf32> to vector<128x128xbf16>
    %c0_2 = arith.constant 0 : index
    %c0_3 = arith.constant 0 : index
    %3 = vector.load %arg2[%c0_2, %c0_3] : memref<128x384xbf16, #tpu.memory_space<vmem>>, vector<128x384xbf16>
    %cst = arith.constant dense<0.000000e+00> : vector<128x384xf32>
    %4 = tpu.matmul %2, %3, %cst {dimension_numbers = #tpu.dot_dimension_numbers<[1], [0], [0], [1], [0, 0, 1, 1], [], []>} : vector<128x128xbf16>, vector<128x384xbf16>, vector<128x384xf32> -> vector<128x384xf32>
    %c0_4 = arith.constant 0 : index
    %c0_5 = arith.constant 0 : index
    %5 = vector.load %arg3[%c0_4, %c0_5] : memref<1x384xf32, #tpu.memory_space<vmem>>, vector<1x384xf32>
    %6 = vector.broadcast %5 : vector<1x384xf32> to vector<128x384xf32>
    %7 = arith.addf %4, %6 : vector<128x384xf32>
    %8 = vector.extract_strided_slice %7 {offsets = [0, 0], sizes = [128, 128], strides = [1, 1]} : vector<128x384xf32> to vector<128x128xf32>
    %cst_6 = arith.constant 0.176776692 : f32
    %9 = vector.broadcast %cst_6 : f32 to vector<128x128xf32>
    %10 = arith.mulf %8, %9 : vector<128x128xf32>
    %11 = arith.truncf %10 : vector<128x128xf32> to vector<128x128xbf16>
    %12 = vector.extract_strided_slice %7 {offsets = [0, 128], sizes = [128, 128], strides = [1, 1]} : vector<128x384xf32> to vector<128x128xf32>
    %13 = arith.truncf %12 : vector<128x128xf32> to vector<128x128xbf16>
    %14 = vector.extract_strided_slice %7 {offsets = [0, 256], sizes = [128, 128], strides = [1, 1]} : vector<128x384xf32> to vector<128x128xf32>
    %15 = arith.truncf %14 : vector<128x128xf32> to vector<128x128xbf16>
    %16 = vector.extract_strided_slice %11 {offsets = [0, 0], sizes = [128, 32], strides = [1, 1]} : vector<128x128xbf16> to vector<128x32xbf16>
    %17 = vector.extract_strided_slice %13 {offsets = [0, 0], sizes = [128, 32], strides = [1, 1]} : vector<128x128xbf16> to vector<128x32xbf16>
    %18 = vector.extract_strided_slice %15 {offsets = [0, 0], sizes = [128, 32], strides = [1, 1]} : vector<128x128xbf16> to vector<128x32xbf16>
    %cst_7 = arith.constant dense<0.000000e+00> : vector<128x128xf32>
    %19 = tpu.matmul %16, %17, %cst_7 {dimension_numbers = #tpu.dot_dimension_numbers<[1], [1], [0], [0], [0, 0, 1, 0], [], []>} : vector<128x32xbf16>, vector<128x32xbf16>, vector<128x128xf32> -> vector<128x128xf32>
    %cst_8 = arith.constant dense<0xFF800000> : vector<128xf32>
    %20 = vector.multi_reduction <maximumf>, %19, %cst_8 [1] : vector<128x128xf32> to vector<128xf32>
    %21 = vector.shape_cast %20 : vector<128xf32> to vector<128x1xf32>
    %22 = vector.broadcast %21 : vector<128x1xf32> to vector<128x128xf32>
    %23 = arith.subf %19, %22 : vector<128x128xf32>
    %24 = math.exp %23 : vector<128x128xf32>
    %cst_9 = arith.constant dense<0.000000e+00> : vector<128xf32>
    %25 = vector.multi_reduction <add>, %24, %cst_9 [1] : vector<128x128xf32> to vector<128xf32>
    %26 = vector.shape_cast %25 : vector<128xf32> to vector<128x1xf32>
    %27 = arith.truncf %24 : vector<128x128xf32> to vector<128x128xbf16>
    %cst_10 = arith.constant dense<0.000000e+00> : vector<128x32xf32>
    %28 = tpu.matmul %27, %18, %cst_10 {dimension_numbers = #tpu.dot_dimension_numbers<[1], [0], [0], [1], [0, 0, 1, 1], [], []>} : vector<128x128xbf16>, vector<128x32xbf16>, vector<128x32xf32> -> vector<128x32xf32>
    %29 = tpu.reciprocal %26 {approx = true} : vector<128x1xf32> -> vector<128x1xf32>
    %30 = vector.broadcast %29 : vector<128x1xf32> to vector<128x32xf32>
    %31 = arith.mulf %28, %30 : vector<128x32xf32>
    %32 = arith.truncf %31 : vector<128x32xf32> to vector<128x32xbf16>
    %33 = vector.extract_strided_slice %11 {offsets = [0, 32], sizes = [128, 32], strides = [1, 1]} : vector<128x128xbf16> to vector<128x32xbf16>
    %34 = vector.extract_strided_slice %13 {offsets = [0, 32], sizes = [128, 32], strides = [1, 1]} : vector<128x128xbf16> to vector<128x32xbf16>
    %35 = vector.extract_strided_slice %15 {offsets = [0, 32], sizes = [128, 32], strides = [1, 1]} : vector<128x128xbf16> to vector<128x32xbf16>
    %cst_11 = arith.constant dense<0.000000e+00> : vector<128x128xf32>
    %36 = tpu.matmul %33, %34, %cst_11 {dimension_numbers = #tpu.dot_dimension_numbers<[1], [1], [0], [0], [0, 0, 1, 0], [], []>} : vector<128x32xbf16>, vector<128x32xbf16>, vector<128x128xf32> -> vector<128x128xf32>
    %cst_12 = arith.constant dense<0xFF800000> : vector<128xf32>
    %37 = vector.multi_reduction <maximumf>, %36, %cst_12 [1] : vector<128x128xf32> to vector<128xf32>
    %38 = vector.shape_cast %37 : vector<128xf32> to vector<128x1xf32>
    %39 = vector.broadcast %38 : vector<128x1xf32> to vector<128x128xf32>
    %40 = arith.subf %36, %39 : vector<128x128xf32>
    %41 = math.exp %40 : vector<128x128xf32>
    %cst_13 = arith.constant dense<0.000000e+00> : vector<128xf32>
    %42 = vector.multi_reduction <add>, %41, %cst_13 [1] : vector<128x128xf32> to vector<128xf32>
    %43 = vector.shape_cast %42 : vector<128xf32> to vector<128x1xf32>
    %44 = arith.truncf %41 : vector<128x128xf32> to vector<128x128xbf16>
    %cst_14 = arith.constant dense<0.000000e+00> : vector<128x32xf32>
    %45 = tpu.matmul %44, %35, %cst_14 {dimension_numbers = #tpu.dot_dimension_numbers<[1], [0], [0], [1], [0, 0, 1, 1], [], []>} : vector<128x128xbf16>, vector<128x32xbf16>, vector<128x32xf32> -> vector<128x32xf32>
    %46 = tpu.reciprocal %43 {approx = true} : vector<128x1xf32> -> vector<128x1xf32>
    %47 = vector.broadcast %46 : vector<128x1xf32> to vector<128x32xf32>
    %48 = arith.mulf %45, %47 : vector<128x32xf32>
    %49 = arith.truncf %48 : vector<128x32xf32> to vector<128x32xbf16>
    %50 = vector.extract_strided_slice %11 {offsets = [0, 64], sizes = [128, 32], strides = [1, 1]} : vector<128x128xbf16> to vector<128x32xbf16>
    %51 = vector.extract_strided_slice %13 {offsets = [0, 64], sizes = [128, 32], strides = [1, 1]} : vector<128x128xbf16> to vector<128x32xbf16>
    %52 = vector.extract_strided_slice %15 {offsets = [0, 64], sizes = [128, 32], strides = [1, 1]} : vector<128x128xbf16> to vector<128x32xbf16>
    %cst_15 = arith.constant dense<0.000000e+00> : vector<128x128xf32>
    %53 = tpu.matmul %50, %51, %cst_15 {dimension_numbers = #tpu.dot_dimension_numbers<[1], [1], [0], [0], [0, 0, 1, 0], [], []>} : vector<128x32xbf16>, vector<128x32xbf16>, vector<128x128xf32> -> vector<128x128xf32>
    %cst_16 = arith.constant dense<0xFF800000> : vector<128xf32>
    %54 = vector.multi_reduction <maximumf>, %53, %cst_16 [1] : vector<128x128xf32> to vector<128xf32>
    %55 = vector.shape_cast %54 : vector<128xf32> to vector<128x1xf32>
    %56 = vector.broadcast %55 : vector<128x1xf32> to vector<128x128xf32>
    %57 = arith.subf %53, %56 : vector<128x128xf32>
    %58 = math.exp %57 : vector<128x128xf32>
    %cst_17 = arith.constant dense<0.000000e+00> : vector<128xf32>
    %59 = vector.multi_reduction <add>, %58, %cst_17 [1] : vector<128x128xf32> to vector<128xf32>
    %60 = vector.shape_cast %59 : vector<128xf32> to vector<128x1xf32>
    %61 = arith.truncf %58 : vector<128x128xf32> to vector<128x128xbf16>
    %cst_18 = arith.constant dense<0.000000e+00> : vector<128x32xf32>
    %62 = tpu.matmul %61, %52, %cst_18 {dimension_numbers = #tpu.dot_dimension_numbers<[1], [0], [0], [1], [0, 0, 1, 1], [], []>} : vector<128x128xbf16>, vector<128x32xbf16>, vector<128x32xf32> -> vector<128x32xf32>
    %63 = tpu.reciprocal %60 {approx = true} : vector<128x1xf32> -> vector<128x1xf32>
    %64 = vector.broadcast %63 : vector<128x1xf32> to vector<128x32xf32>
    %65 = arith.mulf %62, %64 : vector<128x32xf32>
    %66 = arith.truncf %65 : vector<128x32xf32> to vector<128x32xbf16>
    %67 = vector.extract_strided_slice %11 {offsets = [0, 96], sizes = [128, 32], strides = [1, 1]} : vector<128x128xbf16> to vector<128x32xbf16>
    %68 = vector.extract_strided_slice %13 {offsets = [0, 96], sizes = [128, 32], strides = [1, 1]} : vector<128x128xbf16> to vector<128x32xbf16>
    %69 = vector.extract_strided_slice %15 {offsets = [0, 96], sizes = [128, 32], strides = [1, 1]} : vector<128x128xbf16> to vector<128x32xbf16>
    %cst_19 = arith.constant dense<0.000000e+00> : vector<128x128xf32>
    %70 = tpu.matmul %67, %68, %cst_19 {dimension_numbers = #tpu.dot_dimension_numbers<[1], [1], [0], [0], [0, 0, 1, 0], [], []>} : vector<128x32xbf16>, vector<128x32xbf16>, vector<128x128xf32> -> vector<128x128xf32>
    %cst_20 = arith.constant dense<0xFF800000> : vector<128xf32>
    %71 = vector.multi_reduction <maximumf>, %70, %cst_20 [1] : vector<128x128xf32> to vector<128xf32>
    %72 = vector.shape_cast %71 : vector<128xf32> to vector<128x1xf32>
    %73 = vector.broadcast %72 : vector<128x1xf32> to vector<128x128xf32>
    %74 = arith.subf %70, %73 : vector<128x128xf32>
    %75 = math.exp %74 : vector<128x128xf32>
    %cst_21 = arith.constant dense<0.000000e+00> : vector<128xf32>
    %76 = vector.multi_reduction <add>, %75, %cst_21 [1] : vector<128x128xf32> to vector<128xf32>
    %77 = vector.shape_cast %76 : vector<128xf32> to vector<128x1xf32>
    %78 = arith.truncf %75 : vector<128x128xf32> to vector<128x128xbf16>
    %cst_22 = arith.constant dense<0.000000e+00> : vector<128x32xf32>
    %79 = tpu.matmul %78, %69, %cst_22 {dimension_numbers = #tpu.dot_dimension_numbers<[1], [0], [0], [1], [0, 0, 1, 1], [], []>} : vector<128x128xbf16>, vector<128x32xbf16>, vector<128x32xf32> -> vector<128x32xf32>
    %80 = tpu.reciprocal %77 {approx = true} : vector<128x1xf32> -> vector<128x1xf32>
    %81 = vector.broadcast %80 : vector<128x1xf32> to vector<128x32xf32>
    %82 = arith.mulf %79, %81 : vector<128x32xf32>
    %83 = arith.truncf %82 : vector<128x32xf32> to vector<128x32xbf16>
    %84 = tpu.concatenate %32, %49, %66, %83 in 1 : vector<128x32xbf16>, vector<128x32xbf16>, vector<128x32xbf16>, vector<128x32xbf16> -> vector<128x128xbf16>
    %c0_23 = arith.constant 0 : index
    %c0_24 = arith.constant 0 : index
    %85 = vector.load %arg4[%c0_23, %c0_24] : memref<128x128xbf16, #tpu.memory_space<vmem>>, vector<128x128xbf16>
    %cst_25 = arith.constant dense<0.000000e+00> : vector<128x128xf32>
    %86 = tpu.matmul %84, %85, %cst_25 {dimension_numbers = #tpu.dot_dimension_numbers<[1], [0], [0], [1], [0, 0, 1, 1], [], []>} : vector<128x128xbf16>, vector<128x128xbf16>, vector<128x128xf32> -> vector<128x128xf32>
    %c0_26 = arith.constant 0 : index
    %c0_27 = arith.constant 0 : index
    %87 = vector.load %arg5[%c0_26, %c0_27] : memref<1x128xf32, #tpu.memory_space<vmem>>, vector<1x128xf32>
    %88 = vector.broadcast %87 : vector<1x128xf32> to vector<128x128xf32>
    %89 = arith.addf %86, %88 : vector<128x128xf32>
    %90 = arith.addf %1, %89 : vector<128x128xf32>
    %cst_28 = arith.constant dense<0.000000e+00> : vector<128xf32>
    %91 = vector.multi_reduction <add>, %90, %cst_28 [1] : vector<128x128xf32> to vector<128xf32>
    %92 = vector.shape_cast %91 : vector<128xf32> to vector<128x1xf32>
    %cst_29 = arith.constant 1.280000e+02 : f32
    %93 = vector.broadcast %cst_29 : f32 to vector<128x1xf32>
    %94 = arith.divf %92, %93 : vector<128x1xf32>
    %95 = vector.broadcast %94 : vector<128x1xf32> to vector<128x128xf32>
    %96 = arith.subf %90, %95 : vector<128x128xf32>
    %97 = arith.mulf %96, %96 : vector<128x128xf32>
    %cst_30 = arith.constant dense<0.000000e+00> : vector<128xf32>
    %98 = vector.multi_reduction <add>, %97, %cst_30 [1] : vector<128x128xf32> to vector<128xf32>
    %99 = vector.shape_cast %98 : vector<128xf32> to vector<128x1xf32>
    %cst_31 = arith.constant 1.280000e+02 : f32
    %100 = vector.broadcast %cst_31 : f32 to vector<128x1xf32>
    %101 = arith.divf %99, %100 : vector<128x1xf32>
    %102 = vector.broadcast %94 : vector<128x1xf32> to vector<128x128xf32>
    %103 = arith.subf %90, %102 : vector<128x128xf32>
    %cst_32 = arith.constant 9.99999974E-6 : f32
    %104 = vector.broadcast %cst_32 : f32 to vector<128x1xf32>
    %105 = arith.addf %101, %104 : vector<128x1xf32>
    %106 = math.rsqrt %105 : vector<128x1xf32>
    %107 = vector.broadcast %106 : vector<128x1xf32> to vector<128x128xf32>
    %108 = arith.mulf %103, %107 : vector<128x128xf32>
    %c0_33 = arith.constant 0 : index
    %c0_34 = arith.constant 0 : index
    %109 = vector.load %arg6[%c0_33, %c0_34] : memref<1x128xf32, #tpu.memory_space<vmem>>, vector<1x128xf32>
    %110 = vector.broadcast %109 : vector<1x128xf32> to vector<128x128xf32>
    %111 = arith.mulf %108, %110 : vector<128x128xf32>
    %c0_35 = arith.constant 0 : index
    %c0_36 = arith.constant 0 : index
    %112 = vector.load %arg7[%c0_35, %c0_36] : memref<1x128xf32, #tpu.memory_space<vmem>>, vector<1x128xf32>
    %113 = vector.broadcast %112 : vector<1x128xf32> to vector<128x128xf32>
    %114 = arith.addf %111, %113 : vector<128x128xf32>
    %115 = arith.truncf %114 : vector<128x128xf32> to vector<128x128xbf16>
    %c0_37 = arith.constant 0 : index
    %c0_38 = arith.constant 0 : index
    %116 = vector.load %arg8[%c0_37, %c0_38] : memref<128x256xbf16, #tpu.memory_space<vmem>>, vector<128x256xbf16>
    %cst_39 = arith.constant dense<0.000000e+00> : vector<128x256xf32>
    %117 = tpu.matmul %115, %116, %cst_39 {dimension_numbers = #tpu.dot_dimension_numbers<[1], [0], [0], [1], [0, 0, 1, 1], [], []>} : vector<128x128xbf16>, vector<128x256xbf16>, vector<128x256xf32> -> vector<128x256xf32>
    %c0_40 = arith.constant 0 : index
    %c0_41 = arith.constant 0 : index
    %118 = vector.load %arg9[%c0_40, %c0_41] : memref<1x256xf32, #tpu.memory_space<vmem>>, vector<1x256xf32>
    %119 = vector.broadcast %118 : vector<1x256xf32> to vector<128x256xf32>
    %120 = arith.addf %117, %119 : vector<128x256xf32>
    %cst_42 = arith.constant 0.000000e+00 : f32
    %121 = vector.broadcast %cst_42 : f32 to vector<128x256xf32>
    %122 = arith.maximumf %120, %121 : vector<128x256xf32>
    %123 = arith.truncf %122 : vector<128x256xf32> to vector<128x256xbf16>
    %c0_43 = arith.constant 0 : index
    %c0_44 = arith.constant 0 : index
    %124 = vector.load %arg10[%c0_43, %c0_44] : memref<256x128xbf16, #tpu.memory_space<vmem>>, vector<256x128xbf16>
    %cst_45 = arith.constant dense<0.000000e+00> : vector<128x128xf32>
    %125 = tpu.matmul %123, %124, %cst_45 {dimension_numbers = #tpu.dot_dimension_numbers<[1], [0], [0], [1], [0, 0, 1, 1], [], []>} : vector<128x256xbf16>, vector<256x128xbf16>, vector<128x128xf32> -> vector<128x128xf32>
    %c0_46 = arith.constant 0 : index
    %c0_47 = arith.constant 0 : index
    %126 = vector.load %arg11[%c0_46, %c0_47] : memref<1x128xf32, #tpu.memory_space<vmem>>, vector<1x128xf32>
    %127 = vector.broadcast %126 : vector<1x128xf32> to vector<128x128xf32>
    %128 = arith.addf %125, %127 : vector<128x128xf32>
    %129 = arith.addf %114, %128 : vector<128x128xf32>
    %cst_48 = arith.constant dense<0.000000e+00> : vector<128xf32>
    %130 = vector.multi_reduction <add>, %129, %cst_48 [1] : vector<128x128xf32> to vector<128xf32>
    %131 = vector.shape_cast %130 : vector<128xf32> to vector<128x1xf32>
    %cst_49 = arith.constant 1.280000e+02 : f32
    %132 = vector.broadcast %cst_49 : f32 to vector<128x1xf32>
    %133 = arith.divf %131, %132 : vector<128x1xf32>
    %134 = vector.broadcast %133 : vector<128x1xf32> to vector<128x128xf32>
    %135 = arith.subf %129, %134 : vector<128x128xf32>
    %136 = arith.mulf %135, %135 : vector<128x128xf32>
    %cst_50 = arith.constant dense<0.000000e+00> : vector<128xf32>
    %137 = vector.multi_reduction <add>, %136, %cst_50 [1] : vector<128x128xf32> to vector<128xf32>
    %138 = vector.shape_cast %137 : vector<128xf32> to vector<128x1xf32>
    %cst_51 = arith.constant 1.280000e+02 : f32
    %139 = vector.broadcast %cst_51 : f32 to vector<128x1xf32>
    %140 = arith.divf %138, %139 : vector<128x1xf32>
    %141 = vector.broadcast %133 : vector<128x1xf32> to vector<128x128xf32>
    %142 = arith.subf %129, %141 : vector<128x128xf32>
    %cst_52 = arith.constant 9.99999974E-6 : f32
    %143 = vector.broadcast %cst_52 : f32 to vector<128x1xf32>
    %144 = arith.addf %140, %143 : vector<128x1xf32>
    %145 = math.rsqrt %144 : vector<128x1xf32>
    %146 = vector.broadcast %145 : vector<128x1xf32> to vector<128x128xf32>
    %147 = arith.mulf %142, %146 : vector<128x128xf32>
    %c0_53 = arith.constant 0 : index
    %c0_54 = arith.constant 0 : index
    %148 = vector.load %arg12[%c0_53, %c0_54] : memref<1x128xf32, #tpu.memory_space<vmem>>, vector<1x128xf32>
    %149 = vector.broadcast %148 : vector<1x128xf32> to vector<128x128xf32>
    %150 = arith.mulf %147, %149 : vector<128x128xf32>
    %c0_55 = arith.constant 0 : index
    %c0_56 = arith.constant 0 : index
    %151 = vector.load %arg13[%c0_55, %c0_56] : memref<1x128xf32, #tpu.memory_space<vmem>>, vector<1x128xf32>
    %152 = vector.broadcast %151 : vector<1x128xf32> to vector<128x128xf32>
    %153 = arith.addf %150, %152 : vector<128x128xf32>
    %154 = vector.shape_cast %153 : vector<128x128xf32> to vector<1x128x128xf32>
    %c0_57 = arith.constant 0 : index
    %c0_58 = arith.constant 0 : index
    %c0_59 = arith.constant 0 : index
    %155 = vector.load %arg14[%c0_57, %c0_58, %c0_59] : memref<1x128x128xf32, #tpu.memory_space<vmem>>, vector<1x128x128xf32>
    tpu.vector_store %arg14[%c0_57, %c0_58, %c0_59], %154 {strides = array<i32>} : memref<1x128x128xf32, #tpu.memory_space<vmem>>, vector<1x128x128xf32>,
    return
  }
  func.func @transform_0(%arg0: i32) -> (i32, i32, i32) {
    %c0_i32 = arith.constant 0 : i32
    %c0_i32_0 = arith.constant 0 : i32
    %c0_i32_1 = arith.constant 0 : i32
    return %arg0, %c0_i32, %c0_i32_0 : i32, i32, i32
  }
  func.func @transform_1(%arg0: i32) -> (i32, i32) {
    %c0_i32 = arith.constant 0 : i32
    %c0_i32_0 = arith.constant 0 : i32
    %c0_i32_1 = arith.constant 0 : i32
    return %c0_i32, %c0_i32_0 : i32, i32
  }
  func.func @transform_2(%arg0: i32) -> (i32, i32) {
    %c0_i32 = arith.constant 0 : i32
    %c0_i32_0 = arith.constant 0 : i32
    %c0_i32_1 = arith.constant 0 : i32
    return %c0_i32, %c0_i32_0 : i32, i32
  }
  func.func @transform_3(%arg0: i32) -> (i32, i32) {
    %c0_i32 = arith.constant 0 : i32
    %c0_i32_0 = arith.constant 0 : i32
    %c0_i32_1 = arith.constant 0 : i32
    return %c0_i32, %c0_i32_0 : i32, i32
  }
  func.func @transform_4(%arg0: i32) -> (i32, i32) {
    %c0_i32 = arith.constant 0 : i32
    %c0_i32_0 = arith.constant 0 : i32
    %c0_i32_1 = arith.constant 0 : i32
    return %c0_i32, %c0_i32_0 : i32, i32
  }
  func.func @transform_5(%arg0: i32) -> (i32, i32) {
    %c0_i32 = arith.constant 0 : i32
    %c0_i32_0 = arith.constant 0 : i32
    %c0_i32_1 = arith.constant 0 : i32
    return %c0_i32, %c0_i32_0 : i32, i32
  }
  func.func @transform_6(%arg0: i32) -> (i32, i32) {
    %c0_i32 = arith.constant 0 : i32
    %c0_i32_0 = arith.constant 0 : i32
    %c0_i32_1 = arith.constant 0 : i32
    return %c0_i32, %c0_i32_0 : i32, i32
  }
  func.func @transform_7(%arg0: i32) -> (i32, i32) {
    %c0_i32 = arith.constant 0 : i32
    %c0_i32_0 = arith.constant 0 : i32
    %c0_i32_1 = arith.constant 0 : i32
    return %c0_i32, %c0_i32_0 : i32, i32
  }
  func.func @transform_8(%arg0: i32) -> (i32, i32) {
    %c0_i32 = arith.constant 0 : i32
    %c0_i32_0 = arith.constant 0 : i32
    %c0_i32_1 = arith.constant 0 : i32
    return %c0_i32, %c0_i32_0 : i32, i32
  }
  func.func @transform_9(%arg0: i32) -> (i32, i32) {
    %c0_i32 = arith.constant 0 : i32
    %c0_i32_0 = arith.constant 0 : i32
    %c0_i32_1 = arith.constant 0 : i32
    return %c0_i32, %c0_i32_0 : i32, i32
  }
  func.func @transform_10(%arg0: i32) -> (i32, i32) {
    %c0_i32 = arith.constant 0 : i32
    %c0_i32_0 = arith.constant 0 : i32
    %c0_i32_1 = arith.constant 0 : i32
    return %c0_i32, %c0_i32_0 : i32, i32
  }
  func.func @transform_11(%arg0: i32) -> (i32, i32) {
    %c0_i32 = arith.constant 0 : i32
    %c0_i32_0 = arith.constant 0 : i32
    %c0_i32_1 = arith.constant 0 : i32
    return %c0_i32, %c0_i32_0 : i32, i32
  }
  func.func @transform_12(%arg0: i32) -> (i32, i32) {
    %c0_i32 = arith.constant 0 : i32
    %c0_i32_0 = arith.constant 0 : i32
    %c0_i32_1 = arith.constant 0 : i32
    return %c0_i32, %c0_i32_0 : i32, i32
  }
  func.func @transform_13(%arg0: i32) -> (i32, i32, i32) {
    %c0_i32 = arith.constant 0 : i32
    %c0_i32_0 = arith.constant 0 : i32
    %c0_i32_1 = arith.constant 0 : i32
    return %arg0, %c0_i32, %c0_i32_0 : i32, i32, i32
  }
}

</mosaic_0001>

<llo_original>
// kernel: tpu_custom_call.1
$region0: #{tpu_custom_call.1}
  #allocation0 [shape = 'u32[]', space=smem, size = 0x4, offset = 0x4, fixed_abs, tag = 'smem constant byte address 0x4 - core index']
  #allocation1 [shape = 'u32[144,128]{1,0:T(1,128)}', space=vmem, size = 0x12000, scoped, tag = 'internal scratch']
  %s0 = inlined_call_operand.hbm [shape: f32[2,128,128], index: 0, kind: input, shape index: {}]
  %s1 = inlined_call_operand.hbm [shape: bf16[128,384], index: 1, kind: input, shape index: {}]
  %s2 = inlined_call_operand.vmem [shape: f32[1,384], index: 2, kind: input, shape index: {}]
  %s3 = inlined_call_operand.hbm [shape: bf16[128,128], index: 3, kind: input, shape index: {}]
  %s4 = inlined_call_operand.vmem [shape: f32[1,128], index: 4, kind: input, shape index: {}]
  %s5 = inlined_call_operand.vmem [shape: f32[1,128], index: 5, kind: input, shape index: {}]
  %s6 = inlined_call_operand.vmem [shape: f32[1,128], index: 6, kind: input, shape index: {}]
  %s7 = inlined_call_operand.hbm [shape: bf16[128,256], index: 7, kind: input, shape index: {}]
  %s8 = inlined_call_operand.vmem [shape: f32[1,256], index: 8, kind: input, shape index: {}]
  %s9 = inlined_call_operand.hbm [shape: bf16[256,128], index: 9, kind: input, shape index: {}]
  %s10 = inlined_call_operand.vmem [shape: f32[1,128], index: 10, kind: input, shape index: {}]
  %s11 = inlined_call_operand.vmem [shape: f32[1,128], index: 11, kind: input, shape index: {}]
  %s12 = inlined_call_operand.vmem [shape: f32[1,128], index: 12, kind: input, shape index: {}]
  %s13 = inlined_call_operand.hbm [shape: f32[2,128,128], index: 13, kind: output, shape index: {}]
  %s14 = sld [smem:[#allocation0]]
  $region105: #{tpu_custom_call.1} parent=0
    _
  %s16 = ssub.s32 1, %s14
  %s17 = scalar_select 0, %s16, %s14
  $region1: #{tpu_custom_call.1} parent=0
    #allocation2 [shape = 'u8[131072]{0}', space=vmem, size = 0x20000, scoped, tag = 'input window, operand 0']
    #allocation3 [shape = 's32[2]{0}', space=sflag, size = 0x8, scoped, tag = 'scoped memory for tpu_custom_call.1']
    #allocation4 [shape = 's32[2]{0}', space=sflag, size = 0x8, scoped, tag = 'scoped memory for tpu_custom_call.1']
    #allocation5 [shape = 'u8[98304]{0}', space=vmem, size = 0x18000, scoped, tag = 'input window, operand 1, single buffered']
    #allocation6 [shape = 's32[1]{0}', space=sflag, size = 0x4, scoped, tag = 'scoped memory for tpu_custom_call.1']
    #allocation7 [shape = 'u8[32768]{0}', space=vmem, size = 0x8000, scoped, tag = 'input window, operand 3, single buffered']
    #allocation8 [shape = 'u8[65536]{0}', space=vmem, size = 0x10000, scoped, tag = 'input window, operand 7, single buffered']
    #allocation9 [shape = 's32[1]{0}', space=sflag, size = 0x4, scoped, tag = 'scoped memory for tpu_custom_call.1']
    #allocation10 [shape = 'u8[65536]{0}', space=vmem, size = 0x10000, scoped, tag = 'input window, operand 9, single buffered']
    #allocation11 [shape = 'u8[131072]{0}', space=vmem, size = 0x20000, scoped, tag = 'output window, operand 0']
    %18 = vsyncpa [#allocation3], 0
    %s19 = scalar_lea.sflag [#allocation3], 1
    %20 = vsyncpa %s19, 0
    %21 = vsyncpa [#allocation6], 0
    %22 = vsyncpa [#allocation9], 0
    %23 = vsyncpa [#allocation4], 0
    %s24 = scalar_lea.sflag [#allocation4], 1
    %25 = vsyncpa %s24, 0
    loop: start=0, step=1, limit=4
    $region2: #{tpu_custom_call.1} parent=1 // loop_pre_header
      _
    $region3: #{tpu_custom_call.1} parent=1 // loop_header
      %s27 = sphi 0, %s31
      %p28 = scmp.ge.s32.totalorder %s27, 4
      %s37 = sphi 0, %s39
      %s40 = sphi 0, %s37
      %s41 = sphi 0, %s40
      %s57 = sphi 0, %s41
      %s61 = sphi 0, %s61
      %s63 = sphi 0, %s61
      %s64 = sphi 0, %s63
      %s78 = sphi 0, %s64
      %s82 = sphi 0, %s82
      %s84 = sphi 0, %s82
      %s85 = sphi 0, %s84
      %s99 = sphi 0, %s85
      %s103 = sphi 0, %s103
      %s105 = sphi 0, %s103
      %s106 = sphi 0, %s105
      %s120 = sphi 0, %s106
      %s124 = sphi 0, %s124
      %s126 = sphi 0, %s124
      %s127 = sphi 0, %s126
      %s141 = sphi 0, %s127
      %s145 = sphi 0, %s145
      %s147 = sphi 0, %s145
      %s148 = sphi 0, %s147
      %s162 = sphi 0, %s148
      %s166 = sphi 0, %s166
      %s168 = sphi 0, %s166
      %s169 = sphi 0, %s168
      %s183 = sphi 0, %s169
      %s187 = sphi 0, %s187
      %s189 = sphi 0, %s187
      %s190 = sphi 0, %s189
      %s204 = sphi 0, %s190
      %s208 = sphi 0, %s208
      %s210 = sphi 0, %s208
      %s211 = sphi 0, %s210
      %s225 = sphi 0, %s211
      %s229 = sphi 0, %s229
      %s231 = sphi 0, %s229
      %s232 = sphi 0, %s231
      %s246 = sphi 0, %s232
      %s250 = sphi 0, %s250
      %s252 = sphi 0, %s250
      %s253 = sphi 0, %s252
      %s267 = sphi 0, %s253
      %s271 = sphi 0, %s271
      %s273 = sphi 0, %s271
      %s274 = sphi 0, %s273
      %s288 = sphi 0, %s274
      %s292 = sphi 0, %s292
      %s294 = sphi 0, %s292
      %s295 = sphi 0, %s294
      %s309 = sphi 0, %s295
      %s315 = sphi 0, %s317
      %s318 = sphi 0, %s315
      %s319 = sphi 0, %s318
      %s335 = sphi 0, %s319
    $region4: #{tpu_custom_call.1} parent=1 // loop_header_branch
      %30 = sbr.rel (%p28) target = $region8
    $region5: #{tpu_custom_call.1} parent=1 // loop_body
      %s32 = ssub.s32 %s27, 1
      %s33 = ssub.s32 %s27, 2
      %s34 = sadd.s32 %s27, 1
      %s35 = ssub.s32 %s27, %s34
      %p36 = scmp.eq.s32.totalorder %s35, 0
      %s38 = sadd.s32 %s37, 1
      %s39 = scalar_select %p36, %s37, %s38
      %p42 = pneg %p36
      %p43 = scmp.eq.s32.totalorder %s27, 1
      %p44 = por %p42, %p43
      %p45 = scmp.ne.s32.totalorder %s37, %s40
      %p46 = scmp.eq.s32.totalorder %s27, 0
      %p47 = por %p45, %p46
      %p48 = scmp.ne.s32.totalorder %s37, %s40
      %p49 = scmp.eq.s32.totalorder %s32, 1
      %p50 = por %p48, %p49
      %p51 = scmp.ne.s32.totalorder %s40, %s41
      %p52 = scmp.eq.s32.totalorder %s32, 0
      %p53 = por %p51, %p52
      %p54 = scmp.ne.s32.totalorder %s40, %s41
      %p55 = scmp.eq.s32.totalorder %s33, 1
      %p56 = por %p54, %p55
      %p58 = scmp.ne.s32.totalorder %s41, %s57
      %p59 = scmp.eq.s32.totalorder %s33, 0
      %p60 = por %p58, %p59
      %s62 = sadd.s32 %s61, 1
      %p65 = scmp.eq.s32.totalorder %s27, 1
      %p66 = scmp.ne.s32.totalorder %s61, %s63
      %p67 = scmp.eq.s32.totalorder %s27, 0
      %p68 = por %p66, %p67
      %p69 = scmp.ne.s32.totalorder %s61, %s63
      %p70 = scmp.eq.s32.totalorder %s32, 1
      %p71 = por %p69, %p70
      %p72 = scmp.ne.s32.totalorder %s63, %s64
      %p73 = scmp.eq.s32.totalorder %s32, 0
      %p74 = por %p72, %p73
      %p75 = scmp.ne.s32.totalorder %s63, %s64
      %p76 = scmp.eq.s32.totalorder %s33, 1
      %p77 = por %p75, %p76
      %p79 = scmp.ne.s32.totalorder %s64, %s78
      %p80 = scmp.eq.s32.totalorder %s33, 0
      %p81 = por %p79, %p80
      %s83 = sadd.s32 %s82, 1
      %p86 = scmp.eq.s32.totalorder %s27, 1
      %p87 = scmp.ne.s32.totalorder %s82, %s84
      %p88 = scmp.eq.s32.totalorder %s27, 0
      %p89 = por %p87, %p88
      %p90 = scmp.ne.s32.totalorder %s82, %s84
      %p91 = scmp.eq.s32.totalorder %s32, 1
      %p92 = por %p90, %p91
      %p93 = scmp.ne.s32.totalorder %s84, %s85
      %p94 = scmp.eq.s32.totalorder %s32, 0
      %p95 = por %p93, %p94
      %p96 = scmp.ne.s32.totalorder %s84, %s85
      %p97 = scmp.eq.s32.totalorder %s33, 1
      %p98 = por %p96, %p97
      %p100 = scmp.ne.s32.totalorder %s85, %s99
      %p101 = scmp.eq.s32.totalorder %s33, 0
      %p102 = por %p100, %p101
      %s104 = sadd.s32 %s103, 1
      %p107 = scmp.eq.s32.totalorder %s27, 1
      %p108 = scmp.ne.s32.totalorder %s103, %s105
      %p109 = scmp.eq.s32.totalorder %s27, 0
      %p110 = por %p108, %p109
      %p111 = scmp.ne.s32.totalorder %s103, %s105
      %p112 = scmp.eq.s32.totalorder %s32, 1
      %p113 = por %p111, %p112
      %p114 = scmp.ne.s32.totalorder %s105, %s106
      %p115 = scmp.eq.s32.totalorder %s32, 0
      %p116 = por %p114, %p115
      %p117 = scmp.ne.s32.totalorder %s105, %s106
      %p118 = scmp.eq.s32.totalorder %s33, 1
      %p119 = por %p117, %p118
      %p121 = scmp.ne.s32.totalorder %s106, %s120
      %p122 = scmp.eq.s32.totalorder %s33, 0
      %p123 = por %p121, %p122
      %s125 = sadd.s32 %s124, 1
      %p128 = scmp.eq.s32.totalorder %s27, 1
      %p129 = scmp.ne.s32.totalorder %s124, %s126
      %p130 = scmp.eq.s32.totalorder %s27, 0
      %p131 = por %p129, %p130
      %p132 = scmp.ne.s32.totalorder %s124, %s126
      %p133 = scmp.eq.s32.totalorder %s32, 1
      %p134 = por %p132, %p133
      %p135 = scmp.ne.s32.totalorder %s126, %s127
      %p136 = scmp.eq.s32.totalorder %s32, 0
      %p137 = por %p135, %p136
      %p138 = scmp.ne.s32.totalorder %s126, %s127
      %p139 = scmp.eq.s32.totalorder %s33, 1
      %p140 = por %p138, %p139
      %p142 = scmp.ne.s32.totalorder %s127, %s141
      %p143 = scmp.eq.s32.totalorder %s33, 0
      %p144 = por %p142, %p143
      %s146 = sadd.s32 %s145, 1
      %p149 = scmp.eq.s32.totalorder %s27, 1
      %p150 = scmp.ne.s32.totalorder %s145, %s147
      %p151 = scmp.eq.s32.totalorder %s27, 0
      %p152 = por %p150, %p151
      %p153 = scmp.ne.s32.totalorder %s145, %s147
      %p154 = scmp.eq.s32.totalorder %s32, 1
      %p155 = por %p153, %p154
      %p156 = scmp.ne.s32.totalorder %s147, %s148
      %p157 = scmp.eq.s32.totalorder %s32, 0
      %p158 = por %p156, %p157
      %p159 = scmp.ne.s32.totalorder %s147, %s148
      %p160 = scmp.eq.s32.totalorder %s33, 1
      %p161 = por %p159, %p160
      %p163 = scmp.ne.s32.totalorder %s148, %s162
      %p164 = scmp.eq.s32.totalorder %s33, 0
      %p165 = por %p163, %p164
      %s167 = sadd.s32 %s166, 1
      %p170 = scmp.eq.s32.totalorder %s27, 1
      %p171 = scmp.ne.s32.totalorder %s166, %s168
      %p172 = scmp.eq.s32.totalorder %s27, 0
      %p173 = por %p171, %p172
      %p174 = scmp.ne.s32.totalorder %s166, %s168
      %p175 = scmp.eq.s32.totalorder %s32, 1
      %p176 = por %p174, %p175
      %p177 = scmp.ne.s32.totalorder %s168, %s169
      %p178 = scmp.eq.s32.totalorder %s32, 0
      %p179 = por %p177, %p178
      %p180 = scmp.ne.s32.totalorder %s168, %s169
      %p181 = scmp.eq.s32.totalorder %s33, 1
      %p182 = por %p180, %p181
      %p184 = scmp.ne.s32.totalorder %s169, %s183
      %p185 = scmp.eq.s32.totalorder %s33, 0
      %p186 = por %p184, %p185
      %s188 = sadd.s32 %s187, 1
      %p191 = scmp.eq.s32.totalorder %s27, 1
      %p192 = scmp.ne.s32.totalorder %s187, %s189
      %p193 = scmp.eq.s32.totalorder %s27, 0
      %p194 = por %p192, %p193
      %p195 = scmp.ne.s32.totalorder %s187, %s189
      %p196 = scmp.eq.s32.totalorder %s32, 1
      %p197 = por %p195, %p196
      %p198 = scmp.ne.s32.totalorder %s189, %s190
      %p199 = scmp.eq.s32.totalorder %s32, 0
      %p200 = por %p198, %p199
      %p201 = scmp.ne.s32.totalorder %s189, %s190
      %p202 = scmp.eq.s32.totalorder %s33, 1
      %p203 = por %p201, %p202
      %p205 = scmp.ne.s32.totalorder %s190, %s204
      %p206 = scmp.eq.s32.totalorder %s33, 0
      %p207 = por %p205, %p206
      %s209 = sadd.s32 %s208, 1
      %p212 = scmp.eq.s32.totalorder %s27, 1
      %p213 = scmp.ne.s32.totalorder %s208, %s210
      %p214 = scmp.eq.s32.totalorder %s27, 0
      %p215 = por %p213, %p214
      %p216 = scmp.ne.s32.totalorder %s208, %s210
      %p217 = scmp.eq.s32.totalorder %s32, 1
      %p218 = por %p216, %p217
      %p219 = scmp.ne.s32.totalorder %s210, %s211
      %p220 = scmp.eq.s32.totalorder %s32, 0
      %p221 = por %p219, %p220
      %p222 = scmp.ne.s32.totalorder %s210, %s211
      %p223 = scmp.eq.s32.totalorder %s33, 1
      %p224 = por %p222, %p223
      %p226 = scmp.ne.s32.totalorder %s211, %s225
      %p227 = scmp.eq.s32.totalorder %s33, 0
      %p228 = por %p226, %p227
      %s230 = sadd.s32 %s229, 1
      %p233 = scmp.eq.s32.totalorder %s27, 1
      %p234 = scmp.ne.s32.totalorder %s229, %s231
      %p235 = scmp.eq.s32.totalorder %s27, 0
      %p236 = por %p234, %p235
      %p237 = scmp.ne.s32.totalorder %s229, %s231
      %p238 = scmp.eq.s32.totalorder %s32, 1
      %p239 = por %p237, %p238
      %p240 = scmp.ne.s32.totalorder %s231, %s232
      %p241 = scmp.eq.s32.totalorder %s32, 0
      %p242 = por %p240, %p241
      %p243 = scmp.ne.s32.totalorder %s231, %s232
      %p244 = scmp.eq.s32.totalorder %s33, 1
      %p245 = por %p243, %p244
      %p247 = scmp.ne.s32.totalorder %s232, %s246
      %p248 = scmp.eq.s32.totalorder %s33, 0
      %p249 = por %p247, %p248
      %s251 = sadd.s32 %s250, 1
      %p254 = scmp.eq.s32.totalorder %s27, 1
      %p255 = scmp.ne.s32.totalorder %s250, %s252
      %p256 = scmp.eq.s32.totalorder %s27, 0
      %p257 = por %p255, %p256
      %p258 = scmp.ne.s32.totalorder %s250, %s252
      %p259 = scmp.eq.s32.totalorder %s32, 1
      %p260 = por %p258, %p259
      %p261 = scmp.ne.s32.totalorder %s252, %s253
      %p262 = scmp.eq.s32.totalorder %s32, 0
      %p263 = por %p261, %p262
      %p264 = scmp.ne.s32.totalorder %s252, %s253
      %p265 = scmp.eq.s32.totalorder %s33, 1
      %p266 = por %p264, %p265
      %p268 = scmp.ne.s32.totalorder %s253, %s267
      %p269 = scmp.eq.s32.totalorder %s33, 0
      %p270 = por %p268, %p269
      %s272 = sadd.s32 %s271, 1
      %p275 = scmp.eq.s32.totalorder %s27, 1
      %p276 = scmp.ne.s32.totalorder %s271, %s273
      %p277 = scmp.eq.s32.totalorder %s27, 0
      %p278 = por %p276, %p277
      %p279 = scmp.ne.s32.totalorder %s271, %s273
      %p280 = scmp.eq.s32.totalorder %s32, 1
      %p281 = por %p279, %p280
      %p282 = scmp.ne.s32.totalorder %s273, %s274
      %p283 = scmp.eq.s32.totalorder %s32, 0
      %p284 = por %p282, %p283
      %p285 = scmp.ne.s32.totalorder %s273, %s274
      %p286 = scmp.eq.s32.totalorder %s33, 1
      %p287 = por %p285, %p286
      %p289 = scmp.ne.s32.totalorder %s274, %s288
      %p290 = scmp.eq.s32.totalorder %s33, 0
      %p291 = por %p289, %p290
      %s293 = sadd.s32 %s292, 1
      %p296 = scmp.eq.s32.totalorder %s27, 1
      %p297 = scmp.ne.s32.totalorder %s292, %s294
      %p298 = scmp.eq.s32.totalorder %s27, 0
      %p299 = por %p297, %p298
      %p300 = scmp.ne.s32.totalorder %s292, %s294
      %p301 = scmp.eq.s32.totalorder %s32, 1
      %p302 = por %p300, %p301
      %p303 = scmp.ne.s32.totalorder %s294, %s295
      %p304 = scmp.eq.s32.totalorder %s32, 0
      %p305 = por %p303, %p304
      %p306 = scmp.ne.s32.totalorder %s294, %s295
      %p307 = scmp.eq.s32.totalorder %s33, 1
      %p308 = por %p306, %p307
      %p310 = scmp.ne.s32.totalorder %s295, %s309
      %p311 = scmp.eq.s32.totalorder %s33, 0
      %p312 = por %p310, %p311
      %s313 = ssub.s32 %s27, %s34
      %p314 = scmp.eq.s32.totalorder %s313, 0
      %s316 = sadd.s32 %s315, 1
      %s317 = scalar_select %p314, %s315, %s316
      %p320 = pneg %p314
      %p321 = scmp.eq.s32.totalorder %s27, 1
      %p322 = por %p320, %p321
      %p323 = scmp.ne.s32.totalorder %s315, %s318
      %p324 = scmp.eq.s32.totalorder %s27, 0
      %p325 = por %p323, %p324
      %p326 = scmp.ne.s32.totalorder %s315, %s318
      %p327 = scmp.eq.s32.totalorder %s32, 1
      %p328 = por %p326, %p327
      %p329 = scmp.ne.s32.totalorder %s318, %s319
      %p330 = scmp.eq.s32.totalorder %s32, 0
      %p331 = por %p329, %p330
      %p332 = scmp.ne.s32.totalorder %s318, %s319
      %p333 = scmp.eq.s32.totalorder %s33, 1
      %p334 = por %p332, %p333
      %p336 = scmp.ne.s32.totalorder %s319, %s335
      %p337 = scmp.eq.s32.totalorder %s33, 0
      %p338 = por %p336, %p337
      %p339 = scmp.le.s32.totalorder 1, %s27
      %p340 = scmp.lt.s32.totalorder %s27, 3
      %p341 = pnand %p339, %p340
      %p342 = pneg %p341
      // Predicated region
      $region9: #{tpu_custom_call.1} parent=5 // pred_check
        _
      $region10: #{tpu_custom_call.1} parent=5 // pred_check_branch
        %344 = sbr.rel (%p341) target = $region12
      $region11: #{tpu_custom_call.1} parent=5 // pred_region
        %s345 = ssub.s32 %s27, 1
        // Predicated region
        $region13: #{tpu_custom_call.1} parent=11 // pred_check
          %p346 = pneg %p74
        $region14: #{tpu_custom_call.1} parent=11 // pred_check_branch
          %348 = sbr.rel (%p346) target = $region16
        $region15: #{tpu_custom_call.1} parent=11 // pred_region
          %s350 = ssub.s32 3072, 3072
          %351 = vsyncadd [#allocation6], %s350
          %s352 = sshll.u32 [#allocation5], 4
          %s353 = int_to_ptr.vmem [resolvable:$true] %s352
          %358 = dma.hbm_to_vmem [thread:$0]  %s1, 3072, %s353, [#allocation6], 192, 192, 12
        $region16: #{tpu_custom_call.1} parent=11 // pred_fallthru
          _
        // Predicated region
        $region17: #{tpu_custom_call.1} parent=11 // pred_check
          %p359 = pneg %p95
        $region18: #{tpu_custom_call.1} parent=11 // pred_check_branch
          %361 = sbr.rel (%p359) target = $region20
        $region19: #{tpu_custom_call.1} parent=11 // pred_region
          _
        $region20: #{tpu_custom_call.1} parent=11 // pred_fallthru
          _
        // Predicated region
        $region21: #{tpu_custom_call.1} parent=11 // pred_check
          %p362 = pneg %p116
        $region22: #{tpu_custom_call.1} parent=11 // pred_check_branch
          %364 = sbr.rel (%p362) target = $region24
        $region23: #{tpu_custom_call.1} parent=11 // pred_region
          %s366 = ssub.s32 1024, 1024
          %367 = vsyncadd [#allocation6], %s366
          %s368 = sshll.u32 [#allocation7], 4
          %s369 = int_to_ptr.vmem [resolvable:$true] %s368
          %374 = dma.hbm_to_vmem [thread:$0]  %s3, 1024, %s369, [#allocation6], 64, 64, 4
        $region24: #{tpu_custom_call.1} parent=11 // pred_fallthru
          _
        // Predicated region
        $region25: #{tpu_custom_call.1} parent=11 // pred_check
          %p375 = pneg %p137
        $region26: #{tpu_custom_call.1} parent=11 // pred_check_branch
          %377 = sbr.rel (%p375) target = $region28
        $region27: #{tpu_custom_call.1} parent=11 // pred_region
          _
        $region28: #{tpu_custom_call.1} parent=11 // pred_fallthru
          _
        // Predicated region
        $region29: #{tpu_custom_call.1} parent=11 // pred_check
          %p378 = pneg %p158
        $region30: #{tpu_custom_call.1} parent=11 // pred_check_branch
          %380 = sbr.rel (%p378) target = $region32
        $region31: #{tpu_custom_call.1} parent=11 // pred_region
          _
        $region32: #{tpu_custom_call.1} parent=11 // pred_fallthru
          _
        // Predicated region
        $region33: #{tpu_custom_call.1} parent=11 // pred_check
          %p381 = pneg %p179
        $region34: #{tpu_custom_call.1} parent=11 // pred_check_branch
          %383 = sbr.rel (%p381) target = $region36
        $region35: #{tpu_custom_call.1} parent=11 // pred_region
          _
        $region36: #{tpu_custom_call.1} parent=11 // pred_fallthru
          _
        // Predicated region
        $region37: #{tpu_custom_call.1} parent=11 // pred_check
          %p384 = pneg %p200
        $region38: #{tpu_custom_call.1} parent=11 // pred_check_branch
          %386 = sbr.rel (%p384) target = $region40
        $region39: #{tpu_custom_call.1} parent=11 // pred_region
          %s388 = ssub.s32 2048, 2048
          %389 = vsyncadd [#allocation9], %s388
          %s390 = sshll.u32 [#allocation8], 4
          %s391 = int_to_ptr.vmem [resolvable:$true] %s390
          %396 = dma.hbm_to_vmem [thread:$0]  %s7, 2048, %s391, [#allocation9], 128, 128, 8
        $region40: #{tpu_custom_call.1} parent=11 // pred_fallthru
          _
        // Predicated region
        $region41: #{tpu_custom_call.1} parent=11 // pred_check
          %p397 = pneg %p221
        $region42: #{tpu_custom_call.1} parent=11 // pred_check_branch
          %399 = sbr.rel (%p397) target = $region44
        $region43: #{tpu_custom_call.1} parent=11 // pred_region
          _
        $region44: #{tpu_custom_call.1} parent=11 // pred_fallthru
          _
        // Predicated region
        $region45: #{tpu_custom_call.1} parent=11 // pred_check
          %p400 = pneg %p242
        $region46: #{tpu_custom_call.1} parent=11 // pred_check_branch
          %402 = sbr.rel (%p400) target = $region48
        $region47: #{tpu_custom_call.1} parent=11 // pred_region
          %s404 = ssub.s32 2048, 2048
          %405 = vsyncadd [#allocation9], %s404
          %s406 = sshll.u32 [#allocation10], 4
          %s407 = int_to_ptr.vmem [resolvable:$true] %s406
          %412 = dma.hbm_to_vmem [thread:$0]  %s9, 2048, %s407, [#allocation9], 64, 64, 4
        $region48: #{tpu_custom_call.1} parent=11 // pred_fallthru
          _
        // Predicated region
        $region49: #{tpu_custom_call.1} parent=11 // pred_check
          %p413 = pneg %p263
        $region50: #{tpu_custom_call.1} parent=11 // pred_check_branch
          %415 = sbr.rel (%p413) target = $region52
        $region51: #{tpu_custom_call.1} parent=11 // pred_region
          _
        $region52: #{tpu_custom_call.1} parent=11 // pred_fallthru
          _
        // Predicated region
        $region53: #{tpu_custom_call.1} parent=11 // pred_check
          %p416 = pneg %p284
        $region54: #{tpu_custom_call.1} parent=11 // pred_check_branch
          %418 = sbr.rel (%p416) target = $region56
        $region55: #{tpu_custom_call.1} parent=11 // pred_region
          _
        $region56: #{tpu_custom_call.1} parent=11 // pred_fallthru
          _
        // Predicated region
        $region57: #{tpu_custom_call.1} parent=11 // pred_check
          %p419 = pneg %p305
        $region58: #{tpu_custom_call.1} parent=11 // pred_check_branch
          %421 = sbr.rel (%p419) target = $region60
        $region59: #{tpu_custom_call.1} parent=11 // pred_region
          _
        $region60: #{tpu_custom_call.1} parent=11 // pred_fallthru
          _
      $region12: #{tpu_custom_call.1} parent=5 // pred_fallthru
        _
      %p422 = scmp.lt.s32.totalorder %s27, 2
      // Predicated region
      $region61: #{tpu_custom_call.1} parent=5 // pred_check
        %p423 = pneg %p422
      $region62: #{tpu_custom_call.1} parent=5 // pred_check_branch
        %425 = sbr.rel (%p423) target = $region64
      $region63: #{tpu_custom_call.1} parent=5 // pred_region
        // Predicated region
        $region65: #{tpu_custom_call.1} parent=63 // pred_check
          %p426 = pneg %p47
        $region66: #{tpu_custom_call.1} parent=63 // pred_check_branch
          %428 = sbr.rel (%p426) target = $region68
        $region67: #{tpu_custom_call.1} parent=63 // pred_region
          %s429 = sand.u32 %s37, 1
          %s430 = scalar_lea.sflag [#allocation3], %s429
          %s431 = sand.u32 %s37, 1
          %s432 = smul.addr %s431, 128
          %s433 = scalar_lea.vmem [#allocation2], %s432
          %s435 = ssub.s32 2048, 2048
          %436 = vsyncadd %s430, %s435
          %s437 = smul.addr %s27, 16
          %s438 = smul.addr %s437, 128
          %s439 = scalar_lea.hbm %s0, %s438
          %s440 = sshll.u32 %s433, 4
          %s441 = int_to_ptr.vmem [resolvable:$true] %s440
          %446 = dma.hbm_to_vmem [thread:$0]  %s439, 2048, %s441, %s430, 128, 128, 8
        $region68: #{tpu_custom_call.1} parent=63 // pred_fallthru
          _
      $region64: #{tpu_custom_call.1} parent=5 // pred_fallthru
        _
      %p447 = scmp.le.s32.totalorder 1, %s27
      %p448 = scmp.lt.s32.totalorder %s27, 3
      %p449 = pnand %p447, %p448
      %p450 = pneg %p449
      // Predicated region
      $region69: #{tpu_custom_call.1} parent=5 // pred_check
        _
      $region70: #{tpu_custom_call.1} parent=5 // pred_check_branch
        %452 = sbr.rel (%p449) target = $region72
      $region71: #{tpu_custom_call.1} parent=5 // pred_region
        %s453 = ssub.s32 %s27, 1
        %s454 = sand.u32 %s40, 1
        %s455 = scalar_lea.sflag [#allocation3], %s454
        %s456 = sand.u32 %s40, 1
        %s457 = smul.addr %s456, 128
        %s458 = scalar_lea.vmem [#allocation2], %s457
        // Predicated region
        $region73: #{tpu_custom_call.1} parent=71 // pred_check
          %p459 = pneg %p53
        $region74: #{tpu_custom_call.1} parent=71 // pred_check_branch
          %461 = sbr.rel (%p459) target = $region76
        $region75: #{tpu_custom_call.1} parent=71 // pred_region
          %462 = dma.done %s455, 2048
        $region76: #{tpu_custom_call.1} parent=71 // pred_fallthru
          _
        // Predicated region
        $region77: #{tpu_custom_call.1} parent=71 // pred_check
          %p463 = pneg %p74
        $region78: #{tpu_custom_call.1} parent=71 // pred_check_branch
          %465 = sbr.rel (%p463) target = $region80
        $region79: #{tpu_custom_call.1} parent=71 // pred_region
          %466 = dma.done [#allocation6], 3072
        $region80: #{tpu_custom_call.1} parent=71 // pred_fallthru
          _
        // Predicated region
        $region81: #{tpu_custom_call.1} parent=71 // pred_check
          %p467 = pneg %p116
        $region82: #{tpu_custom_call.1} parent=71 // pred_check_branch
          %469 = sbr.rel (%p467) target = $region84
        $region83: #{tpu_custom_call.1} parent=71 // pred_region
          %470 = dma.done [#allocation6], 1024
        $region84: #{tpu_custom_call.1} parent=71 // pred_fallthru
          _
        // Predicated region
        $region85: #{tpu_custom_call.1} parent=71 // pred_check
          %p471 = pneg %p200
        $region86: #{tpu_custom_call.1} parent=71 // pred_check_branch
          %473 = sbr.rel (%p471) target = $region88
        $region87: #{tpu_custom_call.1} parent=71 // pred_region
          %474 = dma.done [#allocation9], 2048
        $region88: #{tpu_custom_call.1} parent=71 // pred_fallthru
          _
        // Predicated region
        $region89: #{tpu_custom_call.1} parent=71 // pred_check
          %p475 = pneg %p242
        $region90: #{tpu_custom_call.1} parent=71 // pred_check_branch
          %477 = sbr.rel (%p475) target = $region92
        $region91: #{tpu_custom_call.1} parent=71 // pred_region
          %478 = dma.done [#allocation9], 2048
        $region92: #{tpu_custom_call.1} parent=71 // pred_fallthru
          _
        %s479 = sand.u32 %s40, 1
        %s480 = scalar_lea.sflag [#allocation3], %s479
        %s481 = sand.u32 %s40, 1
        %s482 = smul.addr %s481, 128
        %s483 = scalar_lea.vmem [#allocation2], %s482
        %p484 = pneg %p53
        %p485 = pneg %p50
        %p486 = pneg %p74
        %p487 = pneg %p71
        %p488 = pneg %p95
        %p489 = pneg %p92
        %p490 = pneg %p116
        %p491 = pneg %p113
        %p492 = pneg %p137
        %p493 = pneg %p134
        %p494 = pneg %p158
        %p495 = pneg %p155
        %p496 = pneg %p179
        %p497 = pneg %p176
        %p498 = pneg %p200
        %p499 = pneg %p197
        %p500 = pneg %p221
        %p501 = pneg %p218
        %p502 = pneg %p242
        %p503 = pneg %p239
        %p504 = pneg %p263
        %p505 = pneg %p260
        %p506 = pneg %p284
        %p507 = pneg %p281
        %p508 = pneg %p305
        %p509 = pneg %p302
        %p510 = pneg %p331
        %p511 = pneg %p328
        %s512 = sand.u32 %s318, 1
        %s513 = scalar_lea.sflag [#allocation4], %s512
        %s514 = sand.u32 %s318, 1
        %s515 = smul.addr %s514, 128
        %s516 = scalar_lea.vmem [#allocation11], %s515
        %v518 = vld [vmem:[%s458] sm:$0xff]
        %v519 = vld [vmem:[%s458 + $0x8] sm:$0xff]
        %v520 = vld [vmem:[%s458 + $0x10] sm:$0xff]
        %v521 = vld [vmem:[%s458 + $0x18] sm:$0xff]
        %v522 = vld [vmem:[%s458 + $0x20] sm:$0xff]
        %v523 = vld [vmem:[%s458 + $0x28] sm:$0xff]
        %v524 = vld [vmem:[%s458 + $0x30] sm:$0xff]
        %v525 = vld [vmem:[%s458 + $0x38] sm:$0xff]
        %v526 = vld [vmem:[%s458 + $0x40] sm:$0xff]
        %v527 = vld [vmem:[%s458 + $0x48] sm:$0xff]
        %v528 = vld [vmem:[%s458 + $0x50] sm:$0xff]
        %v529 = vld [vmem:[%s458 + $0x58] sm:$0xff]
        %v530 = vld [vmem:[%s458 + $0x60] sm:$0xff]
        %v531 = vld [vmem:[%s458 + $0x68] sm:$0xff]
        %v532 = vld [vmem:[%s458 + $0x70] sm:$0xff]
        %v533 = vld [vmem:[%s458 + $0x78] sm:$0xff]
        %v534 = vpack.c.bf16 %v519, %v518
        %v535 = vpack.c.bf16 %v521, %v520
        %v536 = vpack.c.bf16 %v523, %v522
        %v537 = vpack.c.bf16 %v525, %v524
        %v538 = vpack.c.bf16 %v527, %v526
        %v539 = vpack.c.bf16 %v529, %v528
        %v540 = vpack.c.bf16 %v531, %v530
        %v541 = vpack.c.bf16 %v533, %v532
        %v542 = vld [vmem:[#allocation5] sm:$0xff]
        %v543 = vld [vmem:[#allocation5 + $0x8] sm:$0xf]
        %v544 = vld [vmem:[#allocation5 + $0xc] sm:$0xff]
        %v545 = vld [vmem:[#allocation5 + $0x14] sm:$0xf]
        %v546 = vld [vmem:[#allocation5 + $0x18] sm:$0xff]
        %v547 = vld [vmem:[#allocation5 + $0x20] sm:$0xf]
        %v548 = vld [vmem:[#allocation5 + $0x24] sm:$0xff]
        %v549 = vld [vmem:[#allocation5 + $0x2c] sm:$0xf]
        %v550 = vld [vmem:[#allocation5 + $0x30] sm:$0xff]
        %v551 = vld [vmem:[#allocation5 + $0x38] sm:$0xf]
        %v552 = vld [vmem:[#allocation5 + $0x3c] sm:$0xff]
        %v553 = vld [vmem:[#allocation5 + $0x44] sm:$0xf]
        %v554 = vld [vmem:[#allocation5 + $0x48] sm:$0xff]
        %v555 = vld [vmem:[#allocation5 + $0x50] sm:$0xf]
        %v556 = vld [vmem:[#allocation5 + $0x54] sm:$0xff]
        %v557 = vld [vmem:[#allocation5 + $0x5c] sm:$0xf]
        %v558 = vld [vmem:[#allocation5 + $0x60] sm:$0xff]
        %v559 = vld [vmem:[#allocation5 + $0x68] sm:$0xf]
        %v560 = vld [vmem:[#allocation5 + $0x6c] sm:$0xff]
        %v561 = vld [vmem:[#allocation5 + $0x74] sm:$0xf]
        %v562 = vld [vmem:[#allocation5 + $0x78] sm:$0xff]
        %v563 = vld [vmem:[#allocation5 + $0x80] sm:$0xf]
        %v564 = vld [vmem:[#allocation5 + $0x84] sm:$0xff]
        %v565 = vld [vmem:[#allocation5 + $0x8c] sm:$0xf]
        %v566 = vld [vmem:[#allocation5 + $0x90] sm:$0xff]
        %v567 = vld [vmem:[#allocation5 + $0x98] sm:$0xf]
        %v568 = vld [vmem:[#allocation5 + $0x9c] sm:$0xff]
        %v569 = vld [vmem:[#allocation5 + $0xa4] sm:$0xf]
        %v570 = vld [vmem:[#allocation5 + $0xa8] sm:$0xff]
        %v571 = vld [vmem:[#allocation5 + $0xb0] sm:$0xf]
        %v572 = vld [vmem:[#allocation5 + $0xb4] sm:$0xff]
        %v573 = vld [vmem:[#allocation5 + $0xbc] sm:$0xf]
        %v574 = vld [vmem:[%s2] sm:$0x7]
        %v576 = vlaneseq
        %v577 = vshrl.u32 %v576, 7
        %v578 = vsub.s32 0, %v577
        %v579 = vrot.slane %v574, %v578
        %v580 = vlaneseq
        %v581 = vshrl.u32 %v580, 7
        %v582 = vsub.s32 1, %v581
        %v583 = vrot.slane %v574, %v582
        %v584 = vlaneseq
        %v585 = vshrl.u32 %v584, 7
        %v586 = vsub.s32 2, %v585
        %v587 = vrot.slane %v574, %v586
        %v623 = vunpack.c.l.b16 %v542
        %v624 = vunpack.c.h.b16 %v542
        %v625 = vunpack.c.l.b16 %v543
        %v626 = vunpack.c.l.b16 %v544
        %v627 = vunpack.c.h.b16 %v544
        %v628 = vunpack.c.l.b16 %v545
        %v629 = vunpack.c.l.b16 %v546
        %v630 = vunpack.c.h.b16 %v546
        %v631 = vunpack.c.l.b16 %v547
        %v632 = vunpack.c.l.b16 %v548
        %v633 = vunpack.c.h.b16 %v548
        %v634 = vunpack.c.l.b16 %v549
        %v635 = vunpack.c.l.b16 %v550
        %v636 = vunpack.c.h.b16 %v550
        %v637 = vunpack.c.l.b16 %v551
        %v638 = vunpack.c.l.b16 %v552
        %v639 = vunpack.c.h.b16 %v552
        %v640 = vunpack.c.l.b16 %v553
        %v641 = vunpack.c.l.b16 %v554
        %v642 = vunpack.c.h.b16 %v554
        %v643 = vunpack.c.l.b16 %v555
        %v644 = vunpack.c.l.b16 %v556
        %v645 = vunpack.c.h.b16 %v556
        %v646 = vunpack.c.l.b16 %v557
        %v647 = vunpack.c.l.b16 %v558
        %v648 = vunpack.c.h.b16 %v558
        %v649 = vunpack.c.l.b16 %v559
        %v650 = vunpack.c.l.b16 %v560
        %v651 = vunpack.c.h.b16 %v560
        %v652 = vunpack.c.l.b16 %v561
        %v653 = vunpack.c.l.b16 %v562
        %v654 = vunpack.c.h.b16 %v562
        %v655 = vunpack.c.l.b16 %v563
        %v656 = vunpack.c.l.b16 %v564
        %v657 = vunpack.c.h.b16 %v564
        %v658 = vunpack.c.l.b16 %v565
        %v659 = vunpack.c.l.b16 %v566
        %v660 = vunpack.c.h.b16 %v566
        %v661 = vunpack.c.l.b16 %v567
        %v662 = vunpack.c.l.b16 %v568
        %v663 = vunpack.c.h.b16 %v568
        %v664 = vunpack.c.l.b16 %v569
        %v665 = vunpack.c.l.b16 %v570
        %v666 = vunpack.c.h.b16 %v570
        %v667 = vunpack.c.l.b16 %v571
        %v668 = vunpack.c.l.b16 %v572
        %v669 = vunpack.c.h.b16 %v572
        %v670 = vunpack.c.l.b16 %v573
        %v671 = vpack.c.b16 %v626, %v623
        %v672 = vpack.c.b16 %v627, %v624
        %v673 = vpack.c.b16 %v628, %v625
        %v674 = vpack.c.b16 %v632, %v629
        %v675 = vpack.c.b16 %v633, %v630
        %v676 = vpack.c.b16 %v634, %v631
        %v677 = vpack.c.b16 %v638, %v635
        %v678 = vpack.c.b16 %v639, %v636
        %v679 = vpack.c.b16 %v640, %v637
        %v680 = vpack.c.b16 %v644, %v641
        %v681 = vpack.c.b16 %v645, %v642
        %v682 = vpack.c.b16 %v646, %v643
        %v683 = vpack.c.b16 %v650, %v647
        %v684 = vpack.c.b16 %v651, %v648
        %v685 = vpack.c.b16 %v652, %v649
        %v686 = vpack.c.b16 %v656, %v653
        %v687 = vpack.c.b16 %v657, %v654
        %v688 = vpack.c.b16 %v658, %v655
        %v689 = vpack.c.b16 %v662, %v659
        %v690 = vpack.c.b16 %v663, %v660
        %v691 = vpack.c.b16 %v664, %v661
        %v692 = vpack.c.b16 %v668, %v665
        %v693 = vpack.c.b16 %v669, %v666
        %v694 = vpack.c.b16 %v670, %v667
        %719 = vmatprep.subr.bf16.mxu0 %v672
        %720 = vmatpush1.bf16.msra.mxu0 %v671
        %721 = vmatprep.subr.bf16.mxu0 %v675
        %722 = vmatpush1.bf16.msra.mxu0 %v674
        %723 = vmatprep.subr.bf16.mxu0 %v678
        %724 = vmatpush1.bf16.msra.mxu0 %v677
        %725 = vmatprep.subr.bf16.mxu0 %v681
        %726 = vmatpush1.bf16.msra.mxu0 %v680
        %727 = vmatprep.subr.bf16.mxu0 %v684
        %728 = vmatpush1.bf16.msra.mxu0 %v683
        %729 = vmatprep.subr.bf16.mxu0 %v687
        %730 = vmatpush1.bf16.msra.mxu0 %v686
        %731 = vmatprep.subr.bf16.mxu0 %v690
        %732 = vmatpush1.bf16.msra.mxu0 %v689
        %733 = vmatprep.subr.bf16.mxu0 %v693
        %734 = vmatpush1.bf16.msra.mxu0 %v692
        %735 = vmatprep.subr.bf16.mxu0 0
        %736 = vmatpush1.bf16.msra.mxu0 0
        %737 = vmatprep.subr.bf16.mxu0 0
        %738 = vmatpush1.bf16.msra.mxu0 0
        %739 = vmatprep.subr.bf16.mxu0 0
        %740 = vmatpush1.bf16.msra.mxu0 0
        %741 = vmatprep.subr.bf16.mxu0 0
        %742 = vmatpush1.bf16.msra.mxu0 0
        %743 = vmatprep.subr.bf16.mxu0 0
        %744 = vmatpush1.bf16.msra.mxu0 0
        %745 = vmatprep.subr.bf16.mxu0 0
        %746 = vmatpush1.bf16.msra.mxu0 0
        %747 = vmatprep.subr.bf16.mxu0 0
        %748 = vmatpush1.bf16.msra.mxu0 0
        %749 = vmatprep.subr.bf16.mxu0 0
        %750 = vmatpush1.bf16.msra.mxu0 0
        %751 = vmatprep.mubr.bf16.mxu0 0
        %752 = vmatmul.mubr.bf16.gmra.mrb[0].mxu0 %v534
        %v753 = vpop.f32.mrb[0].mxu0
        %v754 = vadd.f32 %v579, %v753
        %v755 = vpop.f32.mrb[0].mxu0
        %v756 = vadd.f32 %v583, %v755
        %v757 = vpop.f32.mrb[0].mxu0
        %v758 = vadd.f32 %v579, %v757
        %v759 = vpop.f32.mrb[0].mxu0
        %v760 = vadd.f32 %v583, %v759
        %761 = vmatprep.mubr.bf16.mxu0 0
        %762 = vmatmul.mubr.bf16.gmra.mrb[0].mxu0 %v535
        %v763 = vpop.f32.mrb[0].mxu0
        %v764 = vadd.f32 %v579, %v763
        %v765 = vpop.f32.mrb[0].mxu0
        %v766 = vadd.f32 %v583, %v765
        %v767 = vpop.f32.mrb[0].mxu0
        %v768 = vadd.f32 %v579, %v767
        %v769 = vpop.f32.mrb[0].mxu0
        %v770 = vadd.f32 %v583, %v769
        %771 = vmatprep.mubr.bf16.mxu0 0
        %772 = vmatmul.mubr.bf16.gmra.mrb[0].mxu0 %v536
        %v773 = vpop.f32.mrb[0].mxu0
        %v774 = vadd.f32 %v579, %v773
        %v775 = vpop.f32.mrb[0].mxu0
        %v776 = vadd.f32 %v583, %v775
        %v777 = vpop.f32.mrb[0].mxu0
        %v778 = vadd.f32 %v579, %v777
        %v779 = vpop.f32.mrb[0].mxu0
        %v780 = vadd.f32 %v583, %v779
        %781 = vmatprep.mubr.bf16.mxu0 0
        %782 = vmatmul.mubr.bf16.gmra.mrb[0].mxu0 %v537
        %v783 = vpop.f32.mrb[0].mxu0
        %v784 = vadd.f32 %v579, %v783
        %v785 = vpop.f32.mrb[0].mxu0
        %v786 = vadd.f32 %v583, %v785
        %v787 = vpop.f32.mrb[0].mxu0
        %v788 = vadd.f32 %v579, %v787
        %v789 = vpop.f32.mrb[0].mxu0
        %v790 = vadd.f32 %v583, %v789
        %791 = vmatprep.mubr.bf16.mxu0 0
        %792 = vmatmul.mubr.bf16.gmra.mrb[0].mxu0 %v538
        %v793 = vpop.f32.mrb[0].mxu0
        %v794 = vadd.f32 %v579, %v793
        %v795 = vpop.f32.mrb[0].mxu0
        %v796 = vadd.f32 %v583, %v795
        %v797 = vpop.f32.mrb[0].mxu0
        %v798 = vadd.f32 %v579, %v797
        %v799 = vpop.f32.mrb[0].mxu0
        %v800 = vadd.f32 %v583, %v799
        %801 = vmatprep.mubr.bf16.mxu0 0
        %802 = vmatmul.mubr.bf16.gmra.mrb[0].mxu0 %v539
        %v803 = vpop.f32.mrb[0].mxu0
        %v804 = vadd.f32 %v579, %v803
        %v805 = vpop.f32.mrb[0].mxu0
        %v806 = vadd.f32 %v583, %v805
        %v807 = vpop.f32.mrb[0].mxu0
        %v808 = vadd.f32 %v579, %v807
        %v809 = vpop.f32.mrb[0].mxu0
        %v810 = vadd.f32 %v583, %v809
        %811 = vmatprep.mubr.bf16.mxu0 0
        %812 = vmatmul.mubr.bf16.gmra.mrb[0].mxu0 %v540
        %v813 = vpop.f32.mrb[0].mxu0
        %v814 = vadd.f32 %v579, %v813
        %v815 = vpop.f32.mrb[0].mxu0
        %v816 = vadd.f32 %v583, %v815
        %v817 = vpop.f32.mrb[0].mxu0
        %v818 = vadd.f32 %v579, %v817
        %v819 = vpop.f32.mrb[0].mxu0
        %v820 = vadd.f32 %v583, %v819
        %821 = vmatprep.mubr.bf16.mxu0 0
        %822 = vmatmul.mubr.bf16.gmra.mrb[0].mxu0 %v541
        %v823 = vpop.f32.mrb[0].mxu0
        %v824 = vadd.f32 %v579, %v823
        %v825 = vpop.f32.mrb[0].mxu0
        %v826 = vadd.f32 %v583, %v825
        %v827 = vpop.f32.mrb[0].mxu0
        %v828 = vadd.f32 %v579, %v827
        %v829 = vpop.f32.mrb[0].mxu0
        %v830 = vadd.f32 %v583, %v829
        %831 = vdwg.mxu0
        %832 = vmatprep.subr.bf16.mxu0 0
        %833 = vmatpush1.bf16.msra.mxu0 %v673
        %834 = vmatprep.subr.bf16.mxu0 0
        %835 = vmatpush1.bf16.msra.mxu0 %v676
        %836 = vmatprep.subr.bf16.mxu0 0
        %837 = vmatpush1.bf16.msra.mxu0 %v679
        %838 = vmatprep.subr.bf16.mxu0 0
        %839 = vmatpush1.bf16.msra.mxu0 %v682
        %840 = vmatprep.subr.bf16.mxu0 0
        %841 = vmatpush1.bf16.msra.mxu0 %v685
        %842 = vmatprep.subr.bf16.mxu0 0
        %843 = vmatpush1.bf16.msra.mxu0 %v688
        %844 = vmatprep.subr.bf16.mxu0 0
        %845 = vmatpush1.bf16.msra.mxu0 %v691
        %846 = vmatprep.subr.bf16.mxu0 0
        %847 = vmatpush1.bf16.msra.mxu0 %v694
        %848 = vmatprep.subr.bf16.mxu0 0
        %849 = vmatpush1.bf16.msra.mxu0 0
        %850 = vmatprep.subr.bf16.mxu0 0
        %851 = vmatpush1.bf16.msra.mxu0 0
        %852 = vmatprep.subr.bf16.mxu0 0
        %853 = vmatpush1.bf16.msra.mxu0 0
        %854 = vmatprep.subr.bf16.mxu0 0
        %855 = vmatpush1.bf16.msra.mxu0 0
        %856 = vmatprep.subr.bf16.mxu0 0
        %857 = vmatpush1.bf16.msra.mxu0 0
        %858 = vmatprep.subr.bf16.mxu0 0
        %859 = vmatpush1.bf16.msra.mxu0 0
        %860 = vmatprep.subr.bf16.mxu0 0
        %861 = vmatpush1.bf16.msra.mxu0 0
        %862 = vmatprep.subr.bf16.mxu0 0
        %863 = vmatpush1.bf16.msra.mxu0 0
        %864 = vmatprep.mubr.bf16.mxu0 0
        %865 = vmatmul.mubr.bf16.gmra.mrb[0].mxu0 %v534
        %v866 = vpop.f32.mrb[0].mxu0
        %v867 = vadd.f32 %v587, %v866
        %v868 = vpop.f32.mrb[0].mxu0
        %v869 = vpop.f32.mrb[0].mxu0
        %v870 = vadd.f32 %v587, %v869
        %v871 = vpop.f32.mrb[0].mxu0
        %872 = vmatprep.mubr.bf16.mxu0 0
        %873 = vmatmul.mubr.bf16.gmra.mrb[0].mxu0 %v535
        %v874 = vpop.f32.mrb[0].mxu0
        %v875 = vadd.f32 %v587, %v874
        %v876 = vpop.f32.mrb[0].mxu0
        %v877 = vpop.f32.mrb[0].mxu0
        %v878 = vadd.f32 %v587, %v877
        %v879 = vpop.f32.mrb[0].mxu0
        %880 = vmatprep.mubr.bf16.mxu0 0
        %881 = vmatmul.mubr.bf16.gmra.mrb[0].mxu0 %v536
        %v882 = vpop.f32.mrb[0].mxu0
        %v883 = vadd.f32 %v587, %v882
        %v884 = vpop.f32.mrb[0].mxu0
        %v885 = vpop.f32.mrb[0].mxu0
        %v886 = vadd.f32 %v587, %v885
        %v887 = vpop.f32.mrb[0].mxu0
        %888 = vmatprep.mubr.bf16.mxu0 0
        %889 = vmatmul.mubr.bf16.gmra.mrb[0].mxu0 %v537
        %v890 = vpop.f32.mrb[0].mxu0
        %v891 = vadd.f32 %v587, %v890
        %v892 = vpop.f32.mrb[0].mxu0
        %v893 = vpop.f32.mrb[0].mxu0
        %v894 = vadd.f32 %v587, %v893
        %v895 = vpop.f32.mrb[0].mxu0
        %896 = vmatprep.mubr.bf16.mxu0 0
        %897 = vmatmul.mubr.bf16.gmra.mrb[0].mxu0 %v538
        %v898 = vpop.f32.mrb[0].mxu0
        %v899 = vadd.f32 %v587, %v898
        %v900 = vpop.f32.mrb[0].mxu0
        %v901 = vpop.f32.mrb[0].mxu0
        %v902 = vadd.f32 %v587, %v901
        %v903 = vpop.f32.mrb[0].mxu0
        %904 = vmatprep.mubr.bf16.mxu0 0
        %905 = vmatmul.mubr.bf16.gmra.mrb[0].mxu0 %v539
        %v906 = vpop.f32.mrb[0].mxu0
        %v907 = vadd.f32 %v587, %v906
        %v908 = vpop.f32.mrb[0].mxu0
        %v909 = vpop.f32.mrb[0].mxu0
        %v910 = vadd.f32 %v587, %v909
        %v911 = vpop.f32.mrb[0].mxu0
        %912 = vmatprep.mubr.bf16.mxu0 0
        %913 = vmatmul.mubr.bf16.gmra.mrb[0].mxu0 %v540
        %v914 = vpop.f32.mrb[0].mxu0
        %v915 = vadd.f32 %v587, %v914
        %v916 = vpop.f32.mrb[0].mxu0
        %v917 = vpop.f32.mrb[0].mxu0
        %v918 = vadd.f32 %v587, %v917
        %v919 = vpop.f32.mrb[0].mxu0
        %920 = vmatprep.mubr.bf16.mxu0 0
        %921 = vmatmul.mubr.bf16.gmra.mrb[0].mxu0 %v541
        %v922 = vpop.f32.mrb[0].mxu0
        %v923 = vadd.f32 %v587, %v922
        %v924 = vpop.f32.mrb[0].mxu0
        %v925 = vpop.f32.mrb[0].mxu0
        %v926 = vadd.f32 %v587, %v925
        %v927 = vpop.f32.mrb[0].mxu0
        %928 = vdwg.mxu0
        %v929 = vmul.f32 %v754, 0.17677669
        %v930 = vmul.f32 %v758, 0.17677669
        %v931 = vmul.f32 %v764, 0.17677669
        %v932 = vmul.f32 %v768, 0.17677669
        %v933 = vmul.f32 %v774, 0.17677669
        %v934 = vmul.f32 %v778, 0.17677669
        %v935 = vmul.f32 %v784, 0.17677669
        %v936 = vmul.f32 %v788, 0.17677669
        %v937 = vmul.f32 %v794, 0.17677669
        %v938 = vmul.f32 %v798, 0.17677669
        %v939 = vmul.f32 %v804, 0.17677669
        %v940 = vmul.f32 %v808, 0.17677669
        %v941 = vmul.f32 %v814, 0.17677669
        %v942 = vmul.f32 %v818, 0.17677669
        %v943 = vmul.f32 %v824, 0.17677669
        %v944 = vmul.f32 %v828, 0.17677669
        %v945 = vpack.c.bf16 %v930, %v929
        %v946 = vpack.c.bf16 %v932, %v931
        %v947 = vpack.c.bf16 %v934, %v933
        %v948 = vpack.c.bf16 %v936, %v935
        %v949 = vpack.c.bf16 %v938, %v937
        %v950 = vpack.c.bf16 %v940, %v939
        %v951 = vpack.c.bf16 %v942, %v941
        %v952 = vpack.c.bf16 %v944, %v943
        %v953 = vpack.c.bf16 %v760, %v756
        %v954 = vpack.c.bf16 %v770, %v766
        %v955 = vpack.c.bf16 %v780, %v776
        %v956 = vpack.c.bf16 %v790, %v786
        %v957 = vpack.c.bf16 %v800, %v796
        %v958 = vpack.c.bf16 %v810, %v806
        %v959 = vpack.c.bf16 %v820, %v816
        %v960 = vpack.c.bf16 %v830, %v826
        %v961 = vpack.c.bf16 %v870, %v867
        %v962 = vpack.c.bf16 %v878, %v875
        %v963 = vpack.c.bf16 %v886, %v883
        %v964 = vpack.c.bf16 %v894, %v891
        %v965 = vpack.c.bf16 %v902, %v899
        %v966 = vpack.c.bf16 %v910, %v907
        %v967 = vpack.c.bf16 %v918, %v915
        %v968 = vpack.c.bf16 %v926, %v923
        %vm969 = vcmask 261120
        %v971 = vsel %vm969, %v945, 0
        %v974 = vsel %vm969, %v946, 0
        %v977 = vsel %vm969, %v947, 0
        %v980 = vsel %vm969, %v948, 0
        %v983 = vsel %vm969, %v949, 0
        %v986 = vsel %vm969, %v950, 0
        %v989 = vsel %vm969, %v951, 0
        %v992 = vsel %vm969, %v952, 0
        %v995 = vsel %vm969, %v953, 0
        %v998 = vsel %vm969, %v954, 0
        %v1001 = vsel %vm969, %v955, 0
        %v1004 = vsel %vm969, %v956, 0
        %v1007 = vsel %vm969, %v957, 0
        %v1010 = vsel %vm969, %v958, 0
        %v1013 = vsel %vm969, %v959, 0
        %v1016 = vsel %vm969, %v960, 0
        %1018 = vmatprep.subr.bf16.mxu0 0
        %1019 = vmatpush1.bf16.xpose.msra.mxu0 %v995
        %1020 = vmatprep.subr.bf16.mxu0 0
        %1021 = vmatpush1.bf16.xpose.msra.mxu0 %v998
        %1022 = vmatprep.subr.bf16.mxu0 0
        %1023 = vmatpush1.bf16.xpose.msra.mxu0 %v1001
        %1024 = vmatprep.subr.bf16.mxu0 0
        %1025 = vmatpush1.bf16.xpose.msra.mxu0 %v1004
        %1026 = vmatprep.subr.bf16.mxu0 0
        %1027 = vmatpush1.bf16.xpose.msra.mxu0 %v1007
        %1028 = vmatprep.subr.bf16.mxu0 0
        %1029 = vmatpush1.bf16.xpose.msra.mxu0 %v1010
        %1030 = vmatprep.subr.bf16.mxu0 0
        %1031 = vmatpush1.bf16.xpose.msra.mxu0 %v1013
        %1032 = vmatprep.subr.bf16.mxu0 0
        %1033 = vmatpush1.bf16.xpose.msra.mxu0 %v1016
        %1034 = vmatprep.subr.bf16.mxu0 0
        %1035 = vmatpush1.bf16.xpose.msra.mxu0 0
        %1036 = vmatprep.subr.bf16.mxu0 0
        %1037 = vmatpush1.bf16.xpose.msra.mxu0 0
        %1038 = vmatprep.subr.bf16.mxu0 0
        %1039 = vmatpush1.bf16.xpose.msra.mxu0 0
        %1040 = vmatprep.subr.bf16.mxu0 0
        %1041 = vmatpush1.bf16.xpose.msra.mxu0 0
        %1042 = vmatprep.subr.bf16.mxu0 0
        %1043 = vmatpush1.bf16.xpose.msra.mxu0 0
        %1044 = vmatprep.subr.bf16.mxu0 0
        %1045 = vmatpush1.bf16.xpose.msra.mxu0 0
        %1046 = vmatprep.subr.bf16.mxu0 0
        %1047 = vmatpush1.bf16.xpose.msra.mxu0 0
        %1048 = vmatprep.subr.bf16.mxu0 0
        %1049 = vmatpush1.bf16.xpose.msra.mxu0 0
        %1050 = vmatprep.mubr.bf16.mxu0 0
        %1051 = vmatmul.mubr.bf16.gmra.mrb[0].mxu0 %v971
        %v1052 = vpop.f32.mrb[0].mxu0
        %v1053 = vadd.f32 0.0, %v1052
        %v1054 = vpop.f32.mrb[0].mxu0
        %v1055 = vpop.f32.mrb[0].mxu0
        %v1056 = vadd.f32 0.0, %v1055
        %v1057 = vpop.f32.mrb[0].mxu0
        %1058 = vmatprep.mubr.bf16.mxu0 0
        %1059 = vmatmul.mubr.bf16.gmra.mrb[0].mxu0 %v974
        %v1060 = vpop.f32.mrb[0].mxu0
        %v1061 = vadd.f32 0.0, %v1060
        %v1062 = vpop.f32.mrb[0].mxu0
        %v1063 = vpop.f32.mrb[0].mxu0
        %v1064 = vadd.f32 0.0, %v1063
        %v1065 = vpop.f32.mrb[0].mxu0
        %1066 = vmatprep.mubr.bf16.mxu0 0
        %1067 = vmatmul.mubr.bf16.gmra.mrb[0].mxu0 %v977
        %v1068 = vpop.f32.mrb[0].mxu0
        %v1069 = vadd.f32 0.0, %v1068
        %v1070 = vpop.f32.mrb[0].mxu0
        %v1071 = vpop.f32.mrb[0].mxu0
        %v1072 = vadd.f32 0.0, %v1071
        %v1073 = vpop.f32.mrb[0].mxu0
        %1074 = vmatprep.mubr.bf16.mxu0 0
        %1075 = vmatmul.mubr.bf16.gmra.mrb[0].mxu0 %v980
        %v1076 = vpop.f32.mrb[0].mxu0
        %v1077 = vadd.f32 0.0, %v1076
        %v1078 = vpop.f32.mrb[0].mxu0
        %v1079 = vpop.f32.mrb[0].mxu0
        %v1080 = vadd.f32 0.0, %v1079
        %v1081 = vpop.f32.mrb[0].mxu0
        %1082 = vmatprep.mubr.bf16.mxu0 0
        %1083 = vmatmul.mubr.bf16.gmra.mrb[0].mxu0 %v983
        %v1084 = vpop.f32.mrb[0].mxu0
        %v1085 = vadd.f32 0.0, %v1084
        %v1086 = vpop.f32.mrb[0].mxu0
        %v1087 = vpop.f32.mrb[0].mxu0
        %v1088 = vadd.f32 0.0, %v1087
        %v1089 = vpop.f32.mrb[0].mxu0
        %1090 = vmatprep.mubr.bf16.mxu0 0
        %1091 = vmatmul.mubr.bf16.gmra.mrb[0].mxu0 %v986
        %v1092 = vpop.f32.mrb[0].mxu0
        %v1093 = vadd.f32 0.0, %v1092
        %v1094 = vpop.f32.mrb[0].mxu0
        %v1095 = vpop.f32.mrb[0].mxu0
        %v1096 = vadd.f32 0.0, %v1095
        %v1097 = vpop.f32.mrb[0].mxu0
        %1098 = vmatprep.mubr.bf16.mxu0 0
        %1099 = vmatmul.mubr.bf16.gmra.mrb[0].mxu0 %v989
        %v1100 = vpop.f32.mrb[0].mxu0
        %v1101 = vadd.f32 0.0, %v1100
        %v1102 = vpop.f32.mrb[0].mxu0
        %v1103 = vpop.f32.mrb[0].mxu0
        %v1104 = vadd.f32 0.0, %v1103
        %v1105 = vpop.f32.mrb[0].mxu0
        %1106 = vmatprep.mubr.bf16.mxu0 0
        %1107 = vmatmul.mubr.bf16.gmra.mrb[0].mxu0 %v992
        %v1108 = vpop.f32.mrb[0].mxu0
        %v1109 = vadd.f32 0.0, %v1108
        %v1110 = vpop.f32.mrb[0].mxu0
        %v1111 = vpop.f32.mrb[0].mxu0
        %v1112 = vadd.f32 0.0, %v1111
        %v1113 = vpop.f32.mrb[0].mxu0
        %1114 = vdwg.mxu0
        %1115 = vmax.xlane.f32.xlu0 %v1053
        %v1116 = vpop.xlane.xlu0 %1115
        %1117 = vmax.xlane.f32.xlu0 %v1056
        %v1118 = vpop.xlane.xlu0 %1117
        %1119 = vmax.xlane.f32.xlu0 %v1061
        %v1120 = vpop.xlane.xlu0 %1119
        %1121 = vmax.xlane.f32.xlu0 %v1064
        %v1122 = vpop.xlane.xlu0 %1121
        %1123 = vmax.xlane.f32.xlu0 %v1069
        %v1124 = vpop.xlane.xlu0 %1123
        %1125 = vmax.xlane.f32.xlu0 %v1072
        %v1126 = vpop.xlane.xlu0 %1125
        %1127 = vmax.xlane.f32.xlu0 %v1077
        %v1128 = vpop.xlane.xlu0 %1127
        %1129 = vmax.xlane.f32.xlu0 %v1080
        %v1130 = vpop.xlane.xlu0 %1129
        %1131 = vmax.xlane.f32.xlu0 %v1085
        %v1132 = vpop.xlane.xlu0 %1131
        %1133 = vmax.xlane.f32.xlu0 %v1088
        %v1134 = vpop.xlane.xlu0 %1133
        %1135 = vmax.xlane.f32.xlu0 %v1093
        %v1136 = vpop.xlane.xlu0 %1135
        %1137 = vmax.xlane.f32.xlu0 %v1096
        %v1138 = vpop.xlane.xlu0 %1137
        %1139 = vmax.xlane.f32.xlu0 %v1101
        %v1140 = vpop.xlane.xlu0 %1139
        %1141 = vmax.xlane.f32.xlu0 %v1104
        %v1142 = vpop.xlane.xlu0 %1141
        %1143 = vmax.xlane.f32.xlu0 %v1109
        %v1144 = vpop.xlane.xlu0 %1143
        %1145 = vmax.xlane.f32.xlu0 %v1112
        %v1146 = vpop.xlane.xlu0 %1145
        %v1147 = vsub.f32 %v1053, %v1116
        %v1148 = vsub.f32 %v1056, %v1118
        %v1149 = vsub.f32 %v1061, %v1120
        %v1150 = vsub.f32 %v1064, %v1122
        %v1151 = vsub.f32 %v1069, %v1124
        %v1152 = vsub.f32 %v1072, %v1126
        %v1153 = vsub.f32 %v1077, %v1128
        %v1154 = vsub.f32 %v1080, %v1130
        %v1155 = vsub.f32 %v1085, %v1132
        %v1156 = vsub.f32 %v1088, %v1134
        %v1157 = vsub.f32 %v1093, %v1136
        %v1158 = vsub.f32 %v1096, %v1138
        %v1159 = vsub.f32 %v1101, %v1140
        %v1160 = vsub.f32 %v1104, %v1142
        %v1161 = vsub.f32 %v1109, %v1144
        %v1162 = vsub.f32 %v1112, %v1146
        %v1163 = vmul.f32 %v1147, 1.442695
        %v1164 = vpow.pop %v1163
        %v1165 = vmul.f32 %v1148, 1.442695
        %v1166 = vpow.pop %v1165
        %v1167 = vmul.f32 %v1149, 1.442695
        %v1168 = vpow.pop %v1167
        %v1169 = vmul.f32 %v1150, 1.442695
        %v1170 = vpow.pop %v1169
        %v1171 = vmul.f32 %v1151, 1.442695
        %v1172 = vpow.pop %v1171
        %v1173 = vmul.f32 %v1152, 1.442695
        %v1174 = vpow.pop %v1173
        %v1175 = vmul.f32 %v1153, 1.442695
        %v1176 = vpow.pop %v1175
        %v1177 = vmul.f32 %v1154, 1.442695
        %v1178 = vpow.pop %v1177
        %v1179 = vmul.f32 %v1155, 1.442695
        %v1180 = vpow.pop %v1179
        %v1181 = vmul.f32 %v1156, 1.442695
        %v1182 = vpow.pop %v1181
        %v1183 = vmul.f32 %v1157, 1.442695
        %v1184 = vpow.pop %v1183
        %v1185 = vmul.f32 %v1158, 1.442695
        %v1186 = vpow.pop %v1185
        %v1187 = vmul.f32 %v1159, 1.442695
        %v1188 = vpow.pop %v1187
        %v1189 = vmul.f32 %v1160, 1.442695
        %v1190 = vpow.pop %v1189
        %v1191 = vmul.f32 %v1161, 1.442695
        %v1192 = vpow.pop %v1191
        %v1193 = vmul.f32 %v1162, 1.442695
        %v1194 = vpow.pop %v1193
        %1195 = vadd.xlane.f32.xlu0 %v1164
        %v1196 = vpop.xlane.xlu0 %1195
        %1197 = vadd.xlane.f32.xlu0 %v1166
        %v1198 = vpop.xlane.xlu0 %1197
        %1199 = vadd.xlane.f32.xlu0 %v1168
        %v1200 = vpop.xlane.xlu0 %1199
        %1201 = vadd.xlane.f32.xlu0 %v1170
        %v1202 = vpop.xlane.xlu0 %1201
        %1203 = vadd.xlane.f32.xlu0 %v1172
        %v1204 = vpop.xlane.xlu0 %1203
        %1205 = vadd.xlane.f32.xlu0 %v1174
        %v1206 = vpop.xlane.xlu0 %1205
        %1207 = vadd.xlane.f32.xlu0 %v1176
        %v1208 = vpop.xlane.xlu0 %1207
        %1209 = vadd.xlane.f32.xlu0 %v1178
        %v1210 = vpop.xlane.xlu0 %1209
        %1211 = vadd.xlane.f32.xlu0 %v1180
        %v1212 = vpop.xlane.xlu0 %1211
        %1213 = vadd.xlane.f32.xlu0 %v1182
        %v1214 = vpop.xlane.xlu0 %1213
        %1215 = vadd.xlane.f32.xlu0 %v1184
        %v1216 = vpop.xlane.xlu0 %1215
        %1217 = vadd.xlane.f32.xlu0 %v1186
        %v1218 = vpop.xlane.xlu0 %1217
        %1219 = vadd.xlane.f32.xlu0 %v1188
        %v1220 = vpop.xlane.xlu0 %1219
        %1221 = vadd.xlane.f32.xlu0 %v1190
        %v1222 = vpop.xlane.xlu0 %1221
        %1223 = vadd.xlane.f32.xlu0 %v1192
        %v1224 = vpop.xlane.xlu0 %1223
        %1225 = vadd.xlane.f32.xlu0 %v1194
        %v1226 = vpop.xlane.xlu0 %1225
        %v1227 = vpack.c.bf16 %v1166, %v1164
        %v1228 = vpack.c.bf16 %v1170, %v1168
        %v1229 = vpack.c.bf16 %v1174, %v1172
        %v1230 = vpack.c.bf16 %v1178, %v1176
        %v1231 = vpack.c.bf16 %v1182, %v1180
        %v1232 = vpack.c.bf16 %v1186, %v1184
        %v1233 = vpack.c.bf16 %v1190, %v1188
        %v1234 = vpack.c.bf16 %v1194, %v1192
        %1235 = vmatprep.subr.bf16.mxu0 0
        %1236 = vmatpush1.bf16.msra.mxu0 %v961
        %1237 = vmatprep.subr.bf16.mxu0 0
        %1238 = vmatpush1.bf16.msra.mxu0 %v962
        %1239 = vmatprep.subr.bf16.mxu0 0
        %1240 = vmatpush1.bf16.msra.mxu0 %v963
        %1241 = vmatprep.subr.bf16.mxu0 0
        %1242 = vmatpush1.bf16.msra.mxu0 %v964
        %1243 = vmatprep.subr.bf16.mxu0 0
        %1244 = vmatpush1.bf16.msra.mxu0 %v965
        %1245 = vmatprep.subr.bf16.mxu0 0
        %1246 = vmatpush1.bf16.msra.mxu0 %v966
        %1247 = vmatprep.subr.bf16.mxu0 0
        %1248 = vmatpush1.bf16.msra.mxu0 %v967
        %1249 = vmatprep.subr.bf16.mxu0 0
        %1250 = vmatpush1.bf16.msra.mxu0 %v968
        %1251 = vmatprep.subr.bf16.mxu0 0
        %1252 = vmatpush1.bf16.msra.mxu0 0
        %1253 = vmatprep.subr.bf16.mxu0 0
        %1254 = vmatpush1.bf16.msra.mxu0 0
        %1255 = vmatprep.subr.bf16.mxu0 0
        %1256 = vmatpush1.bf16.msra.mxu0 0
        %1257 = vmatprep.subr.bf16.mxu0 0
        %1258 = vmatpush1.bf16.msra.mxu0 0
        %1259 = vmatprep.subr.bf16.mxu0 0
        %1260 = vmatpush1.bf16.msra.mxu0 0
        %1261 = vmatprep.subr.bf16.mxu0 0
        %1262 = vmatpush1.bf16.msra.mxu0 0
        %1263 = vmatprep.subr.bf16.mxu0 0
        %1264 = vmatpush1.bf16.msra.mxu0 0
        %1265 = vmatprep.subr.bf16.mxu0 0
        %1266 = vmatpush1.bf16.msra.mxu0 0
        %1267 = vmatprep.mubr.bf16.mxu0 0
        %1268 = vmatmul.mubr.bf16.gmra.mrb[0].mxu0 %v1227
        %v1269 = vpop.f32.mrb[0].mxu0
        %v1270 = vadd.f32 0.0, %v1269
        %v1271 = vpop.f32.mrb[0].mxu0
        %v1272 = vpop.f32.mrb[0].mxu0
        %v1273 = vadd.f32 0.0, %v1272
        %v1274 = vpop.f32.mrb[0].mxu0
        %1275 = vmatprep.mubr.bf16.mxu0 0
        %1276 = vmatmul.mubr.bf16.gmra.mrb[0].mxu0 %v1228
        %v1277 = vpop.f32.mrb[0].mxu0
        %v1278 = vadd.f32 0.0, %v1277
        %v1279 = vpop.f32.mrb[0].mxu0
        %v1280 = vpop.f32.mrb[0].mxu0
        %v1281 = vadd.f32 0.0, %v1280
        %v1282 = vpop.f32.mrb[0].mxu0
        %1283 = vmatprep.mubr.bf16.mxu0 0
        %1284 = vmatmul.mubr.bf16.gmra.mrb[0].mxu0 %v1229
        %v1285 = vpop.f32.mrb[0].mxu0
        %v1286 = vadd.f32 0.0, %v1285
        %v1287 = vpop.f32.mrb[0].mxu0
        %v1288 = vpop.f32.mrb[0].mxu0
        %v1289 = vadd.f32 0.0, %v1288
        %v1290 = vpop.f32.mrb[0].mxu0
        %1291 = vmatprep.mubr.bf16.mxu0 0
        %1292 = vmatmul.mubr.bf16.gmra.mrb[0].mxu0 %v1230
        %v1293 = vpop.f32.mrb[0].mxu0
        %v1294 = vadd.f32 0.0, %v1293
        %v1295 = vpop.f32.mrb[0].mxu0
        %v1296 = vpop.f32.mrb[0].mxu0
        %v1297 = vadd.f32 0.0, %v1296
        %v1298 = vpop.f32.mrb[0].mxu0
        %1299 = vmatprep.mubr.bf16.mxu0 0
        %1300 = vmatmul.mubr.bf16.gmra.mrb[0].mxu0 %v1231
        %v1301 = vpop.f32.mrb[0].mxu0
        %v1302 = vadd.f32 0.0, %v1301
        %v1303 = vpop.f32.mrb[0].mxu0
        %v1304 = vpop.f32.mrb[0].mxu0
        %v1305 = vadd.f32 0.0, %v1304
        %v1306 = vpop.f32.mrb[0].mxu0
        %1307 = vmatprep.mubr.bf16.mxu0 0
        %1308 = vmatmul.mubr.bf16.gmra.mrb[0].mxu0 %v1232
        %v1309 = vpop.f32.mrb[0].mxu0
        %v1310 = vadd.f32 0.0, %v1309
        %v1311 = vpop.f32.mrb[0].mxu0
        %v1312 = vpop.f32.mrb[0].mxu0
        %v1313 = vadd.f32 0.0, %v1312
        %v1314 = vpop.f32.mrb[0].mxu0
        %1315 = vmatprep.mubr.bf16.mxu0 0
        %1316 = vmatmul.mubr.bf16.gmra.mrb[0].mxu0 %v1233
        %v1317 = vpop.f32.mrb[0].mxu0
        %v1318 = vadd.f32 0.0, %v1317
        %v1319 = vpop.f32.mrb[0].mxu0
        %v1320 = vpop.f32.mrb[0].mxu0
        %v1321 = vadd.f32 0.0, %v1320
        %v1322 = vpop.f32.mrb[0].mxu0
        %1323 = vmatprep.mubr.bf16.mxu0 0
        %1324 = vmatmul.mubr.bf16.gmra.mrb[0].mxu0 %v1234
        %v1325 = vpop.f32.mrb[0].mxu0
        %v1326 = vadd.f32 0.0, %v1325
        %v1327 = vpop.f32.mrb[0].mxu0
        %v1328 = vpop.f32.mrb[0].mxu0
        %v1329 = vadd.f32 0.0, %v1328
        %v1330 = vpop.f32.mrb[0].mxu0
        %1331 = vdwg.mxu0
        %v1332 = vrcp.pop %v1196
        %v1333 = vrcp.pop %v1198
        %v1334 = vrcp.pop %v1200
        %v1335 = vrcp.pop %v1202
        %v1336 = vrcp.pop %v1204
        %v1337 = vrcp.pop %v1206
        %v1338 = vrcp.pop %v1208
        %v1339 = vrcp.pop %v1210
        %v1340 = vrcp.pop %v1212
        %v1341 = vrcp.pop %v1214
        %v1342 = vrcp.pop %v1216
        %v1343 = vrcp.pop %v1218
        %v1344 = vrcp.pop %v1220
        %v1345 = vrcp.pop %v1222
        %v1346 = vrcp.pop %v1224
        %v1347 = vrcp.pop %v1226
        %v1348 = vmul.f32 %v1270, %v1332
        %v1349 = vmul.f32 %v1273, %v1333
        %v1350 = vmul.f32 %v1278, %v1334
        %v1351 = vmul.f32 %v1281, %v1335
        %v1352 = vmul.f32 %v1286, %v1336
        %v1353 = vmul.f32 %v1289, %v1337
        %v1354 = vmul.f32 %v1294, %v1338
        %v1355 = vmul.f32 %v1297, %v1339
        %v1356 = vmul.f32 %v1302, %v1340
        %v1357 = vmul.f32 %v1305, %v1341
        %v1358 = vmul.f32 %v1310, %v1342
        %v1359 = vmul.f32 %v1313, %v1343
        %v1360 = vmul.f32 %v1318, %v1344
        %v1361 = vmul.f32 %v1321, %v1345
        %v1362 = vmul.f32 %v1326, %v1346
        %v1363 = vmul.f32 %v1329, %v1347
        %v1364 = vpack.c.bf16 %v1349, %v1348
        %v1365 = vpack.c.bf16 %v1351, %v1350
        %v1366 = vpack.c.bf16 %v1353, %v1352
        %v1367 = vpack.c.bf16 %v1355, %v1354
        %v1368 = vpack.c.bf16 %v1357, %v1356
        %v1369 = vpack.c.bf16 %v1359, %v1358
        %v1370 = vpack.c.bf16 %v1361, %v1360
        %v1371 = vpack.c.bf16 %v1363, %v1362
        %1380 = vrot.lane.b32.xlu0 %v945, 96
        %v1381 = vpop.permute.xlu0 %1380
        %1382 = vrot.lane.b32.xlu0 %v946, 96
        %v1383 = vpop.permute.xlu0 %1382
        %1384 = vrot.lane.b32.xlu0 %v947, 96
        %v1385 = vpop.permute.xlu0 %1384
        %1386 = vrot.lane.b32.xlu0 %v948, 96
        %v1387 = vpop.permute.xlu0 %1386
        %1388 = vrot.lane.b32.xlu0 %v949, 96
        %v1389 = vpop.permute.xlu0 %1388
        %1390 = vrot.lane.b32.xlu0 %v950, 96
        %v1391 = vpop.permute.xlu0 %1390
        %1392 = vrot.lane.b32.xlu0 %v951, 96
        %v1393 = vpop.permute.xlu0 %1392
        %1394 = vrot.lane.b32.xlu0 %v952, 96
        %v1395 = vpop.permute.xlu0 %1394
        %1404 = vrot.lane.b32.xlu0 %v953, 96
        %v1405 = vpop.permute.xlu0 %1404
        %1406 = vrot.lane.b32.xlu0 %v954, 96
        %v1407 = vpop.permute.xlu0 %1406
        %1408 = vrot.lane.b32.xlu0 %v955, 96
        %v1409 = vpop.permute.xlu0 %1408
        %1410 = vrot.lane.b32.xlu0 %v956, 96
        %v1411 = vpop.permute.xlu0 %1410
        %1412 = vrot.lane.b32.xlu0 %v957, 96
        %v1413 = vpop.permute.xlu0 %1412
        %1414 = vrot.lane.b32.xlu0 %v958, 96
        %v1415 = vpop.permute.xlu0 %1414
        %1416 = vrot.lane.b32.xlu0 %v959, 96
        %v1417 = vpop.permute.xlu0 %1416
        %1418 = vrot.lane.b32.xlu0 %v960, 96
        %v1419 = vpop.permute.xlu0 %1418
        %v1421 = vsel %vm969, %v1381, 0
        %v1424 = vsel %vm969, %v1383, 0
        %v1427 = vsel %vm969, %v1385, 0
        %v1430 = vsel %vm969, %v1387, 0
        %v1433 = vsel %vm969, %v1389, 0
        %v1436 = vsel %vm969, %v1391, 0
        %v1439 = vsel %vm969, %v1393, 0
        %v1442 = vsel %vm969, %v1395, 0
        %v1445 = vsel %vm969, %v1405, 0
        %v1448 = vsel %vm969, %v1407, 0
        %v1451 = vsel %vm969, %v1409, 0
        %v1454 = vsel %vm969, %v1411, 0
        %v1457 = vsel %vm969, %v1413, 0
        %v1460 = vsel %vm969, %v1415, 0
        %v1463 = vsel %vm969, %v1417, 0
        %v1466 = vsel %vm969, %v1419, 0
        %1468 = vmatprep.subr.bf16.mxu0 0
        %1469 = vmatpush1.bf16.xpose.msra.mxu0 %v1445
        %1470 = vmatprep.subr.bf16.mxu0 0
        %1471 = vmatpush1.bf16.xpose.msra.mxu0 %v1448
        %1472 = vmatprep.subr.bf16.mxu0 0
        %1473 = vmatpush1.bf16.xpose.msra.mxu0 %v1451
        %1474 = vmatprep.subr.bf16.mxu0 0
        %1475 = vmatpush1.bf16.xpose.msra.mxu0 %v1454
        %1476 = vmatprep.subr.bf16.mxu0 0
        %1477 = vmatpush1.bf16.xpose.msra.mxu0 %v1457
        %1478 = vmatprep.subr.bf16.mxu0 0
        %1479 = vmatpush1.bf16.xpose.msra.mxu0 %v1460
        %1480 = vmatprep.subr.bf16.mxu0 0
        %1481 = vmatpush1.bf16.xpose.msra.mxu0 %v1463
        %1482 = vmatprep.subr.bf16.mxu0 0
        %1483 = vmatpush1.bf16.xpose.msra.mxu0 %v1466
        %1484 = vmatprep.subr.bf16.mxu0 0
        %1485 = vmatpush1.bf16.xpose.msra.mxu0 0
        %1486 = vmatprep.subr.bf16.mxu0 0
        %1487 = vmatpush1.bf16.xpose.msra.mxu0 0
        %1488 = vmatprep.subr.bf16.mxu0 0
        %1489 = vmatpush1.bf16.xpose.msra.mxu0 0
        %1490 = vmatprep.subr.bf16.mxu0 0
        %1491 = vmatpush1.bf16.xpose.msra.mxu0 0
        %1492 = vmatprep.subr.bf16.mxu0 0
        %1493 = vmatpush1.bf16.xpose.msra.mxu0 0
        %1494 = vmatprep.subr.bf16.mxu0 0
        %1495 = vmatpush1.bf16.xpose.msra.mxu0 0
        %1496 = vmatprep.subr.bf16.mxu0 0
        %1497 = vmatpush1.bf16.xpose.msra.mxu0 0
        %1498 = vmatprep.subr.bf16.mxu0 0
        %1499 = vmatpush1.bf16.xpose.msra.mxu0 0
        %1500 = vmatprep.mubr.bf16.mxu0 0
        %1501 = vmatmul.mubr.bf16.gmra.mrb[0].mxu0 %v1421
        %v1502 = vpop.f32.mrb[0].mxu0
        %v1503 = vadd.f32 0.0, %v1502
        %v1504 = vpop.f32.mrb[0].mxu0
        %v1505 = vpop.f32.mrb[0].mxu0
        %v1506 = vadd.f32 0.0, %v1505
        %v1507 = vpop.f32.mrb[0].mxu0
        %1508 = vmatprep.mubr.bf16.mxu0 0
        %1509 = vmatmul.mubr.bf16.gmra.mrb[0].mxu0 %v1424
        %v1510 = vpop.f32.mrb[0].mxu0
        %v1511 = vadd.f32 0.0, %v1510
        %v1512 = vpop.f32.mrb[0].mxu0
        %v1513 = vpop.f32.mrb[0].mxu0
        %v1514 = vadd.f32 0.0, %v1513
        %v1515 = vpop.f32.mrb[0].mxu0
        %1516 = vmatprep.mubr.bf16.mxu0 0
        %1517 = vmatmul.mubr.bf16.gmra.mrb[0].mxu0 %v1427
        %v1518 = vpop.f32.mrb[0].mxu0
        %v1519 = vadd.f32 0.0, %v1518
        %v1520 = vpop.f32.mrb[0].mxu0
        %v1521 = vpop.f32.mrb[0].mxu0
        %v1522 = vadd.f32 0.0, %v1521
        %v1523 = vpop.f32.mrb[0].mxu0
        %1524 = vmatprep.mubr.bf16.mxu0 0
        %1525 = vmatmul.mubr.bf16.gmra.mrb[0].mxu0 %v1430
        %v1526 = vpop.f32.mrb[0].mxu0
        %v1527 = vadd.f32 0.0, %v1526
        %v1528 = vpop.f32.mrb[0].mxu0
        %v1529 = vpop.f32.mrb[0].mxu0
        %v1530 = vadd.f32 0.0, %v1529
        %v1531 = vpop.f32.mrb[0].mxu0
        %1532 = vmatprep.mubr.bf16.mxu0 0
        %1533 = vmatmul.mubr.bf16.gmra.mrb[0].mxu0 %v1433
        %v1534 = vpop.f32.mrb[0].mxu0
        %v1535 = vadd.f32 0.0, %v1534
        %v1536 = vpop.f32.mrb[0].mxu0
        %v1537 = vpop.f32.mrb[0].mxu0
        %v1538 = vadd.f32 0.0, %v1537
        %v1539 = vpop.f32.mrb[0].mxu0
        %1540 = vmatprep.mubr.bf16.mxu0 0
        %1541 = vmatmul.mubr.bf16.gmra.mrb[0].mxu0 %v1436
        %v1542 = vpop.f32.mrb[0].mxu0
        %v1543 = vadd.f32 0.0, %v1542
        %v1544 = vpop.f32.mrb[0].mxu0
        %v1545 = vpop.f32.mrb[0].mxu0
        %v1546 = vadd.f32 0.0, %v1545
        %v1547 = vpop.f32.mrb[0].mxu0
        %1548 = vmatprep.mubr.bf16.mxu0 0
        %1549 = vmatmul.mubr.bf16.gmra.mrb[0].mxu0 %v1439
        %v1550 = vpop.f32.mrb[0].mxu0
        %v1551 = vadd.f32 0.0, %v1550
        %v1552 = vpop.f32.mrb[0].mxu0
        %v1553 = vpop.f32.mrb[0].mxu0
        %v1554 = vadd.f32 0.0, %v1553
        %v1555 = vpop.f32.mrb[0].mxu0
        %1556 = vmatprep.mubr.bf16.mxu0 0
        %1557 = vmatmul.mubr.bf16.gmra.mrb[0].mxu0 %v1442
        %v1558 = vpop.f32.mrb[0].mxu0
        %v1559 = vadd.f32 0.0, %v1558
        %v1560 = vpop.f32.mrb[0].mxu0
        %v1561 = vpop.f32.mrb[0].mxu0
        %v1562 = vadd.f32 0.0, %v1561
        %v1563 = vpop.f32.mrb[0].mxu0
        %1564 = vdwg.mxu0
        %1565 = vmax.xlane.f32.xlu0 %v1503
        %v1566 = vpop.xlane.xlu0 %1565
        %1567 = vmax.xlane.f32.xlu0 %v1506
        %v1568 = vpop.xlane.xlu0 %1567
        %1569 = vmax.xlane.f32.xlu0 %v1511
        %v1570 = vpop.xlane.xlu0 %1569
        %1571 = vmax.xlane.f32.xlu0 %v1514
        %v1572 = vpop.xlane.xlu0 %1571
        %1573 = vmax.xlane.f32.xlu0 %v1519
        %v1574 = vpop.xlane.xlu0 %1573
        %1575 = vmax.xlane.f32.xlu0 %v1522
        %v1576 = vpop.xlane.xlu0 %1575
        %1577 = vmax.xlane.f32.xlu0 %v1527
        %v1578 = vpop.xlane.xlu0 %1577
        %1579 = vmax.xlane.f32.xlu0 %v1530
        %v1580 = vpop.xlane.xlu0 %1579
        %1581 = vmax.xlane.f32.xlu0 %v1535
        %v1582 = vpop.xlane.xlu0 %1581
        %1583 = vmax.xlane.f32.xlu0 %v1538
        %v1584 = vpop.xlane.xlu0 %1583
        %1585 = vmax.xlane.f32.xlu0 %v1543
        %v1586 = vpop.xlane.xlu0 %1585
        %1587 = vmax.xlane.f32.xlu0 %v1546
        %v1588 = vpop.xlane.xlu0 %1587
        %1589 = vmax.xlane.f32.xlu0 %v1551
        %v1590 = vpop.xlane.xlu0 %1589
        %1591 = vmax.xlane.f32.xlu0 %v1554
        %v1592 = vpop.xlane.xlu0 %1591
        %1593 = vmax.xlane.f32.xlu0 %v1559
        %v1594 = vpop.xlane.xlu0 %1593
        %1595 = vmax.xlane.f32.xlu0 %v1562
        %v1596 = vpop.xlane.xlu0 %1595
        %v1597 = vsub.f32 %v1503, %v1566
        %v1598 = vsub.f32 %v1506, %v1568
        %v1599 = vsub.f32 %v1511, %v1570
        %v1600 = vsub.f32 %v1514, %v1572
        %v1601 = vsub.f32 %v1519, %v1574
        %v1602 = vsub.f32 %v1522, %v1576
        %v1603 = vsub.f32 %v1527, %v1578
        %v1604 = vsub.f32 %v1530, %v1580
        %v1605 = vsub.f32 %v1535, %v1582
        %v1606 = vsub.f32 %v1538, %v1584
        %v1607 = vsub.f32 %v1543, %v1586
        %v1608 = vsub.f32 %v1546, %v1588
        %v1609 = vsub.f32 %v1551, %v1590
        %v1610 = vsub.f32 %v1554, %v1592
        %v1611 = vsub.f32 %v1559, %v1594
        %v1612 = vsub.f32 %v1562, %v1596
        %v1613 = vmul.f32 %v1597, 1.442695
        %v1614 = vpow.pop %v1613
        %v1615 = vmul.f32 %v1598, 1.442695
        %v1616 = vpow.pop %v1615
        %v1617 = vmul.f32 %v1599, 1.442695
        %v1618 = vpow.pop %v1617
        %v1619 = vmul.f32 %v1600, 1.442695
        %v1620 = vpow.pop %v1619
        %v1621 = vmul.f32 %v1601, 1.442695
        %v1622 = vpow.pop %v1621
        %v1623 = vmul.f32 %v1602, 1.442695
        %v1624 = vpow.pop %v1623
        %v1625 = vmul.f32 %v1603, 1.442695
        %v1626 = vpow.pop %v1625
        %v1627 = vmul.f32 %v1604, 1.442695
        %v1628 = vpow.pop %v1627
        %v1629 = vmul.f32 %v1605, 1.442695
        %v1630 = vpow.pop %v1629
        %v1631 = vmul.f32 %v1606, 1.442695
        %v1632 = vpow.pop %v1631
        %v1633 = vmul.f32 %v1607, 1.442695
        %v1634 = vpow.pop %v1633
        %v1635 = vmul.f32 %v1608, 1.442695
        %v1636 = vpow.pop %v1635
        %v1637 = vmul.f32 %v1609, 1.442695
        %v1638 = vpow.pop %v1637
        %v1639 = vmul.f32 %v1610, 1.442695
        %v1640 = vpow.pop %v1639
        %v1641 = vmul.f32 %v1611, 1.442695
        %v1642 = vpow.pop %v1641
        %v1643 = vmul.f32 %v1612, 1.442695
        %v1644 = vpow.pop %v1643
        %1645 = vadd.xlane.f32.xlu0 %v1614
        %v1646 = vpop.xlane.xlu0 %1645
        %1647 = vadd.xlane.f32.xlu0 %v1616
        %v1648 = vpop.xlane.xlu0 %1647
        %1649 = vadd.xlane.f32.xlu0 %v1618
        %v1650 = vpop.xlane.xlu0 %1649
        %1651 = vadd.xlane.f32.xlu0 %v1620
        %v1652 = vpop.xlane.xlu0 %1651
        %1653 = vadd.xlane.f32.xlu0 %v1622
        %v1654 = vpop.xlane.xlu0 %1653
        %1655 = vadd.xlane.f32.xlu0 %v1624
        %v1656 = vpop.xlane.xlu0 %1655
        %1657 = vadd.xlane.f32.xlu0 %v1626
        %v1658 = vpop.xlane.xlu0 %1657
        %1659 = vadd.xlane.f32.xlu0 %v1628
        %v1660 = vpop.xlane.xlu0 %1659
        %1661 = vadd.xlane.f32.xlu0 %v1630
        %v1662 = vpop.xlane.xlu0 %1661
        %1663 = vadd.xlane.f32.xlu0 %v1632
        %v1664 = vpop.xlane.xlu0 %1663
        %1665 = vadd.xlane.f32.xlu0 %v1634
        %v1666 = vpop.xlane.xlu0 %1665
        %1667 = vadd.xlane.f32.xlu0 %v1636
        %v1668 = vpop.xlane.xlu0 %1667
        %1669 = vadd.xlane.f32.xlu0 %v1638
        %v1670 = vpop.xlane.xlu0 %1669
        %1671 = vadd.xlane.f32.xlu0 %v1640
        %v1672 = vpop.xlane.xlu0 %1671
        %1673 = vadd.xlane.f32.xlu0 %v1642
        %v1674 = vpop.xlane.xlu0 %1673
        %1675 = vadd.xlane.f32.xlu0 %v1644
        %v1676 = vpop.xlane.xlu0 %1675
        %v1677 = vpack.c.bf16 %v1616, %v1614
        %v1678 = vpack.c.bf16 %v1620, %v1618
        %v1679 = vpack.c.bf16 %v1624, %v1622
        %v1680 = vpack.c.bf16 %v1628, %v1626
        %v1681 = vpack.c.bf16 %v1632, %v1630
        %v1682 = vpack.c.bf16 %v1636, %v1634
        %v1683 = vpack.c.bf16 %v1640, %v1638
        %v1684 = vpack.c.bf16 %v1644, %v1642
        %1693 = vrot.lane.b32.xlu0 %v961, 96
        %v1694 = vpop.permute.xlu0 %1693
        %1695 = vrot.lane.b32.xlu0 %v962, 96
        %v1696 = vpop.permute.xlu0 %1695
        %1697 = vrot.lane.b32.xlu0 %v963, 96
        %v1698 = vpop.permute.xlu0 %1697
        %1699 = vrot.lane.b32.xlu0 %v964, 96
        %v1700 = vpop.permute.xlu0 %1699
        %1701 = vrot.lane.b32.xlu0 %v965, 96
        %v1702 = vpop.permute.xlu0 %1701
        %1703 = vrot.lane.b32.xlu0 %v966, 96
        %v1704 = vpop.permute.xlu0 %1703
        %1705 = vrot.lane.b32.xlu0 %v967, 96
        %v1706 = vpop.permute.xlu0 %1705
        %1707 = vrot.lane.b32.xlu0 %v968, 96
        %v1708 = vpop.permute.xlu0 %1707
        %1717 = vmatprep.subr.bf16.mxu0 0
        %1718 = vmatpush1.bf16.msra.mxu0 %v1694
        %1719 = vmatprep.subr.bf16.mxu0 0
        %1720 = vmatpush1.bf16.msra.mxu0 %v1696
        %1721 = vmatprep.subr.bf16.mxu0 0
        %1722 = vmatpush1.bf16.msra.mxu0 %v1698
        %1723 = vmatprep.subr.bf16.mxu0 0
        %1724 = vmatpush1.bf16.msra.mxu0 %v1700
        %1725 = vmatprep.subr.bf16.mxu0 0
        %1726 = vmatpush1.bf16.msra.mxu0 %v1702
        %1727 = vmatprep.subr.bf16.mxu0 0
        %1728 = vmatpush1.bf16.msra.mxu0 %v1704
        %1729 = vmatprep.subr.bf16.mxu0 0
        %1730 = vmatpush1.bf16.msra.mxu0 %v1706
        %1731 = vmatprep.subr.bf16.mxu0 0
        %1732 = vmatpush1.bf16.msra.mxu0 %v1708
        %1733 = vmatprep.subr.bf16.mxu0 0
        %1734 = vmatpush1.bf16.msra.mxu0 0
        %1735 = vmatprep.subr.bf16.mxu0 0
        %1736 = vmatpush1.bf16.msra.mxu0 0
        %1737 = vmatprep.subr.bf16.mxu0 0
        %1738 = vmatpush1.bf16.msra.mxu0 0
        %1739 = vmatprep.subr.bf16.mxu0 0
        %1740 = vmatpush1.bf16.msra.mxu0 0
        %1741 = vmatprep.subr.bf16.mxu0 0
        %1742 = vmatpush1.bf16.msra.mxu0 0
        %1743 = vmatprep.subr.bf16.mxu0 0
        %1744 = vmatpush1.bf16.msra.mxu0 0
        %1745 = vmatprep.subr.bf16.mxu0 0
        %1746 = vmatpush1.bf16.msra.mxu0 0
        %1747 = vmatprep.subr.bf16.mxu0 0
        %1748 = vmatpush1.bf16.msra.mxu0 0
        %1749 = vmatprep.mubr.bf16.mxu0 0
        %1750 = vmatmul.mubr.bf16.gmra.mrb[0].mxu0 %v1677
        %v1751 = vpop.f32.mrb[0].mxu0
        %v1752 = vadd.f32 0.0, %v1751
        %v1753 = vpop.f32.mrb[0].mxu0
        %v1754 = vpop.f32.mrb[0].mxu0
        %v1755 = vadd.f32 0.0, %v1754
        %v1756 = vpop.f32.mrb[0].mxu0
        %1757 = vmatprep.mubr.bf16.mxu0 0
        %1758 = vmatmul.mubr.bf16.gmra.mrb[0].mxu0 %v1678
        %v1759 = vpop.f32.mrb[0].mxu0
        %v1760 = vadd.f32 0.0, %v1759
        %v1761 = vpop.f32.mrb[0].mxu0
        %v1762 = vpop.f32.mrb[0].mxu0
        %v1763 = vadd.f32 0.0, %v1762
        %v1764 = vpop.f32.mrb[0].mxu0
        %1765 = vmatprep.mubr.bf16.mxu0 0
        %1766 = vmatmul.mubr.bf16.gmra.mrb[0].mxu0 %v1679
        %v1767 = vpop.f32.mrb[0].mxu0
        %v1768 = vadd.f32 0.0, %v1767
        %v1769 = vpop.f32.mrb[0].mxu0
        %v1770 = vpop.f32.mrb[0].mxu0
        %v1771 = vadd.f32 0.0, %v1770
        %v1772 = vpop.f32.mrb[0].mxu0
        %1773 = vmatprep.mubr.bf16.mxu0 0
        %1774 = vmatmul.mubr.bf16.gmra.mrb[0].mxu0 %v1680
        %v1775 = vpop.f32.mrb[0].mxu0
        %v1776 = vadd.f32 0.0, %v1775
        %v1777 = vpop.f32.mrb[0].mxu0
        %v1778 = vpop.f32.mrb[0].mxu0
        %v1779 = vadd.f32 0.0, %v1778
        %v1780 = vpop.f32.mrb[0].mxu0
        %1781 = vmatprep.mubr.bf16.mxu0 0
        %1782 = vmatmul.mubr.bf16.gmra.mrb[0].mxu0 %v1681
        %v1783 = vpop.f32.mrb[0].mxu0
        %v1784 = vadd.f32 0.0, %v1783
        %v1785 = vpop.f32.mrb[0].mxu0
        %v1786 = vpop.f32.mrb[0].mxu0
        %v1787 = vadd.f32 0.0, %v1786
        %v1788 = vpop.f32.mrb[0].mxu0
        %1789 = vmatprep.mubr.bf16.mxu0 0
        %1790 = vmatmul.mubr.bf16.gmra.mrb[0].mxu0 %v1682
        %v1791 = vpop.f32.mrb[0].mxu0
        %v1792 = vadd.f32 0.0, %v1791
        %v1793 = vpop.f32.mrb[0].mxu0
        %v1794 = vpop.f32.mrb[0].mxu0
        %v1795 = vadd.f32 0.0, %v1794
        %v1796 = vpop.f32.mrb[0].mxu0
        %1797 = vmatprep.mubr.bf16.mxu0 0
        %1798 = vmatmul.mubr.bf16.gmra.mrb[0].mxu0 %v1683
        %v1799 = vpop.f32.mrb[0].mxu0
        %v1800 = vadd.f32 0.0, %v1799
        %v1801 = vpop.f32.mrb[0].mxu0
        %v1802 = vpop.f32.mrb[0].mxu0
        %v1803 = vadd.f32 0.0, %v1802
        %v1804 = vpop.f32.mrb[0].mxu0
        %1805 = vmatprep.mubr.bf16.mxu0 0
        %1806 = vmatmul.mubr.bf16.gmra.mrb[0].mxu0 %v1684
        %v1807 = vpop.f32.mrb[0].mxu0
        %v1808 = vadd.f32 0.0, %v1807
        %v1809 = vpop.f32.mrb[0].mxu0
        %v1810 = vpop.f32.mrb[0].mxu0
        %v1811 = vadd.f32 0.0, %v1810
        %v1812 = vpop.f32.mrb[0].mxu0
        %1813 = vdwg.mxu0
        %v1814 = vrcp.pop %v1646
        %v1815 = vrcp.pop %v1648
        %v1816 = vrcp.pop %v1650
        %v1817 = vrcp.pop %v1652
        %v1818 = vrcp.pop %v1654
        %v1819 = vrcp.pop %v1656
        %v1820 = vrcp.pop %v1658
        %v1821 = vrcp.pop %v1660
        %v1822 = vrcp.pop %v1662
        %v1823 = vrcp.pop %v1664
        %v1824 = vrcp.pop %v1666
        %v1825 = vrcp.pop %v1668
        %v1826 = vrcp.pop %v1670
        %v1827 = vrcp.pop %v1672
        %v1828 = vrcp.pop %v1674
        %v1829 = vrcp.pop %v1676
        %v1830 = vmul.f32 %v1752, %v1814
        %v1831 = vmul.f32 %v1755, %v1815
        %v1832 = vmul.f32 %v1760, %v1816
        %v1833 = vmul.f32 %v1763, %v1817
        %v1834 = vmul.f32 %v1768, %v1818
        %v1835 = vmul.f32 %v1771, %v1819
        %v1836 = vmul.f32 %v1776, %v1820
        %v1837 = vmul.f32 %v1779, %v1821
        %v1838 = vmul.f32 %v1784, %v1822
        %v1839 = vmul.f32 %v1787, %v1823
        %v1840 = vmul.f32 %v1792, %v1824
        %v1841 = vmul.f32 %v1795, %v1825
        %v1842 = vmul.f32 %v1800, %v1826
        %v1843 = vmul.f32 %v1803, %v1827
        %v1844 = vmul.f32 %v1808, %v1828
        %v1845 = vmul.f32 %v1811, %v1829
        %v1846 = vpack.c.bf16 %v1831, %v1830
        %v1847 = vpack.c.bf16 %v1833, %v1832
        %v1848 = vpack.c.bf16 %v1835, %v1834
        %v1849 = vpack.c.bf16 %v1837, %v1836
        %v1850 = vpack.c.bf16 %v1839, %v1838
        %v1851 = vpack.c.bf16 %v1841, %v1840
        %v1852 = vpack.c.bf16 %v1843, %v1842
        %v1853 = vpack.c.bf16 %v1845, %v1844
        %1854 = vrot.lane.b32.xlu0 %v945, 64
        %v1855 = vpop.permute.xlu0 %1854
        %1856 = vrot.lane.b32.xlu0 %v946, 64
        %v1857 = vpop.permute.xlu0 %1856
        %1858 = vrot.lane.b32.xlu0 %v947, 64
        %v1859 = vpop.permute.xlu0 %1858
        %1860 = vrot.lane.b32.xlu0 %v948, 64
        %v1861 = vpop.permute.xlu0 %1860
        %1862 = vrot.lane.b32.xlu0 %v949, 64
        %v1863 = vpop.permute.xlu0 %1862
        %1864 = vrot.lane.b32.xlu0 %v950, 64
        %v1865 = vpop.permute.xlu0 %1864
        %1866 = vrot.lane.b32.xlu0 %v951, 64
        %v1867 = vpop.permute.xlu0 %1866
        %1868 = vrot.lane.b32.xlu0 %v952, 64
        %v1869 = vpop.permute.xlu0 %1868
        %1870 = vrot.lane.b32.xlu0 %v953, 64
        %v1871 = vpop.permute.xlu0 %1870
        %1872 = vrot.lane.b32.xlu0 %v954, 64
        %v1873 = vpop.permute.xlu0 %1872
        %1874 = vrot.lane.b32.xlu0 %v955, 64
        %v1875 = vpop.permute.xlu0 %1874
        %1876 = vrot.lane.b32.xlu0 %v956, 64
        %v1877 = vpop.permute.xlu0 %1876
        %1878 = vrot.lane.b32.xlu0 %v957, 64
        %v1879 = vpop.permute.xlu0 %1878
        %1880 = vrot.lane.b32.xlu0 %v958, 64
        %v1881 = vpop.permute.xlu0 %1880
        %1882 = vrot.lane.b32.xlu0 %v959, 64
        %v1883 = vpop.permute.xlu0 %1882
        %1884 = vrot.lane.b32.xlu0 %v960, 64
        %v1885 = vpop.permute.xlu0 %1884
        %v1887 = vsel %vm969, %v1855, 0
        %v1890 = vsel %vm969, %v1857, 0
        %v1893 = vsel %vm969, %v1859, 0
        %v1896 = vsel %vm969, %v1861, 0
        %v1899 = vsel %vm969, %v1863, 0
        %v1902 = vsel %vm969, %v1865, 0
        %v1905 = vsel %vm969, %v1867, 0
        %v1908 = vsel %vm969, %v1869, 0
        %v1911 = vsel %vm969, %v1871, 0
        %v1914 = vsel %vm969, %v1873, 0
        %v1917 = vsel %vm969, %v1875, 0
        %v1920 = vsel %vm969, %v1877, 0
        %v1923 = vsel %vm969, %v1879, 0
        %v1926 = vsel %vm969, %v1881, 0
        %v1929 = vsel %vm969, %v1883, 0
        %v1932 = vsel %vm969, %v1885, 0
        %1934 = vmatprep.subr.bf16.mxu0 0
        %1935 = vmatpush1.bf16.xpose.msra.mxu0 %v1911
        %1936 = vmatprep.subr.bf16.mxu0 0
        %1937 = vmatpush1.bf16.xpose.msra.mxu0 %v1914
        %1938 = vmatprep.subr.bf16.mxu0 0
        %1939 = vmatpush1.bf16.xpose.msra.mxu0 %v1917
        %1940 = vmatprep.subr.bf16.mxu0 0
        %1941 = vmatpush1.bf16.xpose.msra.mxu0 %v1920
        %1942 = vmatprep.subr.bf16.mxu0 0
        %1943 = vmatpush1.bf16.xpose.msra.mxu0 %v1923
        %1944 = vmatprep.subr.bf16.mxu0 0
        %1945 = vmatpush1.bf16.xpose.msra.mxu0 %v1926
        %1946 = vmatprep.subr.bf16.mxu0 0
        %1947 = vmatpush1.bf16.xpose.msra.mxu0 %v1929
        %1948 = vmatprep.subr.bf16.mxu0 0
        %1949 = vmatpush1.bf16.xpose.msra.mxu0 %v1932
        %1950 = vmatprep.subr.bf16.mxu0 0
        %1951 = vmatpush1.bf16.xpose.msra.mxu0 0
        %1952 = vmatprep.subr.bf16.mxu0 0
        %1953 = vmatpush1.bf16.xpose.msra.mxu0 0
        %1954 = vmatprep.subr.bf16.mxu0 0
        %1955 = vmatpush1.bf16.xpose.msra.mxu0 0
        %1956 = vmatprep.subr.bf16.mxu0 0
        %1957 = vmatpush1.bf16.xpose.msra.mxu0 0
        %1958 = vmatprep.subr.bf16.mxu0 0
        %1959 = vmatpush1.bf16.xpose.msra.mxu0 0
        %1960 = vmatprep.subr.bf16.mxu0 0
        %1961 = vmatpush1.bf16.xpose.msra.mxu0 0
        %1962 = vmatprep.subr.bf16.mxu0 0
        %1963 = vmatpush1.bf16.xpose.msra.mxu0 0
        %1964 = vmatprep.subr.bf16.mxu0 0
        %1965 = vmatpush1.bf16.xpose.msra.mxu0 0
        %1966 = vmatprep.mubr.bf16.mxu0 0
        %1967 = vmatmul.mubr.bf16.gmra.mrb[0].mxu0 %v1887
        %v1968 = vpop.f32.mrb[0].mxu0
        %v1969 = vadd.f32 0.0, %v1968
        %v1970 = vpop.f32.mrb[0].mxu0
        %v1971 = vpop.f32.mrb[0].mxu0
        %v1972 = vadd.f32 0.0, %v1971
        %v1973 = vpop.f32.mrb[0].mxu0
        %1974 = vmatprep.mubr.bf16.mxu0 0
        %1975 = vmatmul.mubr.bf16.gmra.mrb[0].mxu0 %v1890
        %v1976 = vpop.f32.mrb[0].mxu0
        %v1977 = vadd.f32 0.0, %v1976
        %v1978 = vpop.f32.mrb[0].mxu0
        %v1979 = vpop.f32.mrb[0].mxu0
        %v1980 = vadd.f32 0.0, %v1979
        %v1981 = vpop.f32.mrb[0].mxu0
        %1982 = vmatprep.mubr.bf16.mxu0 0
        %1983 = vmatmul.mubr.bf16.gmra.mrb[0].mxu0 %v1893
        %v1984 = vpop.f32.mrb[0].mxu0
        %v1985 = vadd.f32 0.0, %v1984
        %v1986 = vpop.f32.mrb[0].mxu0
        %v1987 = vpop.f32.mrb[0].mxu0
        %v1988 = vadd.f32 0.0, %v1987
        %v1989 = vpop.f32.mrb[0].mxu0
        %1990 = vmatprep.mubr.bf16.mxu0 0
        %1991 = vmatmul.mubr.bf16.gmra.mrb[0].mxu0 %v1896
        %v1992 = vpop.f32.mrb[0].mxu0
        %v1993 = vadd.f32 0.0, %v1992
        %v1994 = vpop.f32.mrb[0].mxu0
        %v1995 = vpop.f32.mrb[0].mxu0
        %v1996 = vadd.f32 0.0, %v1995
        %v1997 = vpop.f32.mrb[0].mxu0
        %1998 = vmatprep.mubr.bf16.mxu0 0
        %1999 = vmatmul.mubr.bf16.gmra.mrb[0].mxu0 %v1899
        %v2000 = vpop.f32.mrb[0].mxu0
        %v2001 = vadd.f32 0.0, %v2000
        %v2002 = vpop.f32.mrb[0].mxu0
        %v2003 = vpop.f32.mrb[0].mxu0
        %v2004 = vadd.f32 0.0, %v2003
        %v2005 = vpop.f32.mrb[0].mxu0
        %2006 = vmatprep.mubr.bf16.mxu0 0
        %2007 = vmatmul.mubr.bf16.gmra.mrb[0].mxu0 %v1902
        %v2008 = vpop.f32.mrb[0].mxu0
        %v2009 = vadd.f32 0.0, %v2008
        %v2010 = vpop.f32.mrb[0].mxu0
        %v2011 = vpop.f32.mrb[0].mxu0
        %v2012 = vadd.f32 0.0, %v2011
        %v2013 = vpop.f32.mrb[0].mxu0
        %2014 = vmatprep.mubr.bf16.mxu0 0
        %2015 = vmatmul.mubr.bf16.gmra.mrb[0].mxu0 %v1905
        %v2016 = vpop.f32.mrb[0].mxu0
        %v2017 = vadd.f32 0.0, %v2016
        %v2018 = vpop.f32.mrb[0].mxu0
        %v2019 = vpop.f32.mrb[0].mxu0
        %v2020 = vadd.f32 0.0, %v2019
        %v2021 = vpop.f32.mrb[0].mxu0
        %2022 = vmatprep.mubr.bf16.mxu0 0
        %2023 = vmatmul.mubr.bf16.gmra.mrb[0].mxu0 %v1908
        %v2024 = vpop.f32.mrb[0].mxu0
        %v2025 = vadd.f32 0.0, %v2024
        %v2026 = vpop.f32.mrb[0].mxu0
        %v2027 = vpop.f32.mrb[0].mxu0
        %v2028 = vadd.f32 0.0, %v2027
        %v2029 = vpop.f32.mrb[0].mxu0
        %2030 = vdwg.mxu0
        %2031 = vmax.xlane.f32.xlu0 %v1969
        %v2032 = vpop.xlane.xlu0 %2031
        %2033 = vmax.xlane.f32.xlu0 %v1972
        %v2034 = vpop.xlane.xlu0 %2033
        %2035 = vmax.xlane.f32.xlu0 %v1977
        %v2036 = vpop.xlane.xlu0 %2035
        %2037 = vmax.xlane.f32.xlu0 %v1980
        %v2038 = vpop.xlane.xlu0 %2037
        %2039 = vmax.xlane.f32.xlu0 %v1985
        %v2040 = vpop.xlane.xlu0 %2039
        %2041 = vmax.xlane.f32.xlu0 %v1988
        %v2042 = vpop.xlane.xlu0 %2041
        %2043 = vmax.xlane.f32.xlu0 %v1993
        %v2044 = vpop.xlane.xlu0 %2043
        %2045 = vmax.xlane.f32.xlu0 %v1996
        %v2046 = vpop.xlane.xlu0 %2045
        %2047 = vmax.xlane.f32.xlu0 %v2001
        %v2048 = vpop.xlane.xlu0 %2047
        %2049 = vmax.xlane.f32.xlu0 %v2004
        %v2050 = vpop.xlane.xlu0 %2049
        %2051 = vmax.xlane.f32.xlu0 %v2009
        %v2052 = vpop.xlane.xlu0 %2051
        %2053 = vmax.xlane.f32.xlu0 %v2012
        %v2054 = vpop.xlane.xlu0 %2053
        %2055 = vmax.xlane.f32.xlu0 %v2017
        %v2056 = vpop.xlane.xlu0 %2055
        %2057 = vmax.xlane.f32.xlu0 %v2020
        %v2058 = vpop.xlane.xlu0 %2057
        %2059 = vmax.xlane.f32.xlu0 %v2025
        %v2060 = vpop.xlane.xlu0 %2059
        %2061 = vmax.xlane.f32.xlu0 %v2028
        %v2062 = vpop.xlane.xlu0 %2061
        %v2063 = vsub.f32 %v1969, %v2032
        %v2064 = vsub.f32 %v1972, %v2034
        %v2065 = vsub.f32 %v1977, %v2036
        %v2066 = vsub.f32 %v1980, %v2038
        %v2067 = vsub.f32 %v1985, %v2040
        %v2068 = vsub.f32 %v1988, %v2042
        %v2069 = vsub.f32 %v1993, %v2044
        %v2070 = vsub.f32 %v1996, %v2046
        %v2071 = vsub.f32 %v2001, %v2048
        %v2072 = vsub.f32 %v2004, %v2050
        %v2073 = vsub.f32 %v2009, %v2052
        %v2074 = vsub.f32 %v2012, %v2054
        %v2075 = vsub.f32 %v2017, %v2056
        %v2076 = vsub.f32 %v2020, %v2058
        %v2077 = vsub.f32 %v2025, %v2060
        %v2078 = vsub.f32 %v2028, %v2062
        %v2079 = vmul.f32 %v2063, 1.442695
        %v2080 = vpow.pop %v2079
        %v2081 = vmul.f32 %v2064, 1.442695
        %v2082 = vpow.pop %v2081
        %v2083 = vmul.f32 %v2065, 1.442695
        %v2084 = vpow.pop %v2083
        %v2085 = vmul.f32 %v2066, 1.442695
        %v2086 = vpow.pop %v2085
        %v2087 = vmul.f32 %v2067, 1.442695
        %v2088 = vpow.pop %v2087
        %v2089 = vmul.f32 %v2068, 1.442695
        %v2090 = vpow.pop %v2089
        %v2091 = vmul.f32 %v2069, 1.442695
        %v2092 = vpow.pop %v2091
        %v2093 = vmul.f32 %v2070, 1.442695
        %v2094 = vpow.pop %v2093
        %v2095 = vmul.f32 %v2071, 1.442695
        %v2096 = vpow.pop %v2095
        %v2097 = vmul.f32 %v2072, 1.442695
        %v2098 = vpow.pop %v2097
        %v2099 = vmul.f32 %v2073, 1.442695
        %v2100 = vpow.pop %v2099
        %v2101 = vmul.f32 %v2074, 1.442695
        %v2102 = vpow.pop %v2101
        %v2103 = vmul.f32 %v2075, 1.442695
        %v2104 = vpow.pop %v2103
        %v2105 = vmul.f32 %v2076, 1.442695
        %v2106 = vpow.pop %v2105
        %v2107 = vmul.f32 %v2077, 1.442695
        %v2108 = vpow.pop %v2107
        %v2109 = vmul.f32 %v2078, 1.442695
        %v2110 = vpow.pop %v2109
        %2111 = vadd.xlane.f32.xlu0 %v2080
        %v2112 = vpop.xlane.xlu0 %2111
        %2113 = vadd.xlane.f32.xlu0 %v2082
        %v2114 = vpop.xlane.xlu0 %2113
        %2115 = vadd.xlane.f32.xlu0 %v2084
        %v2116 = vpop.xlane.xlu0 %2115
        %2117 = vadd.xlane.f32.xlu0 %v2086
        %v2118 = vpop.xlane.xlu0 %2117
        %2119 = vadd.xlane.f32.xlu0 %v2088
        %v2120 = vpop.xlane.xlu0 %2119
        %2121 = vadd.xlane.f32.xlu0 %v2090
        %v2122 = vpop.xlane.xlu0 %2121
        %2123 = vadd.xlane.f32.xlu0 %v2092
        %v2124 = vpop.xlane.xlu0 %2123
        %2125 = vadd.xlane.f32.xlu0 %v2094
        %v2126 = vpop.xlane.xlu0 %2125
        %2127 = vadd.xlane.f32.xlu0 %v2096
        %v2128 = vpop.xlane.xlu0 %2127
        %2129 = vadd.xlane.f32.xlu0 %v2098
        %v2130 = vpop.xlane.xlu0 %2129
        %2131 = vadd.xlane.f32.xlu0 %v2100
        %v2132 = vpop.xlane.xlu0 %2131
        %2133 = vadd.xlane.f32.xlu0 %v2102
        %v2134 = vpop.xlane.xlu0 %2133
        %2135 = vadd.xlane.f32.xlu0 %v2104
        %v2136 = vpop.xlane.xlu0 %2135
        %2137 = vadd.xlane.f32.xlu0 %v2106
        %v2138 = vpop.xlane.xlu0 %2137
        %2139 = vadd.xlane.f32.xlu0 %v2108
        %v2140 = vpop.xlane.xlu0 %2139
        %2141 = vadd.xlane.f32.xlu0 %v2110
        %v2142 = vpop.xlane.xlu0 %2141
        %v2143 = vpack.c.bf16 %v2082, %v2080
        %v2144 = vpack.c.bf16 %v2086, %v2084
        %v2145 = vpack.c.bf16 %v2090, %v2088
        %v2146 = vpack.c.bf16 %v2094, %v2092
        %v2147 = vpack.c.bf16 %v2098, %v2096
        %v2148 = vpack.c.bf16 %v2102, %v2100
        %v2149 = vpack.c.bf16 %v2106, %v2104
        %v2150 = vpack.c.bf16 %v2110, %v2108
        %2151 = vrot.lane.b32.xlu0 %v961, 64
        %v2152 = vpop.permute.xlu0 %2151
        %2153 = vrot.lane.b32.xlu0 %v962, 64
        %v2154 = vpop.permute.xlu0 %2153
        %2155 = vrot.lane.b32.xlu0 %v963, 64
        %v2156 = vpop.permute.xlu0 %2155
        %2157 = vrot.lane.b32.xlu0 %v964, 64
        %v2158 = vpop.permute.xlu0 %2157
        %2159 = vrot.lane.b32.xlu0 %v965, 64
        %v2160 = vpop.permute.xlu0 %2159
        %2161 = vrot.lane.b32.xlu0 %v966, 64
        %v2162 = vpop.permute.xlu0 %2161
        %2163 = vrot.lane.b32.xlu0 %v967, 64
        %v2164 = vpop.permute.xlu0 %2163
        %2165 = vrot.lane.b32.xlu0 %v968, 64
        %v2166 = vpop.permute.xlu0 %2165
        %2175 = vmatprep.subr.bf16.mxu0 0
        %2176 = vmatpush1.bf16.msra.mxu0 %v2152
        %2177 = vmatprep.subr.bf16.mxu0 0
        %2178 = vmatpush1.bf16.msra.mxu0 %v2154
        %2179 = vmatprep.subr.bf16.mxu0 0
        %2180 = vmatpush1.bf16.msra.mxu0 %v2156
        %2181 = vmatprep.subr.bf16.mxu0 0
        %2182 = vmatpush1.bf16.msra.mxu0 %v2158
        %2183 = vmatprep.subr.bf16.mxu0 0
        %2184 = vmatpush1.bf16.msra.mxu0 %v2160
        %2185 = vmatprep.subr.bf16.mxu0 0
        %2186 = vmatpush1.bf16.msra.mxu0 %v2162
        %2187 = vmatprep.subr.bf16.mxu0 0
        %2188 = vmatpush1.bf16.msra.mxu0 %v2164
        %2189 = vmatprep.subr.bf16.mxu0 0
        %2190 = vmatpush1.bf16.msra.mxu0 %v2166
        %2191 = vmatprep.subr.bf16.mxu0 0
        %2192 = vmatpush1.bf16.msra.mxu0 0
        %2193 = vmatprep.subr.bf16.mxu0 0
        %2194 = vmatpush1.bf16.msra.mxu0 0
        %2195 = vmatprep.subr.bf16.mxu0 0
        %2196 = vmatpush1.bf16.msra.mxu0 0
        %2197 = vmatprep.subr.bf16.mxu0 0
        %2198 = vmatpush1.bf16.msra.mxu0 0
        %2199 = vmatprep.subr.bf16.mxu0 0
        %2200 = vmatpush1.bf16.msra.mxu0 0
        %2201 = vmatprep.subr.bf16.mxu0 0
        %2202 = vmatpush1.bf16.msra.mxu0 0
        %2203 = vmatprep.subr.bf16.mxu0 0
        %2204 = vmatpush1.bf16.msra.mxu0 0
        %2205 = vmatprep.subr.bf16.mxu0 0
        %2206 = vmatpush1.bf16.msra.mxu0 0
        %2207 = vmatprep.mubr.bf16.mxu0 0
        %2208 = vmatmul.mubr.bf16.gmra.mrb[0].mxu0 %v2143
        %v2209 = vpop.f32.mrb[0].mxu0
        %v2210 = vadd.f32 0.0, %v2209
        %v2211 = vpop.f32.mrb[0].mxu0
        %v2212 = vpop.f32.mrb[0].mxu0
        %v2213 = vadd.f32 0.0, %v2212
        %v2214 = vpop.f32.mrb[0].mxu0
        %2215 = vmatprep.mubr.bf16.mxu0 0
        %2216 = vmatmul.mubr.bf16.gmra.mrb[0].mxu0 %v2144
        %v2217 = vpop.f32.mrb[0].mxu0
        %v2218 = vadd.f32 0.0, %v2217
        %v2219 = vpop.f32.mrb[0].mxu0
        %v2220 = vpop.f32.mrb[0].mxu0
        %v2221 = vadd.f32 0.0, %v2220
        %v2222 = vpop.f32.mrb[0].mxu0
        %2223 = vmatprep.mubr.bf16.mxu0 0
        %2224 = vmatmul.mubr.bf16.gmra.mrb[0].mxu0 %v2145
        %v2225 = vpop.f32.mrb[0].mxu0
        %v2226 = vadd.f32 0.0, %v2225
        %v2227 = vpop.f32.mrb[0].mxu0
        %v2228 = vpop.f32.mrb[0].mxu0
        %v2229 = vadd.f32 0.0, %v2228
        %v2230 = vpop.f32.mrb[0].mxu0
        %2231 = vmatprep.mubr.bf16.mxu0 0
        %2232 = vmatmul.mubr.bf16.gmra.mrb[0].mxu0 %v2146
        %v2233 = vpop.f32.mrb[0].mxu0
        %v2234 = vadd.f32 0.0, %v2233
        %v2235 = vpop.f32.mrb[0].mxu0
        %v2236 = vpop.f32.mrb[0].mxu0
        %v2237 = vadd.f32 0.0, %v2236
        %v2238 = vpop.f32.mrb[0].mxu0
        %2239 = vmatprep.mubr.bf16.mxu0 0
        %2240 = vmatmul.mubr.bf16.gmra.mrb[0].mxu0 %v2147
        %v2241 = vpop.f32.mrb[0].mxu0
        %v2242 = vadd.f32 0.0, %v2241
        %v2243 = vpop.f32.mrb[0].mxu0
        %v2244 = vpop.f32.mrb[0].mxu0
        %v2245 = vadd.f32 0.0, %v2244
        %v2246 = vpop.f32.mrb[0].mxu0
        %2247 = vmatprep.mubr.bf16.mxu0 0
        %2248 = vmatmul.mubr.bf16.gmra.mrb[0].mxu0 %v2148
        %v2249 = vpop.f32.mrb[0].mxu0
        %v2250 = vadd.f32 0.0, %v2249
        %v2251 = vpop.f32.mrb[0].mxu0
        %v2252 = vpop.f32.mrb[0].mxu0
        %v2253 = vadd.f32 0.0, %v2252
        %v2254 = vpop.f32.mrb[0].mxu0
        %2255 = vmatprep.mubr.bf16.mxu0 0
        %2256 = vmatmul.mubr.bf16.gmra.mrb[0].mxu0 %v2149
        %v2257 = vpop.f32.mrb[0].mxu0
        %v2258 = vadd.f32 0.0, %v2257
        %v2259 = vpop.f32.mrb[0].mxu0
        %v2260 = vpop.f32.mrb[0].mxu0
        %v2261 = vadd.f32 0.0, %v2260
        %v2262 = vpop.f32.mrb[0].mxu0
        %2263 = vmatprep.mubr.bf16.mxu0 0
        %2264 = vmatmul.mubr.bf16.gmra.mrb[0].mxu0 %v2150
        %v2265 = vpop.f32.mrb[0].mxu0
        %v2266 = vadd.f32 0.0, %v2265
        %v2267 = vpop.f32.mrb[0].mxu0
        %v2268 = vpop.f32.mrb[0].mxu0
        %v2269 = vadd.f32 0.0, %v2268
        %v2270 = vpop.f32.mrb[0].mxu0
        %2271 = vdwg.mxu0
        %v2272 = vrcp.pop %v2112
        %v2273 = vrcp.pop %v2114
        %v2274 = vrcp.pop %v2116
        %v2275 = vrcp.pop %v2118
        %v2276 = vrcp.pop %v2120
        %v2277 = vrcp.pop %v2122
        %v2278 = vrcp.pop %v2124
        %v2279 = vrcp.pop %v2126
        %v2280 = vrcp.pop %v2128
        %v2281 = vrcp.pop %v2130
        %v2282 = vrcp.pop %v2132
        %v2283 = vrcp.pop %v2134
        %v2284 = vrcp.pop %v2136
        %v2285 = vrcp.pop %v2138
        %v2286 = vrcp.pop %v2140
        %v2287 = vrcp.pop %v2142
        %v2288 = vmul.f32 %v2210, %v2272
        %v2289 = vmul.f32 %v2213, %v2273
        %v2290 = vmul.f32 %v2218, %v2274
        %v2291 = vmul.f32 %v2221, %v2275
        %v2292 = vmul.f32 %v2226, %v2276
        %v2293 = vmul.f32 %v2229, %v2277
        %v2294 = vmul.f32 %v2234, %v2278
        %v2295 = vmul.f32 %v2237, %v2279
        %v2296 = vmul.f32 %v2242, %v2280
        %v2297 = vmul.f32 %v2245, %v2281
        %v2298 = vmul.f32 %v2250, %v2282
        %v2299 = vmul.f32 %v2253, %v2283
        %v2300 = vmul.f32 %v2258, %v2284
        %v2301 = vmul.f32 %v2261, %v2285
        %v2302 = vmul.f32 %v2266, %v2286
        %v2303 = vmul.f32 %v2269, %v2287
        %v2304 = vpack.c.bf16 %v2289, %v2288
        %v2305 = vpack.c.bf16 %v2291, %v2290
        %v2306 = vpack.c.bf16 %v2293, %v2292
        %v2307 = vpack.c.bf16 %v2295, %v2294
        %v2308 = vpack.c.bf16 %v2297, %v2296
        %v2309 = vpack.c.bf16 %v2299, %v2298
        %v2310 = vpack.c.bf16 %v2301, %v2300
        %v2311 = vpack.c.bf16 %v2303, %v2302
        %2312 = vrot.lane.b32.xlu0 %v945, 32
        %v2313 = vpop.permute.xlu0 %2312
        %2314 = vrot.lane.b32.xlu0 %v946, 32
        %v2315 = vpop.permute.xlu0 %2314
        %2316 = vrot.lane.b32.xlu0 %v947, 32
        %v2317 = vpop.permute.xlu0 %2316
        %2318 = vrot.lane.b32.xlu0 %v948, 32
        %v2319 = vpop.permute.xlu0 %2318
        %2320 = vrot.lane.b32.xlu0 %v949, 32
        %v2321 = vpop.permute.xlu0 %2320
        %2322 = vrot.lane.b32.xlu0 %v950, 32
        %v2323 = vpop.permute.xlu0 %2322
        %2324 = vrot.lane.b32.xlu0 %v951, 32
        %v2325 = vpop.permute.xlu0 %2324
        %2326 = vrot.lane.b32.xlu0 %v952, 32
        %v2327 = vpop.permute.xlu0 %2326
        %2328 = vrot.lane.b32.xlu0 %v953, 32
        %v2329 = vpop.permute.xlu0 %2328
        %2330 = vrot.lane.b32.xlu0 %v954, 32
        %v2331 = vpop.permute.xlu0 %2330
        %2332 = vrot.lane.b32.xlu0 %v955, 32
        %v2333 = vpop.permute.xlu0 %2332
        %2334 = vrot.lane.b32.xlu0 %v956, 32
        %v2335 = vpop.permute.xlu0 %2334
        %2336 = vrot.lane.b32.xlu0 %v957, 32
        %v2337 = vpop.permute.xlu0 %2336
        %2338 = vrot.lane.b32.xlu0 %v958, 32
        %v2339 = vpop.permute.xlu0 %2338
        %2340 = vrot.lane.b32.xlu0 %v959, 32
        %v2341 = vpop.permute.xlu0 %2340
        %2342 = vrot.lane.b32.xlu0 %v960, 32
        %v2343 = vpop.permute.xlu0 %2342
        %v2345 = vsel %vm969, %v2313, 0
        %v2348 = vsel %vm969, %v2315, 0
        %v2351 = vsel %vm969, %v2317, 0
        %v2354 = vsel %vm969, %v2319, 0
        %v2357 = vsel %vm969, %v2321, 0
        %v2360 = vsel %vm969, %v2323, 0
        %v2363 = vsel %vm969, %v2325, 0
        %v2366 = vsel %vm969, %v2327, 0
        %v2369 = vsel %vm969, %v2329, 0
        %v2372 = vsel %vm969, %v2331, 0
        %v2375 = vsel %vm969, %v2333, 0
        %v2378 = vsel %vm969, %v2335, 0
        %v2381 = vsel %vm969, %v2337, 0
        %v2384 = vsel %vm969, %v2339, 0
        %v2387 = vsel %vm969, %v2341, 0
        %v2390 = vsel %vm969, %v2343, 0
        %2392 = vmatprep.subr.bf16.mxu0 0
        %2393 = vmatpush1.bf16.xpose.msra.mxu0 %v2369
        %2394 = vmatprep.subr.bf16.mxu0 0
        %2395 = vmatpush1.bf16.xpose.msra.mxu0 %v2372
        %2396 = vmatprep.subr.bf16.mxu0 0
        %2397 = vmatpush1.bf16.xpose.msra.mxu0 %v2375
        %2398 = vmatprep.subr.bf16.mxu0 0
        %2399 = vmatpush1.bf16.xpose.msra.mxu0 %v2378
        %2400 = vmatprep.subr.bf16.mxu0 0
        %2401 = vmatpush1.bf16.xpose.msra.mxu0 %v2381
        %2402 = vmatprep.subr.bf16.mxu0 0
        %2403 = vmatpush1.bf16.xpose.msra.mxu0 %v2384
        %2404 = vmatprep.subr.bf16.mxu0 0
        %2405 = vmatpush1.bf16.xpose.msra.mxu0 %v2387
        %2406 = vmatprep.subr.bf16.mxu0 0
        %2407 = vmatpush1.bf16.xpose.msra.mxu0 %v2390
        %2408 = vmatprep.subr.bf16.mxu0 0
        %2409 = vmatpush1.bf16.xpose.msra.mxu0 0
        %2410 = vmatprep.subr.bf16.mxu0 0
        %2411 = vmatpush1.bf16.xpose.msra.mxu0 0
        %2412 = vmatprep.subr.bf16.mxu0 0
        %2413 = vmatpush1.bf16.xpose.msra.mxu0 0
        %2414 = vmatprep.subr.bf16.mxu0 0
        %2415 = vmatpush1.bf16.xpose.msra.mxu0 0
        %2416 = vmatprep.subr.bf16.mxu0 0
        %2417 = vmatpush1.bf16.xpose.msra.mxu0 0
        %2418 = vmatprep.subr.bf16.mxu0 0
        %2419 = vmatpush1.bf16.xpose.msra.mxu0 0
        %2420 = vmatprep.subr.bf16.mxu0 0
        %2421 = vmatpush1.bf16.xpose.msra.mxu0 0
        %2422 = vmatprep.subr.bf16.mxu0 0
        %2423 = vmatpush1.bf16.xpose.msra.mxu0 0
        %2424 = vmatprep.mubr.bf16.mxu0 0
        %2425 = vmatmul.mubr.bf16.gmra.mrb[0].mxu0 %v2345
        %v2426 = vpop.f32.mrb[0].mxu0
        %v2427 = vadd.f32 0.0, %v2426
        %v2428 = vpop.f32.mrb[0].mxu0
        %v2429 = vpop.f32.mrb[0].mxu0
        %v2430 = vadd.f32 0.0, %v2429
        %v2431 = vpop.f32.mrb[0].mxu0
        %2432 = vmatprep.mubr.bf16.mxu0 0
        %2433 = vmatmul.mubr.bf16.gmra.mrb[0].mxu0 %v2348
        %v2434 = vpop.f32.mrb[0].mxu0
        %v2435 = vadd.f32 0.0, %v2434
        %v2436 = vpop.f32.mrb[0].mxu0
        %v2437 = vpop.f32.mrb[0].mxu0
        %v2438 = vadd.f32 0.0, %v2437
        %v2439 = vpop.f32.mrb[0].mxu0
        %2440 = vmatprep.mubr.bf16.mxu0 0
        %2441 = vmatmul.mubr.bf16.gmra.mrb[0].mxu0 %v2351
        %v2442 = vpop.f32.mrb[0].mxu0
        %v2443 = vadd.f32 0.0, %v2442
        %v2444 = vpop.f32.mrb[0].mxu0
        %v2445 = vpop.f32.mrb[0].mxu0
        %v2446 = vadd.f32 0.0, %v2445
        %v2447 = vpop.f32.mrb[0].mxu0
        %2448 = vmatprep.mubr.bf16.mxu0 0
        %2449 = vmatmul.mubr.bf16.gmra.mrb[0].mxu0 %v2354
        %v2450 = vpop.f32.mrb[0].mxu0
        %v2451 = vadd.f32 0.0, %v2450
        %v2452 = vpop.f32.mrb[0].mxu0
        %v2453 = vpop.f32.mrb[0].mxu0
        %v2454 = vadd.f32 0.0, %v2453
        %v2455 = vpop.f32.mrb[0].mxu0
        %2456 = vmatprep.mubr.bf16.mxu0 0
        %2457 = vmatmul.mubr.bf16.gmra.mrb[0].mxu0 %v2357
        %v2458 = vpop.f32.mrb[0].mxu0
        %v2459 = vadd.f32 0.0, %v2458
        %v2460 = vpop.f32.mrb[0].mxu0
        %v2461 = vpop.f32.mrb[0].mxu0
        %v2462 = vadd.f32 0.0, %v2461
        %v2463 = vpop.f32.mrb[0].mxu0
        %2464 = vmatprep.mubr.bf16.mxu0 0
        %2465 = vmatmul.mubr.bf16.gmra.mrb[0].mxu0 %v2360
        %v2466 = vpop.f32.mrb[0].mxu0
        %v2467 = vadd.f32 0.0, %v2466
        %v2468 = vpop.f32.mrb[0].mxu0
        %v2469 = vpop.f32.mrb[0].mxu0
        %v2470 = vadd.f32 0.0, %v2469
        %v2471 = vpop.f32.mrb[0].mxu0
        %2472 = vmatprep.mubr.bf16.mxu0 0
        %2473 = vmatmul.mubr.bf16.gmra.mrb[0].mxu0 %v2363
        %v2474 = vpop.f32.mrb[0].mxu0
        %v2475 = vadd.f32 0.0, %v2474
        %v2476 = vpop.f32.mrb[0].mxu0
        %v2477 = vpop.f32.mrb[0].mxu0
        %v2478 = vadd.f32 0.0, %v2477
        %v2479 = vpop.f32.mrb[0].mxu0
        %2480 = vmatprep.mubr.bf16.mxu0 0
        %2481 = vmatmul.mubr.bf16.gmra.mrb[0].mxu0 %v2366
        %v2482 = vpop.f32.mrb[0].mxu0
        %v2483 = vadd.f32 0.0, %v2482
        %v2484 = vpop.f32.mrb[0].mxu0
        %v2485 = vpop.f32.mrb[0].mxu0
        %v2486 = vadd.f32 0.0, %v2485
        %v2487 = vpop.f32.mrb[0].mxu0
        %2488 = vdwg.mxu0
        %2489 = vmax.xlane.f32.xlu0 %v2427
        %v2490 = vpop.xlane.xlu0 %2489
        %2491 = vmax.xlane.f32.xlu0 %v2430
        %v2492 = vpop.xlane.xlu0 %2491
        %2493 = vmax.xlane.f32.xlu0 %v2435
        %v2494 = vpop.xlane.xlu0 %2493
        %2495 = vmax.xlane.f32.xlu0 %v2438
        %v2496 = vpop.xlane.xlu0 %2495
        %2497 = vmax.xlane.f32.xlu0 %v2443
        %v2498 = vpop.xlane.xlu0 %2497
        %2499 = vmax.xlane.f32.xlu0 %v2446
        %v2500 = vpop.xlane.xlu0 %2499
        %2501 = vmax.xlane.f32.xlu0 %v2451
        %v2502 = vpop.xlane.xlu0 %2501
        %2503 = vmax.xlane.f32.xlu0 %v2454
        %v2504 = vpop.xlane.xlu0 %2503
        %2505 = vmax.xlane.f32.xlu0 %v2459
        %v2506 = vpop.xlane.xlu0 %2505
        %2507 = vmax.xlane.f32.xlu0 %v2462
        %v2508 = vpop.xlane.xlu0 %2507
        %2509 = vmax.xlane.f32.xlu0 %v2467
        %v2510 = vpop.xlane.xlu0 %2509
        %2511 = vmax.xlane.f32.xlu0 %v2470
        %v2512 = vpop.xlane.xlu0 %2511
        %2513 = vmax.xlane.f32.xlu0 %v2475
        %v2514 = vpop.xlane.xlu0 %2513
        %2515 = vmax.xlane.f32.xlu0 %v2478
        %v2516 = vpop.xlane.xlu0 %2515
        %2517 = vmax.xlane.f32.xlu0 %v2483
        %v2518 = vpop.xlane.xlu0 %2517
        %2519 = vmax.xlane.f32.xlu0 %v2486
        %v2520 = vpop.xlane.xlu0 %2519
        %v2521 = vsub.f32 %v2427, %v2490
        %v2522 = vsub.f32 %v2430, %v2492
        %v2523 = vsub.f32 %v2435, %v2494
        %v2524 = vsub.f32 %v2438, %v2496
        %v2525 = vsub.f32 %v2443, %v2498
        %v2526 = vsub.f32 %v2446, %v2500
        %v2527 = vsub.f32 %v2451, %v2502
        %v2528 = vsub.f32 %v2454, %v2504
        %v2529 = vsub.f32 %v2459, %v2506
        %v2530 = vsub.f32 %v2462, %v2508
        %v2531 = vsub.f32 %v2467, %v2510
        %v2532 = vsub.f32 %v2470, %v2512
        %v2533 = vsub.f32 %v2475, %v2514
        %v2534 = vsub.f32 %v2478, %v2516
        %v2535 = vsub.f32 %v2483, %v2518
        %v2536 = vsub.f32 %v2486, %v2520
        %v2537 = vmul.f32 %v2521, 1.442695
        %v2538 = vpow.pop %v2537
        %v2539 = vmul.f32 %v2522, 1.442695
        %v2540 = vpow.pop %v2539
        %v2541 = vmul.f32 %v2523, 1.442695
        %v2542 = vpow.pop %v2541
        %v2543 = vmul.f32 %v2524, 1.442695
        %v2544 = vpow.pop %v2543
        %v2545 = vmul.f32 %v2525, 1.442695
        %v2546 = vpow.pop %v2545
        %v2547 = vmul.f32 %v2526, 1.442695
        %v2548 = vpow.pop %v2547
        %v2549 = vmul.f32 %v2527, 1.442695
        %v2550 = vpow.pop %v2549
        %v2551 = vmul.f32 %v2528, 1.442695
        %v2552 = vpow.pop %v2551
        %v2553 = vmul.f32 %v2529, 1.442695
        %v2554 = vpow.pop %v2553
        %v2555 = vmul.f32 %v2530, 1.442695
        %v2556 = vpow.pop %v2555
        %v2557 = vmul.f32 %v2531, 1.442695
        %v2558 = vpow.pop %v2557
        %v2559 = vmul.f32 %v2532, 1.442695
        %v2560 = vpow.pop %v2559
        %v2561 = vmul.f32 %v2533, 1.442695
        %v2562 = vpow.pop %v2561
        %v2563 = vmul.f32 %v2534, 1.442695
        %v2564 = vpow.pop %v2563
        %v2565 = vmul.f32 %v2535, 1.442695
        %v2566 = vpow.pop %v2565
        %v2567 = vmul.f32 %v2536, 1.442695
        %v2568 = vpow.pop %v2567
        %2569 = vadd.xlane.f32.xlu0 %v2538
        %v2570 = vpop.xlane.xlu0 %2569
        %2571 = vadd.xlane.f32.xlu0 %v2540
        %v2572 = vpop.xlane.xlu0 %2571
        %2573 = vadd.xlane.f32.xlu0 %v2542
        %v2574 = vpop.xlane.xlu0 %2573
        %2575 = vadd.xlane.f32.xlu0 %v2544
        %v2576 = vpop.xlane.xlu0 %2575
        %2577 = vadd.xlane.f32.xlu0 %v2546
        %v2578 = vpop.xlane.xlu0 %2577
        %2579 = vadd.xlane.f32.xlu0 %v2548
        %v2580 = vpop.xlane.xlu0 %2579
        %2581 = vadd.xlane.f32.xlu0 %v2550
        %v2582 = vpop.xlane.xlu0 %2581
        %2583 = vadd.xlane.f32.xlu0 %v2552
        %v2584 = vpop.xlane.xlu0 %2583
        %2585 = vadd.xlane.f32.xlu0 %v2554
        %v2586 = vpop.xlane.xlu0 %2585
        %2587 = vadd.xlane.f32.xlu0 %v2556
        %v2588 = vpop.xlane.xlu0 %2587
        %2589 = vadd.xlane.f32.xlu0 %v2558
        %v2590 = vpop.xlane.xlu0 %2589
        %2591 = vadd.xlane.f32.xlu0 %v2560
        %v2592 = vpop.xlane.xlu0 %2591
        %2593 = vadd.xlane.f32.xlu0 %v2562
        %v2594 = vpop.xlane.xlu0 %2593
        %2595 = vadd.xlane.f32.xlu0 %v2564
        %v2596 = vpop.xlane.xlu0 %2595
        %2597 = vadd.xlane.f32.xlu0 %v2566
        %v2598 = vpop.xlane.xlu0 %2597
        %2599 = vadd.xlane.f32.xlu0 %v2568
        %v2600 = vpop.xlane.xlu0 %2599
        %v2601 = vpack.c.bf16 %v2540, %v2538
        %v2602 = vpack.c.bf16 %v2544, %v2542
        %v2603 = vpack.c.bf16 %v2548, %v2546
        %v2604 = vpack.c.bf16 %v2552, %v2550
        %v2605 = vpack.c.bf16 %v2556, %v2554
        %v2606 = vpack.c.bf16 %v2560, %v2558
        %v2607 = vpack.c.bf16 %v2564, %v2562
        %v2608 = vpack.c.bf16 %v2568, %v2566
        %2609 = vrot.lane.b32.xlu0 %v961, 32
        %v2610 = vpop.permute.xlu0 %2609
        %2611 = vrot.lane.b32.xlu0 %v962, 32
        %v2612 = vpop.permute.xlu0 %2611
        %2613 = vrot.lane.b32.xlu0 %v963, 32
        %v2614 = vpop.permute.xlu0 %2613
        %2615 = vrot.lane.b32.xlu0 %v964, 32
        %v2616 = vpop.permute.xlu0 %2615
        %2617 = vrot.lane.b32.xlu0 %v965, 32
        %v2618 = vpop.permute.xlu0 %2617
        %2619 = vrot.lane.b32.xlu0 %v966, 32
        %v2620 = vpop.permute.xlu0 %2619
        %2621 = vrot.lane.b32.xlu0 %v967, 32
        %v2622 = vpop.permute.xlu0 %2621
        %2623 = vrot.lane.b32.xlu0 %v968, 32
        %v2624 = vpop.permute.xlu0 %2623
        %2633 = vmatprep.subr.bf16.mxu0 0
        %2634 = vmatpush1.bf16.msra.mxu0 %v2610
        %2635 = vmatprep.subr.bf16.mxu0 0
        %2636 = vmatpush1.bf16.msra.mxu0 %v2612
        %2637 = vmatprep.subr.bf16.mxu0 0
        %2638 = vmatpush1.bf16.msra.mxu0 %v2614
        %2639 = vmatprep.subr.bf16.mxu0 0
        %2640 = vmatpush1.bf16.msra.mxu0 %v2616
        %2641 = vmatprep.subr.bf16.mxu0 0
        %2642 = vmatpush1.bf16.msra.mxu0 %v2618
        %2643 = vmatprep.subr.bf16.mxu0 0
        %2644 = vmatpush1.bf16.msra.mxu0 %v2620
        %2645 = vmatprep.subr.bf16.mxu0 0
        %2646 = vmatpush1.bf16.msra.mxu0 %v2622
        %2647 = vmatprep.subr.bf16.mxu0 0
        %2648 = vmatpush1.bf16.msra.mxu0 %v2624
        %2649 = vmatprep.subr.bf16.mxu0 0
        %2650 = vmatpush1.bf16.msra.mxu0 0
        %2651 = vmatprep.subr.bf16.mxu0 0
        %2652 = vmatpush1.bf16.msra.mxu0 0
        %2653 = vmatprep.subr.bf16.mxu0 0
        %2654 = vmatpush1.bf16.msra.mxu0 0
        %2655 = vmatprep.subr.bf16.mxu0 0
        %2656 = vmatpush1.bf16.msra.mxu0 0
        %2657 = vmatprep.subr.bf16.mxu0 0
        %2658 = vmatpush1.bf16.msra.mxu0 0
        %2659 = vmatprep.subr.bf16.mxu0 0
        %2660 = vmatpush1.bf16.msra.mxu0 0
        %2661 = vmatprep.subr.bf16.mxu0 0
        %2662 = vmatpush1.bf16.msra.mxu0 0
        %2663 = vmatprep.subr.bf16.mxu0 0
        %2664 = vmatpush1.bf16.msra.mxu0 0
        %2665 = vmatprep.mubr.bf16.mxu0 0
        %2666 = vmatmul.mubr.bf16.gmra.mrb[0].mxu0 %v2601
        %v2667 = vpop.f32.mrb[0].mxu0
        %v2668 = vadd.f32 0.0, %v2667
        %v2669 = vpop.f32.mrb[0].mxu0
        %v2670 = vpop.f32.mrb[0].mxu0
        %v2671 = vadd.f32 0.0, %v2670
        %v2672 = vpop.f32.mrb[0].mxu0
        %2673 = vmatprep.mubr.bf16.mxu0 0
        %2674 = vmatmul.mubr.bf16.gmra.mrb[0].mxu0 %v2602
        %v2675 = vpop.f32.mrb[0].mxu0
        %v2676 = vadd.f32 0.0, %v2675
        %v2677 = vpop.f32.mrb[0].mxu0
        %v2678 = vpop.f32.mrb[0].mxu0
        %v2679 = vadd.f32 0.0, %v2678
        %v2680 = vpop.f32.mrb[0].mxu0
        %2681 = vmatprep.mubr.bf16.mxu0 0
        %2682 = vmatmul.mubr.bf16.gmra.mrb[0].mxu0 %v2603
        %v2683 = vpop.f32.mrb[0].mxu0
        %v2684 = vadd.f32 0.0, %v2683
        %v2685 = vpop.f32.mrb[0].mxu0
        %v2686 = vpop.f32.mrb[0].mxu0
        %v2687 = vadd.f32 0.0, %v2686
        %v2688 = vpop.f32.mrb[0].mxu0
        %2689 = vmatprep.mubr.bf16.mxu0 0
        %2690 = vmatmul.mubr.bf16.gmra.mrb[0].mxu0 %v2604
        %v2691 = vpop.f32.mrb[0].mxu0
        %v2692 = vadd.f32 0.0, %v2691
        %v2693 = vpop.f32.mrb[0].mxu0
        %v2694 = vpop.f32.mrb[0].mxu0
        %v2695 = vadd.f32 0.0, %v2694
        %v2696 = vpop.f32.mrb[0].mxu0
        %2697 = vmatprep.mubr.bf16.mxu0 0
        %2698 = vmatmul.mubr.bf16.gmra.mrb[0].mxu0 %v2605
        %v2699 = vpop.f32.mrb[0].mxu0
        %v2700 = vadd.f32 0.0, %v2699
        %v2701 = vpop.f32.mrb[0].mxu0
        %v2702 = vpop.f32.mrb[0].mxu0
        %v2703 = vadd.f32 0.0, %v2702
        %v2704 = vpop.f32.mrb[0].mxu0
        %2705 = vmatprep.mubr.bf16.mxu0 0
        %2706 = vmatmul.mubr.bf16.gmra.mrb[0].mxu0 %v2606
        %v2707 = vpop.f32.mrb[0].mxu0
        %v2708 = vadd.f32 0.0, %v2707
        %v2709 = vpop.f32.mrb[0].mxu0
        %v2710 = vpop.f32.mrb[0].mxu0
        %v2711 = vadd.f32 0.0, %v2710
        %v2712 = vpop.f32.mrb[0].mxu0
        %2713 = vmatprep.mubr.bf16.mxu0 0
        %2714 = vmatmul.mubr.bf16.gmra.mrb[0].mxu0 %v2607
        %v2715 = vpop.f32.mrb[0].mxu0
        %v2716 = vadd.f32 0.0, %v2715
        %v2717 = vpop.f32.mrb[0].mxu0
        %v2718 = vpop.f32.mrb[0].mxu0
        %v2719 = vadd.f32 0.0, %v2718
        %v2720 = vpop.f32.mrb[0].mxu0
        %2721 = vmatprep.mubr.bf16.mxu0 0
        %2722 = vmatmul.mubr.bf16.gmra.mrb[0].mxu0 %v2608
        %v2723 = vpop.f32.mrb[0].mxu0
        %v2724 = vadd.f32 0.0, %v2723
        %v2725 = vpop.f32.mrb[0].mxu0
        %v2726 = vpop.f32.mrb[0].mxu0
        %v2727 = vadd.f32 0.0, %v2726
        %v2728 = vpop.f32.mrb[0].mxu0
        %2729 = vdwg.mxu0
        %v2730 = vrcp.pop %v2570
        %v2731 = vrcp.pop %v2572
        %v2732 = vrcp.pop %v2574
        %v2733 = vrcp.pop %v2576
        %v2734 = vrcp.pop %v2578
        %v2735 = vrcp.pop %v2580
        %v2736 = vrcp.pop %v2582
        %v2737 = vrcp.pop %v2584
        %v2738 = vrcp.pop %v2586
        %v2739 = vrcp.pop %v2588
        %v2740 = vrcp.pop %v2590
        %v2741 = vrcp.pop %v2592
        %v2742 = vrcp.pop %v2594
        %v2743 = vrcp.pop %v2596
        %v2744 = vrcp.pop %v2598
        %v2745 = vrcp.pop %v2600
        %v2746 = vmul.f32 %v2668, %v2730
        %v2747 = vmul.f32 %v2671, %v2731
        %v2748 = vmul.f32 %v2676, %v2732
        %v2749 = vmul.f32 %v2679, %v2733
        %v2750 = vmul.f32 %v2684, %v2734
        %v2751 = vmul.f32 %v2687, %v2735
        %v2752 = vmul.f32 %v2692, %v2736
        %v2753 = vmul.f32 %v2695, %v2737
        %v2754 = vmul.f32 %v2700, %v2738
        %v2755 = vmul.f32 %v2703, %v2739
        %v2756 = vmul.f32 %v2708, %v2740
        %v2757 = vmul.f32 %v2711, %v2741
        %v2758 = vmul.f32 %v2716, %v2742
        %v2759 = vmul.f32 %v2719, %v2743
        %v2760 = vmul.f32 %v2724, %v2744
        %v2761 = vmul.f32 %v2727, %v2745
        %v2762 = vpack.c.bf16 %v2747, %v2746
        %v2763 = vpack.c.bf16 %v2749, %v2748
        %v2764 = vpack.c.bf16 %v2751, %v2750
        %v2765 = vpack.c.bf16 %v2753, %v2752
        %v2766 = vpack.c.bf16 %v2755, %v2754
        %v2767 = vpack.c.bf16 %v2757, %v2756
        %v2768 = vpack.c.bf16 %v2759, %v2758
        %v2769 = vpack.c.bf16 %v2761, %v2760
        %2778 = vrot.lane.b32.xlu0 %v1846, 32
        %v2779 = vpop.permute.xlu0 %2778
        %2780 = vrot.lane.b32.xlu0 %v1847, 32
        %v2781 = vpop.permute.xlu0 %2780
        %2782 = vrot.lane.b32.xlu0 %v1848, 32
        %v2783 = vpop.permute.xlu0 %2782
        %2784 = vrot.lane.b32.xlu0 %v1849, 32
        %v2785 = vpop.permute.xlu0 %2784
        %2786 = vrot.lane.b32.xlu0 %v1850, 32
        %v2787 = vpop.permute.xlu0 %2786
        %2788 = vrot.lane.b32.xlu0 %v1851, 32
        %v2789 = vpop.permute.xlu0 %2788
        %2790 = vrot.lane.b32.xlu0 %v1852, 32
        %v2791 = vpop.permute.xlu0 %2790
        %2792 = vrot.lane.b32.xlu0 %v1853, 32
        %v2793 = vpop.permute.xlu0 %2792
        %2802 = vrot.lane.b32.xlu0 %v2304, 64
        %v2803 = vpop.permute.xlu0 %2802
        %2804 = vrot.lane.b32.xlu0 %v2305, 64
        %v2805 = vpop.permute.xlu0 %2804
        %2806 = vrot.lane.b32.xlu0 %v2306, 64
        %v2807 = vpop.permute.xlu0 %2806
        %2808 = vrot.lane.b32.xlu0 %v2307, 64
        %v2809 = vpop.permute.xlu0 %2808
        %2810 = vrot.lane.b32.xlu0 %v2308, 64
        %v2811 = vpop.permute.xlu0 %2810
        %2812 = vrot.lane.b32.xlu0 %v2309, 64
        %v2813 = vpop.permute.xlu0 %2812
        %2814 = vrot.lane.b32.xlu0 %v2310, 64
        %v2815 = vpop.permute.xlu0 %2814
        %2816 = vrot.lane.b32.xlu0 %v2311, 64
        %v2817 = vpop.permute.xlu0 %2816
        %2826 = vrot.lane.b32.xlu0 %v2762, 96
        %v2827 = vpop.permute.xlu0 %2826
        %2828 = vrot.lane.b32.xlu0 %v2763, 96
        %v2829 = vpop.permute.xlu0 %2828
        %2830 = vrot.lane.b32.xlu0 %v2764, 96
        %v2831 = vpop.permute.xlu0 %2830
        %2832 = vrot.lane.b32.xlu0 %v2765, 96
        %v2833 = vpop.permute.xlu0 %2832
        %2834 = vrot.lane.b32.xlu0 %v2766, 96
        %v2835 = vpop.permute.xlu0 %2834
        %2836 = vrot.lane.b32.xlu0 %v2767, 96
        %v2837 = vpop.permute.xlu0 %2836
        %2838 = vrot.lane.b32.xlu0 %v2768, 96
        %v2839 = vpop.permute.xlu0 %2838
        %2840 = vrot.lane.b32.xlu0 %v2769, 96
        %v2841 = vpop.permute.xlu0 %2840
        %v2844 = vsel %vm969, %v1364, %v2779
        %v2847 = vsel %vm969, %v1365, %v2781
        %v2850 = vsel %vm969, %v1366, %v2783
        %v2853 = vsel %vm969, %v1367, %v2785
        %v2856 = vsel %vm969, %v1368, %v2787
        %v2859 = vsel %vm969, %v1369, %v2789
        %v2862 = vsel %vm969, %v1370, %v2791
        %v2865 = vsel %vm969, %v1371, %v2793
        %vm2866 = vcmask 523264
        %v2868 = vsel %vm2866, %v2844, %v2803
        %v2870 = vsel %vm2866, %v2847, %v2805
        %v2872 = vsel %vm2866, %v2850, %v2807
        %v2874 = vsel %vm2866, %v2853, %v2809
        %v2876 = vsel %vm2866, %v2856, %v2811
        %v2878 = vsel %vm2866, %v2859, %v2813
        %v2880 = vsel %vm2866, %v2862, %v2815
        %v2882 = vsel %vm2866, %v2865, %v2817
        %vm2883 = vcmask 785408
        %v2885 = vsel %vm2883, %v2868, %v2827
        %v2888 = vsel %vm2883, %v2870, %v2829
        %v2891 = vsel %vm2883, %v2872, %v2831
        %v2894 = vsel %vm2883, %v2874, %v2833
        %v2897 = vsel %vm2883, %v2876, %v2835
        %v2900 = vsel %vm2883, %v2878, %v2837
        %v2903 = vsel %vm2883, %v2880, %v2839
        %v2906 = vsel %vm2883, %v2882, %v2841
        %v2908 = vld [vmem:[#allocation7] sm:$0xf]
        %v2909 = vld [vmem:[#allocation7 + $0x4] sm:$0xf]
        %v2910 = vld [vmem:[#allocation7 + $0x8] sm:$0xf]
        %v2911 = vld [vmem:[#allocation7 + $0xc] sm:$0xf]
        %v2912 = vld [vmem:[#allocation7 + $0x10] sm:$0xf]
        %v2913 = vld [vmem:[#allocation7 + $0x14] sm:$0xf]
        %v2914 = vld [vmem:[#allocation7 + $0x18] sm:$0xf]
        %v2915 = vld [vmem:[#allocation7 + $0x1c] sm:$0xf]
        %v2916 = vld [vmem:[#allocation7 + $0x20] sm:$0xf]
        %v2917 = vld [vmem:[#allocation7 + $0x24] sm:$0xf]
        %v2918 = vld [vmem:[#allocation7 + $0x28] sm:$0xf]
        %v2919 = vld [vmem:[#allocation7 + $0x2c] sm:$0xf]
        %v2920 = vld [vmem:[#allocation7 + $0x30] sm:$0xf]
        %v2921 = vld [vmem:[#allocation7 + $0x34] sm:$0xf]
        %v2922 = vld [vmem:[#allocation7 + $0x38] sm:$0xf]
        %v2923 = vld [vmem:[#allocation7 + $0x3c] sm:$0xf]
        %v2924 = vld [vmem:[%s4] sm:$0x1]
        %v2926 = vlaneseq
        %v2927 = vshrl.u32 %v2926, 7
        %v2928 = vsub.s32 0, %v2927
        %v2929 = vrot.slane %v2924, %v2928
        %v2947 = vunpack.c.l.b16 %v2908
        %v2948 = vunpack.c.l.b16 %v2909
        %v2949 = vunpack.c.l.b16 %v2910
        %v2950 = vunpack.c.l.b16 %v2911
        %v2951 = vunpack.c.l.b16 %v2912
        %v2952 = vunpack.c.l.b16 %v2913
        %v2953 = vunpack.c.l.b16 %v2914
        %v2954 = vunpack.c.l.b16 %v2915
        %v2955 = vunpack.c.l.b16 %v2916
        %v2956 = vunpack.c.l.b16 %v2917
        %v2957 = vunpack.c.l.b16 %v2918
        %v2958 = vunpack.c.l.b16 %v2919
        %v2959 = vunpack.c.l.b16 %v2920
        %v2960 = vunpack.c.l.b16 %v2921
        %v2961 = vunpack.c.l.b16 %v2922
        %v2962 = vunpack.c.l.b16 %v2923
        %v2963 = vpack.c.b16 %v2948, %v2947
        %v2964 = vpack.c.b16 %v2950, %v2949
        %v2965 = vpack.c.b16 %v2952, %v2951
        %v2966 = vpack.c.b16 %v2954, %v2953
        %v2967 = vpack.c.b16 %v2956, %v2955
        %v2968 = vpack.c.b16 %v2958, %v2957
        %v2969 = vpack.c.b16 %v2960, %v2959
        %v2970 = vpack.c.b16 %v2962, %v2961
        %2979 = vmatprep.subr.bf16.mxu0 0
        %2980 = vmatpush1.bf16.msra.mxu0 %v2963
        %2981 = vmatprep.subr.bf16.mxu0 0
        %2982 = vmatpush1.bf16.msra.mxu0 %v2964
        %2983 = vmatprep.subr.bf16.mxu0 0
        %2984 = vmatpush1.bf16.msra.mxu0 %v2965
        %2985 = vmatprep.subr.bf16.mxu0 0
        %2986 = vmatpush1.bf16.msra.mxu0 %v2966
        %2987 = vmatprep.subr.bf16.mxu0 0
        %2988 = vmatpush1.bf16.msra.mxu0 %v2967
        %2989 = vmatprep.subr.bf16.mxu0 0
        %2990 = vmatpush1.bf16.msra.mxu0 %v2968
        %2991 = vmatprep.subr.bf16.mxu0 0
        %2992 = vmatpush1.bf16.msra.mxu0 %v2969
        %2993 = vmatprep.subr.bf16.mxu0 0
        %2994 = vmatpush1.bf16.msra.mxu0 %v2970
        %2995 = vmatprep.subr.bf16.mxu0 0
        %2996 = vmatpush1.bf16.msra.mxu0 0
        %2997 = vmatprep.subr.bf16.mxu0 0
        %2998 = vmatpush1.bf16.msra.mxu0 0
        %2999 = vmatprep.subr.bf16.mxu0 0
        %3000 = vmatpush1.bf16.msra.mxu0 0
        %3001 = vmatprep.subr.bf16.mxu0 0
        %3002 = vmatpush1.bf16.msra.mxu0 0
        %3003 = vmatprep.subr.bf16.mxu0 0
        %3004 = vmatpush1.bf16.msra.mxu0 0
        %3005 = vmatprep.subr.bf16.mxu0 0
        %3006 = vmatpush1.bf16.msra.mxu0 0
        %3007 = vmatprep.subr.bf16.mxu0 0
        %3008 = vmatpush1.bf16.msra.mxu0 0
        %3009 = vmatprep.subr.bf16.mxu0 0
        %3010 = vmatpush1.bf16.msra.mxu0 0
        %3011 = vmatprep.mubr.bf16.mxu0 0
        %3012 = vmatmul.mubr.bf16.gmra.mrb[0].mxu0 %v2885
        %v3013 = vpop.f32.mrb[0].mxu0
        %v3014 = vadd.f32 %v2929, %v3013
        %v3015 = vpop.f32.mrb[0].mxu0
        %v3016 = vpop.f32.mrb[0].mxu0
        %v3017 = vadd.f32 %v2929, %v3016
        %v3018 = vpop.f32.mrb[0].mxu0
        %3019 = vmatprep.mubr.bf16.mxu0 0
        %3020 = vmatmul.mubr.bf16.gmra.mrb[0].mxu0 %v2888
        %v3021 = vpop.f32.mrb[0].mxu0
        %v3022 = vadd.f32 %v2929, %v3021
        %v3023 = vpop.f32.mrb[0].mxu0
        %v3024 = vpop.f32.mrb[0].mxu0
        %v3025 = vadd.f32 %v2929, %v3024
        %v3026 = vpop.f32.mrb[0].mxu0
        %3027 = vmatprep.mubr.bf16.mxu0 0
        %3028 = vmatmul.mubr.bf16.gmra.mrb[0].mxu0 %v2891
        %v3029 = vpop.f32.mrb[0].mxu0
        %v3030 = vadd.f32 %v2929, %v3029
        %v3031 = vpop.f32.mrb[0].mxu0
        %v3032 = vpop.f32.mrb[0].mxu0
        %v3033 = vadd.f32 %v2929, %v3032
        %v3034 = vpop.f32.mrb[0].mxu0
        %3035 = vmatprep.mubr.bf16.mxu0 0
        %3036 = vmatmul.mubr.bf16.gmra.mrb[0].mxu0 %v2894
        %v3037 = vpop.f32.mrb[0].mxu0
        %v3038 = vadd.f32 %v2929, %v3037
        %v3039 = vpop.f32.mrb[0].mxu0
        %v3040 = vpop.f32.mrb[0].mxu0
        %v3041 = vadd.f32 %v2929, %v3040
        %v3042 = vpop.f32.mrb[0].mxu0
        %3043 = vmatprep.mubr.bf16.mxu0 0
        %3044 = vmatmul.mubr.bf16.gmra.mrb[0].mxu0 %v2897
        %v3045 = vpop.f32.mrb[0].mxu0
        %v3046 = vadd.f32 %v2929, %v3045
        %v3047 = vpop.f32.mrb[0].mxu0
        %v3048 = vpop.f32.mrb[0].mxu0
        %v3049 = vadd.f32 %v2929, %v3048
        %v3050 = vpop.f32.mrb[0].mxu0
        %3051 = vmatprep.mubr.bf16.mxu0 0
        %3052 = vmatmul.mubr.bf16.gmra.mrb[0].mxu0 %v2900
        %v3053 = vpop.f32.mrb[0].mxu0
        %v3054 = vadd.f32 %v2929, %v3053
        %v3055 = vpop.f32.mrb[0].mxu0
        %v3056 = vpop.f32.mrb[0].mxu0
        %v3057 = vadd.f32 %v2929, %v3056
        %v3058 = vpop.f32.mrb[0].mxu0
        %3059 = vmatprep.mubr.bf16.mxu0 0
        %3060 = vmatmul.mubr.bf16.gmra.mrb[0].mxu0 %v2903
        %v3061 = vpop.f32.mrb[0].mxu0
        %v3062 = vadd.f32 %v2929, %v3061
        %v3063 = vpop.f32.mrb[0].mxu0
        %v3064 = vpop.f32.mrb[0].mxu0
        %v3065 = vadd.f32 %v2929, %v3064
        %v3066 = vpop.f32.mrb[0].mxu0
        %3067 = vmatprep.mubr.bf16.mxu0 0
        %3068 = vmatmul.mubr.bf16.gmra.mrb[0].mxu0 %v2906
        %v3069 = vpop.f32.mrb[0].mxu0
        %v3070 = vadd.f32 %v2929, %v3069
        %v3071 = vpop.f32.mrb[0].mxu0
        %v3072 = vpop.f32.mrb[0].mxu0
        %v3073 = vadd.f32 %v2929, %v3072
        %v3074 = vpop.f32.mrb[0].mxu0
        %3075 = vdwg.mxu0
        %v3076 = vadd.f32 %v518, %v3014
        %v3077 = vadd.f32 %v519, %v3017
        %v3078 = vadd.f32 %v520, %v3022
        %v3079 = vadd.f32 %v521, %v3025
        %v3080 = vadd.f32 %v522, %v3030
        %v3081 = vadd.f32 %v523, %v3033
        %v3082 = vadd.f32 %v524, %v3038
        %v3083 = vadd.f32 %v525, %v3041
        %v3084 = vadd.f32 %v526, %v3046
        %v3085 = vadd.f32 %v527, %v3049
        %v3086 = vadd.f32 %v528, %v3054
        %v3087 = vadd.f32 %v529, %v3057
        %v3088 = vadd.f32 %v530, %v3062
        %v3089 = vadd.f32 %v531, %v3065
        %v3090 = vadd.f32 %v532, %v3070
        %v3091 = vadd.f32 %v533, %v3073
        %3092 = vadd.xlane.f32.xlu0 %v3076
        %v3093 = vpop.xlane.xlu0 %3092
        %3094 = vadd.xlane.f32.xlu0 %v3077
        %v3095 = vpop.xlane.xlu0 %3094
        %3096 = vadd.xlane.f32.xlu0 %v3078
        %v3097 = vpop.xlane.xlu0 %3096
        %3098 = vadd.xlane.f32.xlu0 %v3079
        %v3099 = vpop.xlane.xlu0 %3098
        %3100 = vadd.xlane.f32.xlu0 %v3080
        %v3101 = vpop.xlane.xlu0 %3100
        %3102 = vadd.xlane.f32.xlu0 %v3081
        %v3103 = vpop.xlane.xlu0 %3102
        %3104 = vadd.xlane.f32.xlu0 %v3082
        %v3105 = vpop.xlane.xlu0 %3104
        %3106 = vadd.xlane.f32.xlu0 %v3083
        %v3107 = vpop.xlane.xlu0 %3106
        %3108 = vadd.xlane.f32.xlu0 %v3084
        %v3109 = vpop.xlane.xlu0 %3108
        %3110 = vadd.xlane.f32.xlu0 %v3085
        %v3111 = vpop.xlane.xlu0 %3110
        %3112 = vadd.xlane.f32.xlu0 %v3086
        %v3113 = vpop.xlane.xlu0 %3112
        %3114 = vadd.xlane.f32.xlu0 %v3087
        %v3115 = vpop.xlane.xlu0 %3114
        %3116 = vadd.xlane.f32.xlu0 %v3088
        %v3117 = vpop.xlane.xlu0 %3116
        %3118 = vadd.xlane.f32.xlu0 %v3089
        %v3119 = vpop.xlane.xlu0 %3118
        %3120 = vadd.xlane.f32.xlu0 %v3090
        %v3121 = vpop.xlane.xlu0 %3120
        %3122 = vadd.xlane.f32.xlu0 %v3091
        %v3123 = vpop.xlane.xlu0 %3122
        %v3124 = vrcp.pop 128.0
        %v3125 = vmul.f32 %v3093, %v3124
        %v3126 = vmul.f32 %v3095, %v3124
        %v3127 = vmul.f32 %v3097, %v3124
        %v3128 = vmul.f32 %v3099, %v3124
        %v3129 = vmul.f32 %v3101, %v3124
        %v3130 = vmul.f32 %v3103, %v3124
        %v3131 = vmul.f32 %v3105, %v3124
        %v3132 = vmul.f32 %v3107, %v3124
        %v3133 = vmul.f32 %v3109, %v3124
        %v3134 = vmul.f32 %v3111, %v3124
        %v3135 = vmul.f32 %v3113, %v3124
        %v3136 = vmul.f32 %v3115, %v3124
        %v3137 = vmul.f32 %v3117, %v3124
        %v3138 = vmul.f32 %v3119, %v3124
        %v3139 = vmul.f32 %v3121, %v3124
        %v3140 = vmul.f32 %v3123, %v3124
        %v3141 = vsub.f32 %v3076, %v3125
        %v3142 = vsub.f32 %v3077, %v3126
        %v3143 = vsub.f32 %v3078, %v3127
        %v3144 = vsub.f32 %v3079, %v3128
        %v3145 = vsub.f32 %v3080, %v3129
        %v3146 = vsub.f32 %v3081, %v3130
        %v3147 = vsub.f32 %v3082, %v3131
        %v3148 = vsub.f32 %v3083, %v3132
        %v3149 = vsub.f32 %v3084, %v3133
        %v3150 = vsub.f32 %v3085, %v3134
        %v3151 = vsub.f32 %v3086, %v3135
        %v3152 = vsub.f32 %v3087, %v3136
        %v3153 = vsub.f32 %v3088, %v3137
        %v3154 = vsub.f32 %v3089, %v3138
        %v3155 = vsub.f32 %v3090, %v3139
        %v3156 = vsub.f32 %v3091, %v3140
        %v3157 = vmul.f32 %v3141, %v3141
        %v3158 = vmul.f32 %v3142, %v3142
        %v3159 = vmul.f32 %v3143, %v3143
        %v3160 = vmul.f32 %v3144, %v3144
        %v3161 = vmul.f32 %v3145, %v3145
        %v3162 = vmul.f32 %v3146, %v3146
        %v3163 = vmul.f32 %v3147, %v3147
        %v3164 = vmul.f32 %v3148, %v3148
        %v3165 = vmul.f32 %v3149, %v3149
        %v3166 = vmul.f32 %v3150, %v3150
        %v3167 = vmul.f32 %v3151, %v3151
        %v3168 = vmul.f32 %v3152, %v3152
        %v3169 = vmul.f32 %v3153, %v3153
        %v3170 = vmul.f32 %v3154, %v3154
        %v3171 = vmul.f32 %v3155, %v3155
        %v3172 = vmul.f32 %v3156, %v3156
        %3173 = vadd.xlane.f32.xlu0 %v3157
        %v3174 = vpop.xlane.xlu0 %3173
        %3175 = vadd.xlane.f32.xlu0 %v3158
        %v3176 = vpop.xlane.xlu0 %3175
        %3177 = vadd.xlane.f32.xlu0 %v3159
        %v3178 = vpop.xlane.xlu0 %3177
        %3179 = vadd.xlane.f32.xlu0 %v3160
        %v3180 = vpop.xlane.xlu0 %3179
        %3181 = vadd.xlane.f32.xlu0 %v3161
        %v3182 = vpop.xlane.xlu0 %3181
        %3183 = vadd.xlane.f32.xlu0 %v3162
        %v3184 = vpop.xlane.xlu0 %3183
        %3185 = vadd.xlane.f32.xlu0 %v3163
        %v3186 = vpop.xlane.xlu0 %3185
        %3187 = vadd.xlane.f32.xlu0 %v3164
        %v3188 = vpop.xlane.xlu0 %3187
        %3189 = vadd.xlane.f32.xlu0 %v3165
        %v3190 = vpop.xlane.xlu0 %3189
        %3191 = vadd.xlane.f32.xlu0 %v3166
        %v3192 = vpop.xlane.xlu0 %3191
        %3193 = vadd.xlane.f32.xlu0 %v3167
        %v3194 = vpop.xlane.xlu0 %3193
        %3195 = vadd.xlane.f32.xlu0 %v3168
        %v3196 = vpop.xlane.xlu0 %3195
        %3197 = vadd.xlane.f32.xlu0 %v3169
        %v3198 = vpop.xlane.xlu0 %3197
        %3199 = vadd.xlane.f32.xlu0 %v3170
        %v3200 = vpop.xlane.xlu0 %3199
        %3201 = vadd.xlane.f32.xlu0 %v3171
        %v3202 = vpop.xlane.xlu0 %3201
        %3203 = vadd.xlane.f32.xlu0 %v3172
        %v3204 = vpop.xlane.xlu0 %3203
        %v3205 = vmul.f32 %v3174, %v3124
        %v3206 = vmul.f32 %v3176, %v3124
        %v3207 = vmul.f32 %v3178, %v3124
        %v3208 = vmul.f32 %v3180, %v3124
        %v3209 = vmul.f32 %v3182, %v3124
        %v3210 = vmul.f32 %v3184, %v3124
        %v3211 = vmul.f32 %v3186, %v3124
        %v3212 = vmul.f32 %v3188, %v3124
        %v3213 = vmul.f32 %v3190, %v3124
        %v3214 = vmul.f32 %v3192, %v3124
        %v3215 = vmul.f32 %v3194, %v3124
        %v3216 = vmul.f32 %v3196, %v3124
        %v3217 = vmul.f32 %v3198, %v3124
        %v3218 = vmul.f32 %v3200, %v3124
        %v3219 = vmul.f32 %v3202, %v3124
        %v3220 = vmul.f32 %v3204, %v3124
        %v3221 = vadd.f32 %v3205, 1e-05
        %v3222 = vadd.f32 %v3206, 1e-05
        %v3223 = vadd.f32 %v3207, 1e-05
        %v3224 = vadd.f32 %v3208, 1e-05
        %v3225 = vadd.f32 %v3209, 1e-05
        %v3226 = vadd.f32 %v3210, 1e-05
        %v3227 = vadd.f32 %v3211, 1e-05
        %v3228 = vadd.f32 %v3212, 1e-05
        %v3229 = vadd.f32 %v3213, 1e-05
        %v3230 = vadd.f32 %v3214, 1e-05
        %v3231 = vadd.f32 %v3215, 1e-05
        %v3232 = vadd.f32 %v3216, 1e-05
        %v3233 = vadd.f32 %v3217, 1e-05
        %v3234 = vadd.f32 %v3218, 1e-05
        %v3235 = vadd.f32 %v3219, 1e-05
        %v3236 = vadd.f32 %v3220, 1e-05
        %v3237 = vrsqrt.pop %v3221
        %v3238 = vrsqrt.pop %v3222
        %v3239 = vrsqrt.pop %v3223
        %v3240 = vrsqrt.pop %v3224
        %v3241 = vrsqrt.pop %v3225
        %v3242 = vrsqrt.pop %v3226
        %v3243 = vrsqrt.pop %v3227
        %v3244 = vrsqrt.pop %v3228
        %v3245 = vrsqrt.pop %v3229
        %v3246 = vrsqrt.pop %v3230
        %v3247 = vrsqrt.pop %v3231
        %v3248 = vrsqrt.pop %v3232
        %v3249 = vrsqrt.pop %v3233
        %v3250 = vrsqrt.pop %v3234
        %v3251 = vrsqrt.pop %v3235
        %v3252 = vrsqrt.pop %v3236
        %v3253 = vmul.f32 %v3141, %v3237
        %v3254 = vmul.f32 %v3142, %v3238
        %v3255 = vmul.f32 %v3143, %v3239
        %v3256 = vmul.f32 %v3144, %v3240
        %v3257 = vmul.f32 %v3145, %v3241
        %v3258 = vmul.f32 %v3146, %v3242
        %v3259 = vmul.f32 %v3147, %v3243
        %v3260 = vmul.f32 %v3148, %v3244
        %v3261 = vmul.f32 %v3149, %v3245
        %v3262 = vmul.f32 %v3150, %v3246
        %v3263 = vmul.f32 %v3151, %v3247
        %v3264 = vmul.f32 %v3152, %v3248
        %v3265 = vmul.f32 %v3153, %v3249
        %v3266 = vmul.f32 %v3154, %v3250
        %v3267 = vmul.f32 %v3155, %v3251
        %v3268 = vmul.f32 %v3156, %v3252
        %v3269 = vld [vmem:[%s5] sm:$0x1]
        %v3271 = vlaneseq
        %v3272 = vshrl.u32 %v3271, 7
        %v3273 = vsub.s32 0, %v3272
        %v3274 = vrot.slane %v3269, %v3273
        %v3276 = vmul.f32 %v3253, %v3274
        %v3277 = vmul.f32 %v3254, %v3274
        %v3278 = vmul.f32 %v3255, %v3274
        %v3279 = vmul.f32 %v3256, %v3274
        %v3280 = vmul.f32 %v3257, %v3274
        %v3281 = vmul.f32 %v3258, %v3274
        %v3282 = vmul.f32 %v3259, %v3274
        %v3283 = vmul.f32 %v3260, %v3274
        %v3284 = vmul.f32 %v3261, %v3274
        %v3285 = vmul.f32 %v3262, %v3274
        %v3286 = vmul.f32 %v3263, %v3274
        %v3287 = vmul.f32 %v3264, %v3274
        %v3288 = vmul.f32 %v3265, %v3274
        %v3289 = vmul.f32 %v3266, %v3274
        %v3290 = vmul.f32 %v3267, %v3274
        %v3291 = vmul.f32 %v3268, %v3274
        %v3292 = vld [vmem:[%s6] sm:$0x1]
        %v3294 = vlaneseq
        %v3295 = vshrl.u32 %v3294, 7
        %v3296 = vsub.s32 0, %v3295
        %v3297 = vrot.slane %v3292, %v3296
        %v3299 = vadd.f32 %v3276, %v3297
        %v3300 = vadd.f32 %v3277, %v3297
        %v3301 = vadd.f32 %v3278, %v3297
        %v3302 = vadd.f32 %v3279, %v3297
        %v3303 = vadd.f32 %v3280, %v3297
        %v3304 = vadd.f32 %v3281, %v3297
        %v3305 = vadd.f32 %v3282, %v3297
        %v3306 = vadd.f32 %v3283, %v3297
        %v3307 = vadd.f32 %v3284, %v3297
        %v3308 = vadd.f32 %v3285, %v3297
        %v3309 = vadd.f32 %v3286, %v3297
        %v3310 = vadd.f32 %v3287, %v3297
        %v3311 = vadd.f32 %v3288, %v3297
        %v3312 = vadd.f32 %v3289, %v3297
        %v3313 = vadd.f32 %v3290, %v3297
        %v3314 = vadd.f32 %v3291, %v3297
        %v3315 = vpack.c.bf16 %v3300, %v3299
        %v3316 = vpack.c.bf16 %v3302, %v3301
        %v3317 = vpack.c.bf16 %v3304, %v3303
        %v3318 = vpack.c.bf16 %v3306, %v3305
        %v3319 = vpack.c.bf16 %v3308, %v3307
        %v3320 = vpack.c.bf16 %v3310, %v3309
        %v3321 = vpack.c.bf16 %v3312, %v3311
        %v3322 = vpack.c.bf16 %v3314, %v3313
        %v3323 = vld [vmem:[#allocation8] sm:$0xff]
        %v3324 = vld [vmem:[#allocation8 + $0x8] sm:$0xff]
        %v3325 = vld [vmem:[#allocation8 + $0x10] sm:$0xff]
        %v3326 = vld [vmem:[#allocation8 + $0x18] sm:$0xff]
        %v3327 = vld [vmem:[#allocation8 + $0x20] sm:$0xff]
        %v3328 = vld [vmem:[#allocation8 + $0x28] sm:$0xff]
        %v3329 = vld [vmem:[#allocation8 + $0x30] sm:$0xff]
        %v3330 = vld [vmem:[#allocation8 + $0x38] sm:$0xff]
        %v3331 = vld [vmem:[#allocation8 + $0x40] sm:$0xff]
        %v3332 = vld [vmem:[#allocation8 + $0x48] sm:$0xff]
        %v3333 = vld [vmem:[#allocation8 + $0x50] sm:$0xff]
        %v3334 = vld [vmem:[#allocation8 + $0x58] sm:$0xff]
        %v3335 = vld [vmem:[#allocation8 + $0x60] sm:$0xff]
        %v3336 = vld [vmem:[#allocation8 + $0x68] sm:$0xff]
        %v3337 = vld [vmem:[#allocation8 + $0x70] sm:$0xff]
        %v3338 = vld [vmem:[#allocation8 + $0x78] sm:$0xff]
        %v3339 = vld [vmem:[%s8] sm:$0x3]
        %v3341 = vlaneseq
        %v3342 = vshrl.u32 %v3341, 7
        %v3343 = vsub.s32 0, %v3342
        %v3344 = vrot.slane %v3339, %v3343
        %v3345 = vlaneseq
        %v3346 = vshrl.u32 %v3345, 7
        %v3347 = vsub.s32 1, %v3346
        %v3348 = vrot.slane %v3339, %v3347
        %v3367 = vunpack.c.l.b16 %v3323
        %v3368 = vunpack.c.h.b16 %v3323
        %v3369 = vunpack.c.l.b16 %v3324
        %v3370 = vunpack.c.h.b16 %v3324
        %v3371 = vunpack.c.l.b16 %v3325
        %v3372 = vunpack.c.h.b16 %v3325
        %v3373 = vunpack.c.l.b16 %v3326
        %v3374 = vunpack.c.h.b16 %v3326
        %v3375 = vunpack.c.l.b16 %v3327
        %v3376 = vunpack.c.h.b16 %v3327
        %v3377 = vunpack.c.l.b16 %v3328
        %v3378 = vunpack.c.h.b16 %v3328
        %v3379 = vunpack.c.l.b16 %v3329
        %v3380 = vunpack.c.h.b16 %v3329
        %v3381 = vunpack.c.l.b16 %v3330
        %v3382 = vunpack.c.h.b16 %v3330
        %v3383 = vunpack.c.l.b16 %v3331
        %v3384 = vunpack.c.h.b16 %v3331
        %v3385 = vunpack.c.l.b16 %v3332
        %v3386 = vunpack.c.h.b16 %v3332
        %v3387 = vunpack.c.l.b16 %v3333
        %v3388 = vunpack.c.h.b16 %v3333
        %v3389 = vunpack.c.l.b16 %v3334
        %v3390 = vunpack.c.h.b16 %v3334
        %v3391 = vunpack.c.l.b16 %v3335
        %v3392 = vunpack.c.h.b16 %v3335
        %v3393 = vunpack.c.l.b16 %v3336
        %v3394 = vunpack.c.h.b16 %v3336
        %v3395 = vunpack.c.l.b16 %v3337
        %v3396 = vunpack.c.h.b16 %v3337
        %v3397 = vunpack.c.l.b16 %v3338
        %v3398 = vunpack.c.h.b16 %v3338
        %v3399 = vpack.c.b16 %v3369, %v3367
        %v3400 = vpack.c.b16 %v3370, %v3368
        %v3401 = vpack.c.b16 %v3373, %v3371
        %v3402 = vpack.c.b16 %v3374, %v3372
        %v3403 = vpack.c.b16 %v3377, %v3375
        %v3404 = vpack.c.b16 %v3378, %v3376
        %v3405 = vpack.c.b16 %v3381, %v3379
        %v3406 = vpack.c.b16 %v3382, %v3380
        %v3407 = vpack.c.b16 %v3385, %v3383
        %v3408 = vpack.c.b16 %v3386, %v3384
        %v3409 = vpack.c.b16 %v3389, %v3387
        %v3410 = vpack.c.b16 %v3390, %v3388
        %v3411 = vpack.c.b16 %v3393, %v3391
        %v3412 = vpack.c.b16 %v3394, %v3392
        %v3413 = vpack.c.b16 %v3397, %v3395
        %v3414 = vpack.c.b16 %v3398, %v3396
        %3431 = vmatprep.subr.bf16.mxu0 %v3400
        %3432 = vmatpush1.bf16.msra.mxu0 %v3399
        %3433 = vmatprep.subr.bf16.mxu0 %v3402
        %3434 = vmatpush1.bf16.msra.mxu0 %v3401
        %3435 = vmatprep.subr.bf16.mxu0 %v3404
        %3436 = vmatpush1.bf16.msra.mxu0 %v3403
        %3437 = vmatprep.subr.bf16.mxu0 %v3406
        %3438 = vmatpush1.bf16.msra.mxu0 %v3405
        %3439 = vmatprep.subr.bf16.mxu0 %v3408
        %3440 = vmatpush1.bf16.msra.mxu0 %v3407
        %3441 = vmatprep.subr.bf16.mxu0 %v3410
        %3442 = vmatpush1.bf16.msra.mxu0 %v3409
        %3443 = vmatprep.subr.bf16.mxu0 %v3412
        %3444 = vmatpush1.bf16.msra.mxu0 %v3411
        %3445 = vmatprep.subr.bf16.mxu0 %v3414
        %3446 = vmatpush1.bf16.msra.mxu0 %v3413
        %3447 = vmatprep.subr.bf16.mxu0 0
        %3448 = vmatpush1.bf16.msra.mxu0 0
        %3449 = vmatprep.subr.bf16.mxu0 0
        %3450 = vmatpush1.bf16.msra.mxu0 0
        %3451 = vmatprep.subr.bf16.mxu0 0
        %3452 = vmatpush1.bf16.msra.mxu0 0
        %3453 = vmatprep.subr.bf16.mxu0 0
        %3454 = vmatpush1.bf16.msra.mxu0 0
        %3455 = vmatprep.subr.bf16.mxu0 0
        %3456 = vmatpush1.bf16.msra.mxu0 0
        %3457 = vmatprep.subr.bf16.mxu0 0
        %3458 = vmatpush1.bf16.msra.mxu0 0
        %3459 = vmatprep.subr.bf16.mxu0 0
        %3460 = vmatpush1.bf16.msra.mxu0 0
        %3461 = vmatprep.subr.bf16.mxu0 0
        %3462 = vmatpush1.bf16.msra.mxu0 0
        %3463 = vmatprep.mubr.bf16.mxu0 0
        %3464 = vmatmul.mubr.bf16.gmra.mrb[0].mxu0 %v3315
        %v3465 = vpop.f32.mrb[0].mxu0
        %v3466 = vadd.f32 %v3344, %v3465
        %v3467 = vpop.f32.mrb[0].mxu0
        %v3468 = vadd.f32 %v3348, %v3467
        %v3469 = vpop.f32.mrb[0].mxu0
        %v3470 = vadd.f32 %v3344, %v3469
        %v3471 = vpop.f32.mrb[0].mxu0
        %v3472 = vadd.f32 %v3348, %v3471
        %3473 = vmatprep.mubr.bf16.mxu0 0
        %3474 = vmatmul.mubr.bf16.gmra.mrb[0].mxu0 %v3316
        %v3475 = vpop.f32.mrb[0].mxu0
        %v3476 = vadd.f32 %v3344, %v3475
        %v3477 = vpop.f32.mrb[0].mxu0
        %v3478 = vadd.f32 %v3348, %v3477
        %v3479 = vpop.f32.mrb[0].mxu0
        %v3480 = vadd.f32 %v3344, %v3479
        %v3481 = vpop.f32.mrb[0].mxu0
        %v3482 = vadd.f32 %v3348, %v3481
        %3483 = vmatprep.mubr.bf16.mxu0 0
        %3484 = vmatmul.mubr.bf16.gmra.mrb[0].mxu0 %v3317
        %v3485 = vpop.f32.mrb[0].mxu0
        %v3486 = vadd.f32 %v3344, %v3485
        %v3487 = vpop.f32.mrb[0].mxu0
        %v3488 = vadd.f32 %v3348, %v3487
        %v3489 = vpop.f32.mrb[0].mxu0
        %v3490 = vadd.f32 %v3344, %v3489
        %v3491 = vpop.f32.mrb[0].mxu0
        %v3492 = vadd.f32 %v3348, %v3491
        %3493 = vmatprep.mubr.bf16.mxu0 0
        %3494 = vmatmul.mubr.bf16.gmra.mrb[0].mxu0 %v3318
        %v3495 = vpop.f32.mrb[0].mxu0
        %v3496 = vadd.f32 %v3344, %v3495
        %v3497 = vpop.f32.mrb[0].mxu0
        %v3498 = vadd.f32 %v3348, %v3497
        %v3499 = vpop.f32.mrb[0].mxu0
        %v3500 = vadd.f32 %v3344, %v3499
        %v3501 = vpop.f32.mrb[0].mxu0
        %v3502 = vadd.f32 %v3348, %v3501
        %3503 = vmatprep.mubr.bf16.mxu0 0
        %3504 = vmatmul.mubr.bf16.gmra.mrb[0].mxu0 %v3319
        %v3505 = vpop.f32.mrb[0].mxu0
        %v3506 = vadd.f32 %v3344, %v3505
        %v3507 = vpop.f32.mrb[0].mxu0
        %v3508 = vadd.f32 %v3348, %v3507
        %v3509 = vpop.f32.mrb[0].mxu0
        %v3510 = vadd.f32 %v3344, %v3509
        %v3511 = vpop.f32.mrb[0].mxu0
        %v3512 = vadd.f32 %v3348, %v3511
        %3513 = vmatprep.mubr.bf16.mxu0 0
        %3514 = vmatmul.mubr.bf16.gmra.mrb[0].mxu0 %v3320
        %v3515 = vpop.f32.mrb[0].mxu0
        %v3516 = vadd.f32 %v3344, %v3515
        %v3517 = vpop.f32.mrb[0].mxu0
        %v3518 = vadd.f32 %v3348, %v3517
        %v3519 = vpop.f32.mrb[0].mxu0
        %v3520 = vadd.f32 %v3344, %v3519
        %v3521 = vpop.f32.mrb[0].mxu0
        %v3522 = vadd.f32 %v3348, %v3521
        %3523 = vmatprep.mubr.bf16.mxu0 0
        %3524 = vmatmul.mubr.bf16.gmra.mrb[0].mxu0 %v3321
        %v3525 = vpop.f32.mrb[0].mxu0
        %v3526 = vadd.f32 %v3344, %v3525
        %v3527 = vpop.f32.mrb[0].mxu0
        %v3528 = vadd.f32 %v3348, %v3527
        %v3529 = vpop.f32.mrb[0].mxu0
        %v3530 = vadd.f32 %v3344, %v3529
        %v3531 = vpop.f32.mrb[0].mxu0
        %v3532 = vadd.f32 %v3348, %v3531
        %3533 = vmatprep.mubr.bf16.mxu0 0
        %3534 = vmatmul.mubr.bf16.gmra.mrb[0].mxu0 %v3322
        %v3535 = vpop.f32.mrb[0].mxu0
        %v3536 = vadd.f32 %v3344, %v3535
        %v3537 = vpop.f32.mrb[0].mxu0
        %v3538 = vadd.f32 %v3348, %v3537
        %v3539 = vpop.f32.mrb[0].mxu0
        %v3540 = vadd.f32 %v3344, %v3539
        %v3541 = vpop.f32.mrb[0].mxu0
        %v3542 = vadd.f32 %v3348, %v3541
        %3543 = vdwg.mxu0
        %v3544 = vmax.f32 %v3466, 0.0
        %v3545 = vmax.f32 %v3468, 0.0
        %v3546 = vmax.f32 %v3470, 0.0
        %v3547 = vmax.f32 %v3472, 0.0
        %v3548 = vmax.f32 %v3476, 0.0
        %v3549 = vmax.f32 %v3478, 0.0
        %v3550 = vmax.f32 %v3480, 0.0
        %v3551 = vmax.f32 %v3482, 0.0
        %v3552 = vmax.f32 %v3486, 0.0
        %v3553 = vmax.f32 %v3488, 0.0
        %v3554 = vmax.f32 %v3490, 0.0
        %v3555 = vmax.f32 %v3492, 0.0
        %v3556 = vmax.f32 %v3496, 0.0
        %v3557 = vmax.f32 %v3498, 0.0
        %v3558 = vmax.f32 %v3500, 0.0
        %v3559 = vmax.f32 %v3502, 0.0
        %v3560 = vmax.f32 %v3506, 0.0
        %v3561 = vmax.f32 %v3508, 0.0
        %v3562 = vmax.f32 %v3510, 0.0
        %v3563 = vmax.f32 %v3512, 0.0
        %v3564 = vmax.f32 %v3516, 0.0
        %v3565 = vmax.f32 %v3518, 0.0
        %v3566 = vmax.f32 %v3520, 0.0
        %v3567 = vmax.f32 %v3522, 0.0
        %v3568 = vmax.f32 %v3526, 0.0
        %v3569 = vmax.f32 %v3528, 0.0
        %v3570 = vmax.f32 %v3530, 0.0
        %v3571 = vmax.f32 %v3532, 0.0
        %v3572 = vmax.f32 %v3536, 0.0
        %v3573 = vmax.f32 %v3538, 0.0
        %v3574 = vmax.f32 %v3540, 0.0
        %v3575 = vmax.f32 %v3542, 0.0
        %v3576 = vpack.c.bf16 %v3546, %v3544
        %v3577 = vpack.c.bf16 %v3547, %v3545
        %v3578 = vpack.c.bf16 %v3550, %v3548
        %v3579 = vpack.c.bf16 %v3551, %v3549
        %v3580 = vpack.c.bf16 %v3554, %v3552
        %v3581 = vpack.c.bf16 %v3555, %v3553
        %v3582 = vpack.c.bf16 %v3558, %v3556
        %v3583 = vpack.c.bf16 %v3559, %v3557
        %v3584 = vpack.c.bf16 %v3562, %v3560
        %v3585 = vpack.c.bf16 %v3563, %v3561
        %v3586 = vpack.c.bf16 %v3566, %v3564
        %v3587 = vpack.c.bf16 %v3567, %v3565
        %v3588 = vpack.c.bf16 %v3570, %v3568
        %v3589 = vpack.c.bf16 %v3571, %v3569
        %v3590 = vpack.c.bf16 %v3574, %v3572
        %v3591 = vpack.c.bf16 %v3575, %v3573
        %v3592 = vld [vmem:[#allocation10] sm:$0xf]
        %v3593 = vld [vmem:[#allocation10 + $0x4] sm:$0xf]
        %v3594 = vld [vmem:[#allocation10 + $0x8] sm:$0xf]
        %v3595 = vld [vmem:[#allocation10 + $0xc] sm:$0xf]
        %v3596 = vld [vmem:[#allocation10 + $0x10] sm:$0xf]
        %v3597 = vld [vmem:[#allocation10 + $0x14] sm:$0xf]
        %v3598 = vld [vmem:[#allocation10 + $0x18] sm:$0xf]
        %v3599 = vld [vmem:[#allocation10 + $0x1c] sm:$0xf]
        %v3600 = vld [vmem:[#allocation10 + $0x20] sm:$0xf]
        %v3601 = vld [vmem:[#allocation10 + $0x24] sm:$0xf]
        %v3602 = vld [vmem:[#allocation10 + $0x28] sm:$0xf]
        %v3603 = vld [vmem:[#allocation10 + $0x2c] sm:$0xf]
        %v3604 = vld [vmem:[#allocation10 + $0x30] sm:$0xf]
        %v3605 = vld [vmem:[#allocation10 + $0x34] sm:$0xf]
        %v3606 = vld [vmem:[#allocation10 + $0x38] sm:$0xf]
        %v3607 = vld [vmem:[#allocation10 + $0x3c] sm:$0xf]
        %v3608 = vld [vmem:[#allocation10 + $0x40] sm:$0xf]
        %v3609 = vld [vmem:[#allocation10 + $0x44] sm:$0xf]
        %v3610 = vld [vmem:[#allocation10 + $0x48] sm:$0xf]
        %v3611 = vld [vmem:[#allocation10 + $0x4c] sm:$0xf]
        %v3612 = vld [vmem:[#allocation10 + $0x50] sm:$0xf]
        %v3613 = vld [vmem:[#allocation10 + $0x54] sm:$0xf]
        %v3614 = vld [vmem:[#allocation10 + $0x58] sm:$0xf]
        %v3615 = vld [vmem:[#allocation10 + $0x5c] sm:$0xf]
        %v3616 = vld [vmem:[#allocation10 + $0x60] sm:$0xf]
        %v3617 = vld [vmem:[#allocation10 + $0x64] sm:$0xf]
        %v3618 = vld [vmem:[#allocation10 + $0x68] sm:$0xf]
        %v3619 = vld [vmem:[#allocation10 + $0x6c] sm:$0xf]
        %v3620 = vld [vmem:[#allocation10 + $0x70] sm:$0xf]
        %v3621 = vld [vmem:[#allocation10 + $0x74] sm:$0xf]
        %v3622 = vld [vmem:[#allocation10 + $0x78] sm:$0xf]
        %v3623 = vld [vmem:[#allocation10 + $0x7c] sm:$0xf]
        %v3624 = vld [vmem:[%s10] sm:$0x1]
        %v3626 = vlaneseq
        %v3627 = vshrl.u32 %v3626, 7
        %v3628 = vsub.s32 0, %v3627
        %v3629 = vrot.slane %v3624, %v3628
        %v3663 = vunpack.c.l.b16 %v3592
        %v3664 = vunpack.c.l.b16 %v3593
        %v3665 = vunpack.c.l.b16 %v3594
        %v3666 = vunpack.c.l.b16 %v3595
        %v3667 = vunpack.c.l.b16 %v3596
        %v3668 = vunpack.c.l.b16 %v3597
        %v3669 = vunpack.c.l.b16 %v3598
        %v3670 = vunpack.c.l.b16 %v3599
        %v3671 = vunpack.c.l.b16 %v3600
        %v3672 = vunpack.c.l.b16 %v3601
        %v3673 = vunpack.c.l.b16 %v3602
        %v3674 = vunpack.c.l.b16 %v3603
        %v3675 = vunpack.c.l.b16 %v3604
        %v3676 = vunpack.c.l.b16 %v3605
        %v3677 = vunpack.c.l.b16 %v3606
        %v3678 = vunpack.c.l.b16 %v3607
        %v3679 = vunpack.c.l.b16 %v3608
        %v3680 = vunpack.c.l.b16 %v3609
        %v3681 = vunpack.c.l.b16 %v3610
        %v3682 = vunpack.c.l.b16 %v3611
        %v3683 = vunpack.c.l.b16 %v3612
        %v3684 = vunpack.c.l.b16 %v3613
        %v3685 = vunpack.c.l.b16 %v3614
        %v3686 = vunpack.c.l.b16 %v3615
        %v3687 = vunpack.c.l.b16 %v3616
        %v3688 = vunpack.c.l.b16 %v3617
        %v3689 = vunpack.c.l.b16 %v3618
        %v3690 = vunpack.c.l.b16 %v3619
        %v3691 = vunpack.c.l.b16 %v3620
        %v3692 = vunpack.c.l.b16 %v3621
        %v3693 = vunpack.c.l.b16 %v3622
        %v3694 = vunpack.c.l.b16 %v3623
        %v3695 = vpack.c.b16 %v3664, %v3663
        %v3696 = vpack.c.b16 %v3666, %v3665
        %v3697 = vpack.c.b16 %v3668, %v3667
        %v3698 = vpack.c.b16 %v3670, %v3669
        %v3699 = vpack.c.b16 %v3672, %v3671
        %v3700 = vpack.c.b16 %v3674, %v3673
        %v3701 = vpack.c.b16 %v3676, %v3675
        %v3702 = vpack.c.b16 %v3678, %v3677
        %v3703 = vpack.c.b16 %v3680, %v3679
        %v3704 = vpack.c.b16 %v3682, %v3681
        %v3705 = vpack.c.b16 %v3684, %v3683
        %v3706 = vpack.c.b16 %v3686, %v3685
        %v3707 = vpack.c.b16 %v3688, %v3687
        %v3708 = vpack.c.b16 %v3690, %v3689
        %v3709 = vpack.c.b16 %v3692, %v3691
        %v3710 = vpack.c.b16 %v3694, %v3693
        %3727 = vmatprep.subr.bf16.mxu0 0
        %3728 = vmatpush1.bf16.msra.mxu0 %v3695
        %3729 = vmatprep.subr.bf16.mxu0 0
        %3730 = vmatpush1.bf16.msra.mxu0 %v3696
        %3731 = vmatprep.subr.bf16.mxu0 0
        %3732 = vmatpush1.bf16.msra.mxu0 %v3697
        %3733 = vmatprep.subr.bf16.mxu0 0
        %3734 = vmatpush1.bf16.msra.mxu0 %v3698
        %3735 = vmatprep.subr.bf16.mxu0 0
        %3736 = vmatpush1.bf16.msra.mxu0 %v3699
        %3737 = vmatprep.subr.bf16.mxu0 0
        %3738 = vmatpush1.bf16.msra.mxu0 %v3700
        %3739 = vmatprep.subr.bf16.mxu0 0
        %3740 = vmatpush1.bf16.msra.mxu0 %v3701
        %3741 = vmatprep.subr.bf16.mxu0 0
        %3742 = vmatpush1.bf16.msra.mxu0 %v3702
        %3743 = vmatprep.subr.bf16.mxu0 0
        %3744 = vmatpush1.bf16.msra.mxu0 %v3703
        %3745 = vmatprep.subr.bf16.mxu0 0
        %3746 = vmatpush1.bf16.msra.mxu0 %v3704
        %3747 = vmatprep.subr.bf16.mxu0 0
        %3748 = vmatpush1.bf16.msra.mxu0 %v3705
        %3749 = vmatprep.subr.bf16.mxu0 0
        %3750 = vmatpush1.bf16.msra.mxu0 %v3706
        %3751 = vmatprep.subr.bf16.mxu0 0
        %3752 = vmatpush1.bf16.msra.mxu0 %v3707
        %3753 = vmatprep.subr.bf16.mxu0 0
        %3754 = vmatpush1.bf16.msra.mxu0 %v3708
        %3755 = vmatprep.subr.bf16.mxu0 0
        %3756 = vmatpush1.bf16.msra.mxu0 %v3709
        %3757 = vmatprep.subr.bf16.mxu0 0
        %3758 = vmatpush1.bf16.msra.mxu0 %v3710
        %3759 = vmatprep.mubr.bf16.mxu0 %v3577
        %3760 = vmatmul.mubr.bf16.gmra.mrb[0].mxu0 %v3576
        %v3761 = vpop.f32.mrb[0].mxu0
        %v3762 = vadd.f32 %v3629, %v3761
        %v3763 = vpop.f32.mrb[0].mxu0
        %v3764 = vpop.f32.mrb[0].mxu0
        %v3765 = vadd.f32 %v3629, %v3764
        %v3766 = vpop.f32.mrb[0].mxu0
        %3767 = vmatprep.mubr.bf16.mxu0 %v3579
        %3768 = vmatmul.mubr.bf16.gmra.mrb[0].mxu0 %v3578
        %v3769 = vpop.f32.mrb[0].mxu0
        %v3770 = vadd.f32 %v3629, %v3769
        %v3771 = vpop.f32.mrb[0].mxu0
        %v3772 = vpop.f32.mrb[0].mxu0
        %v3773 = vadd.f32 %v3629, %v3772
        %v3774 = vpop.f32.mrb[0].mxu0
        %3775 = vmatprep.mubr.bf16.mxu0 %v3581
        %3776 = vmatmul.mubr.bf16.gmra.mrb[0].mxu0 %v3580
        %v3777 = vpop.f32.mrb[0].mxu0
        %v3778 = vadd.f32 %v3629, %v3777
        %v3779 = vpop.f32.mrb[0].mxu0
        %v3780 = vpop.f32.mrb[0].mxu0
        %v3781 = vadd.f32 %v3629, %v3780
        %v3782 = vpop.f32.mrb[0].mxu0
        %3783 = vmatprep.mubr.bf16.mxu0 %v3583
        %3784 = vmatmul.mubr.bf16.gmra.mrb[0].mxu0 %v3582
        %v3785 = vpop.f32.mrb[0].mxu0
        %v3786 = vadd.f32 %v3629, %v3785
        %v3787 = vpop.f32.mrb[0].mxu0
        %v3788 = vpop.f32.mrb[0].mxu0
        %v3789 = vadd.f32 %v3629, %v3788
        %v3790 = vpop.f32.mrb[0].mxu0
        %3791 = vmatprep.mubr.bf16.mxu0 %v3585
        %3792 = vmatmul.mubr.bf16.gmra.mrb[0].mxu0 %v3584
        %v3793 = vpop.f32.mrb[0].mxu0
        %v3794 = vadd.f32 %v3629, %v3793
        %v3795 = vpop.f32.mrb[0].mxu0
        %v3796 = vpop.f32.mrb[0].mxu0
        %v3797 = vadd.f32 %v3629, %v3796
        %v3798 = vpop.f32.mrb[0].mxu0
        %3799 = vmatprep.mubr.bf16.mxu0 %v3587
        %3800 = vmatmul.mubr.bf16.gmra.mrb[0].mxu0 %v3586
        %v3801 = vpop.f32.mrb[0].mxu0
        %v3802 = vadd.f32 %v3629, %v3801
        %v3803 = vpop.f32.mrb[0].mxu0
        %v3804 = vpop.f32.mrb[0].mxu0
        %v3805 = vadd.f32 %v3629, %v3804
        %v3806 = vpop.f32.mrb[0].mxu0
        %3807 = vmatprep.mubr.bf16.mxu0 %v3589
        %3808 = vmatmul.mubr.bf16.gmra.mrb[0].mxu0 %v3588
        %v3809 = vpop.f32.mrb[0].mxu0
        %v3810 = vadd.f32 %v3629, %v3809
        %v3811 = vpop.f32.mrb[0].mxu0
        %v3812 = vpop.f32.mrb[0].mxu0
        %v3813 = vadd.f32 %v3629, %v3812
        %v3814 = vpop.f32.mrb[0].mxu0
        %3815 = vmatprep.mubr.bf16.mxu0 %v3591
        %3816 = vmatmul.mubr.bf16.gmra.mrb[0].mxu0 %v3590
        %v3817 = vpop.f32.mrb[0].mxu0
        %v3818 = vadd.f32 %v3629, %v3817
        %v3819 = vpop.f32.mrb[0].mxu0
        %v3820 = vpop.f32.mrb[0].mxu0
        %v3821 = vadd.f32 %v3629, %v3820
        %v3822 = vpop.f32.mrb[0].mxu0
        %3823 = vdwg.mxu0
        %v3824 = vadd.f32 %v3299, %v3762
        %v3825 = vadd.f32 %v3300, %v3765
        %v3826 = vadd.f32 %v3301, %v3770
        %v3827 = vadd.f32 %v3302, %v3773
        %v3828 = vadd.f32 %v3303, %v3778
        %v3829 = vadd.f32 %v3304, %v3781
        %v3830 = vadd.f32 %v3305, %v3786
        %v3831 = vadd.f32 %v3306, %v3789
        %v3832 = vadd.f32 %v3307, %v3794
        %v3833 = vadd.f32 %v3308, %v3797
        %v3834 = vadd.f32 %v3309, %v3802
        %v3835 = vadd.f32 %v3310, %v3805
        %v3836 = vadd.f32 %v3311, %v3810
        %v3837 = vadd.f32 %v3312, %v3813
        %v3838 = vadd.f32 %v3313, %v3818
        %v3839 = vadd.f32 %v3314, %v3821
        %3840 = vadd.xlane.f32.xlu0 %v3824
        %v3841 = vpop.xlane.xlu0 %3840
        %3842 = vadd.xlane.f32.xlu0 %v3825
        %v3843 = vpop.xlane.xlu0 %3842
        %3844 = vadd.xlane.f32.xlu0 %v3826
        %v3845 = vpop.xlane.xlu0 %3844
        %3846 = vadd.xlane.f32.xlu0 %v3827
        %v3847 = vpop.xlane.xlu0 %3846
        %3848 = vadd.xlane.f32.xlu0 %v3828
        %v3849 = vpop.xlane.xlu0 %3848
        %3850 = vadd.xlane.f32.xlu0 %v3829
        %v3851 = vpop.xlane.xlu0 %3850
        %3852 = vadd.xlane.f32.xlu0 %v3830
        %v3853 = vpop.xlane.xlu0 %3852
        %3854 = vadd.xlane.f32.xlu0 %v3831
        %v3855 = vpop.xlane.xlu0 %3854
        %3856 = vadd.xlane.f32.xlu0 %v3832
        %v3857 = vpop.xlane.xlu0 %3856
        %3858 = vadd.xlane.f32.xlu0 %v3833
        %v3859 = vpop.xlane.xlu0 %3858
        %3860 = vadd.xlane.f32.xlu0 %v3834
        %v3861 = vpop.xlane.xlu0 %3860
        %3862 = vadd.xlane.f32.xlu0 %v3835
        %v3863 = vpop.xlane.xlu0 %3862
        %3864 = vadd.xlane.f32.xlu0 %v3836
        %v3865 = vpop.xlane.xlu0 %3864
        %3866 = vadd.xlane.f32.xlu0 %v3837
        %v3867 = vpop.xlane.xlu0 %3866
        %3868 = vadd.xlane.f32.xlu0 %v3838
        %v3869 = vpop.xlane.xlu0 %3868
        %3870 = vadd.xlane.f32.xlu0 %v3839
        %v3871 = vpop.xlane.xlu0 %3870
        %v3872 = vmul.f32 %v3841, %v3124
        %v3873 = vmul.f32 %v3843, %v3124
        %v3874 = vmul.f32 %v3845, %v3124
        %v3875 = vmul.f32 %v3847, %v3124
        %v3876 = vmul.f32 %v3849, %v3124
        %v3877 = vmul.f32 %v3851, %v3124
        %v3878 = vmul.f32 %v3853, %v3124
        %v3879 = vmul.f32 %v3855, %v3124
        %v3880 = vmul.f32 %v3857, %v3124
        %v3881 = vmul.f32 %v3859, %v3124
        %v3882 = vmul.f32 %v3861, %v3124
        %v3883 = vmul.f32 %v3863, %v3124
        %v3884 = vmul.f32 %v3865, %v3124
        %v3885 = vmul.f32 %v3867, %v3124
        %v3886 = vmul.f32 %v3869, %v3124
        %v3887 = vmul.f32 %v3871, %v3124
        %v3888 = vsub.f32 %v3824, %v3872
        %v3889 = vsub.f32 %v3825, %v3873
        %v3890 = vsub.f32 %v3826, %v3874
        %v3891 = vsub.f32 %v3827, %v3875
        %v3892 = vsub.f32 %v3828, %v3876
        %v3893 = vsub.f32 %v3829, %v3877
        %v3894 = vsub.f32 %v3830, %v3878
        %v3895 = vsub.f32 %v3831, %v3879
        %v3896 = vsub.f32 %v3832, %v3880
        %v3897 = vsub.f32 %v3833, %v3881
        %v3898 = vsub.f32 %v3834, %v3882
        %v3899 = vsub.f32 %v3835, %v3883
        %v3900 = vsub.f32 %v3836, %v3884
        %v3901 = vsub.f32 %v3837, %v3885
        %v3902 = vsub.f32 %v3838, %v3886
        %v3903 = vsub.f32 %v3839, %v3887
        %v3904 = vmul.f32 %v3888, %v3888
        %v3905 = vmul.f32 %v3889, %v3889
        %v3906 = vmul.f32 %v3890, %v3890
        %v3907 = vmul.f32 %v3891, %v3891
        %v3908 = vmul.f32 %v3892, %v3892
        %v3909 = vmul.f32 %v3893, %v3893
        %v3910 = vmul.f32 %v3894, %v3894
        %v3911 = vmul.f32 %v3895, %v3895
        %v3912 = vmul.f32 %v3896, %v3896
        %v3913 = vmul.f32 %v3897, %v3897
        %v3914 = vmul.f32 %v3898, %v3898
        %v3915 = vmul.f32 %v3899, %v3899
        %v3916 = vmul.f32 %v3900, %v3900
        %v3917 = vmul.f32 %v3901, %v3901
        %v3918 = vmul.f32 %v3902, %v3902
        %v3919 = vmul.f32 %v3903, %v3903
        %3920 = vadd.xlane.f32.xlu0 %v3904
        %v3921 = vpop.xlane.xlu0 %3920
        %3922 = vadd.xlane.f32.xlu0 %v3905
        %v3923 = vpop.xlane.xlu0 %3922
        %3924 = vadd.xlane.f32.xlu0 %v3906
        %v3925 = vpop.xlane.xlu0 %3924
        %3926 = vadd.xlane.f32.xlu0 %v3907
        %v3927 = vpop.xlane.xlu0 %3926
        %3928 = vadd.xlane.f32.xlu0 %v3908
        %v3929 = vpop.xlane.xlu0 %3928
        %3930 = vadd.xlane.f32.xlu0 %v3909
        %v3931 = vpop.xlane.xlu0 %3930
        %3932 = vadd.xlane.f32.xlu0 %v3910
        %v3933 = vpop.xlane.xlu0 %3932
        %3934 = vadd.xlane.f32.xlu0 %v3911
        %v3935 = vpop.xlane.xlu0 %3934
        %3936 = vadd.xlane.f32.xlu0 %v3912
        %v3937 = vpop.xlane.xlu0 %3936
        %3938 = vadd.xlane.f32.xlu0 %v3913
        %v3939 = vpop.xlane.xlu0 %3938
        %3940 = vadd.xlane.f32.xlu0 %v3914
        %v3941 = vpop.xlane.xlu0 %3940
        %3942 = vadd.xlane.f32.xlu0 %v3915
        %v3943 = vpop.xlane.xlu0 %3942
        %3944 = vadd.xlane.f32.xlu0 %v3916
        %v3945 = vpop.xlane.xlu0 %3944
        %3946 = vadd.xlane.f32.xlu0 %v3917
        %v3947 = vpop.xlane.xlu0 %3946
        %3948 = vadd.xlane.f32.xlu0 %v3918
        %v3949 = vpop.xlane.xlu0 %3948
        %3950 = vadd.xlane.f32.xlu0 %v3919
        %v3951 = vpop.xlane.xlu0 %3950
        %v3952 = vmul.f32 %v3921, %v3124
        %v3953 = vmul.f32 %v3923, %v3124
        %v3954 = vmul.f32 %v3925, %v3124
        %v3955 = vmul.f32 %v3927, %v3124
        %v3956 = vmul.f32 %v3929, %v3124
        %v3957 = vmul.f32 %v3931, %v3124
        %v3958 = vmul.f32 %v3933, %v3124
        %v3959 = vmul.f32 %v3935, %v3124
        %v3960 = vmul.f32 %v3937, %v3124
        %v3961 = vmul.f32 %v3939, %v3124
        %v3962 = vmul.f32 %v3941, %v3124
        %v3963 = vmul.f32 %v3943, %v3124
        %v3964 = vmul.f32 %v3945, %v3124
        %v3965 = vmul.f32 %v3947, %v3124
        %v3966 = vmul.f32 %v3949, %v3124
        %v3967 = vmul.f32 %v3951, %v3124
        %v3968 = vadd.f32 %v3952, 1e-05
        %v3969 = vadd.f32 %v3953, 1e-05
        %v3970 = vadd.f32 %v3954, 1e-05
        %v3971 = vadd.f32 %v3955, 1e-05
        %v3972 = vadd.f32 %v3956, 1e-05
        %v3973 = vadd.f32 %v3957, 1e-05
        %v3974 = vadd.f32 %v3958, 1e-05
        %v3975 = vadd.f32 %v3959, 1e-05
        %v3976 = vadd.f32 %v3960, 1e-05
        %v3977 = vadd.f32 %v3961, 1e-05
        %v3978 = vadd.f32 %v3962, 1e-05
        %v3979 = vadd.f32 %v3963, 1e-05
        %v3980 = vadd.f32 %v3964, 1e-05
        %v3981 = vadd.f32 %v3965, 1e-05
        %v3982 = vadd.f32 %v3966, 1e-05
        %v3983 = vadd.f32 %v3967, 1e-05
        %v3984 = vrsqrt.pop %v3968
        %v3985 = vrsqrt.pop %v3969
        %v3986 = vrsqrt.pop %v3970
        %v3987 = vrsqrt.pop %v3971
        %v3988 = vrsqrt.pop %v3972
        %v3989 = vrsqrt.pop %v3973
        %v3990 = vrsqrt.pop %v3974
        %v3991 = vrsqrt.pop %v3975
        %v3992 = vrsqrt.pop %v3976
        %v3993 = vrsqrt.pop %v3977
        %v3994 = vrsqrt.pop %v3978
        %v3995 = vrsqrt.pop %v3979
        %v3996 = vrsqrt.pop %v3980
        %v3997 = vrsqrt.pop %v3981
        %v3998 = vrsqrt.pop %v3982
        %v3999 = vrsqrt.pop %v3983
        %v4000 = vmul.f32 %v3888, %v3984
        %v4001 = vmul.f32 %v3889, %v3985
        %v4002 = vmul.f32 %v3890, %v3986
        %v4003 = vmul.f32 %v3891, %v3987
        %v4004 = vmul.f32 %v3892, %v3988
        %v4005 = vmul.f32 %v3893, %v3989
        %v4006 = vmul.f32 %v3894, %v3990
        %v4007 = vmul.f32 %v3895, %v3991
        %v4008 = vmul.f32 %v3896, %v3992
        %v4009 = vmul.f32 %v3897, %v3993
        %v4010 = vmul.f32 %v3898, %v3994
        %v4011 = vmul.f32 %v3899, %v3995
        %v4012 = vmul.f32 %v3900, %v3996
        %v4013 = vmul.f32 %v3901, %v3997
        %v4014 = vmul.f32 %v3902, %v3998
        %v4015 = vmul.f32 %v3903, %v3999
        %v4016 = vld [vmem:[%s11] sm:$0x1]
        %v4018 = vlaneseq
        %v4019 = vshrl.u32 %v4018, 7
        %v4020 = vsub.s32 0, %v4019
        %v4021 = vrot.slane %v4016, %v4020
        %v4023 = vmul.f32 %v4000, %v4021
        %v4024 = vmul.f32 %v4001, %v4021
        %v4025 = vmul.f32 %v4002, %v4021
        %v4026 = vmul.f32 %v4003, %v4021
        %v4027 = vmul.f32 %v4004, %v4021
        %v4028 = vmul.f32 %v4005, %v4021
        %v4029 = vmul.f32 %v4006, %v4021
        %v4030 = vmul.f32 %v4007, %v4021
        %v4031 = vmul.f32 %v4008, %v4021
        %v4032 = vmul.f32 %v4009, %v4021
        %v4033 = vmul.f32 %v4010, %v4021
        %v4034 = vmul.f32 %v4011, %v4021
        %v4035 = vmul.f32 %v4012, %v4021
        %v4036 = vmul.f32 %v4013, %v4021
        %v4037 = vmul.f32 %v4014, %v4021
        %v4038 = vmul.f32 %v4015, %v4021
        %v4039 = vld [vmem:[%s12] sm:$0x1]
        %v4041 = vlaneseq
        %v4042 = vshrl.u32 %v4041, 7
        %v4043 = vsub.s32 0, %v4042
        %v4044 = vrot.slane %v4039, %v4043
        %v4046 = vadd.f32 %v4023, %v4044
        %v4047 = vadd.f32 %v4024, %v4044
        %v4048 = vadd.f32 %v4025, %v4044
        %v4049 = vadd.f32 %v4026, %v4044
        %v4050 = vadd.f32 %v4027, %v4044
        %v4051 = vadd.f32 %v4028, %v4044
        %v4052 = vadd.f32 %v4029, %v4044
        %v4053 = vadd.f32 %v4030, %v4044
        %v4054 = vadd.f32 %v4031, %v4044
        %v4055 = vadd.f32 %v4032, %v4044
        %v4056 = vadd.f32 %v4033, %v4044
        %v4057 = vadd.f32 %v4034, %v4044
        %v4058 = vadd.f32 %v4035, %v4044
        %v4059 = vadd.f32 %v4036, %v4044
        %v4060 = vadd.f32 %v4037, %v4044
        %v4061 = vadd.f32 %v4038, %v4044
        %4062 = vst [vmem:[%s516] sm:$0xff] %v4046
        %4063 = vst [vmem:[%s516 + $0x8] sm:$0xff] %v4047
        %4064 = vst [vmem:[%s516 + $0x10] sm:$0xff] %v4048
        %4065 = vst [vmem:[%s516 + $0x18] sm:$0xff] %v4049
        %4066 = vst [vmem:[%s516 + $0x20] sm:$0xff] %v4050
        %4067 = vst [vmem:[%s516 + $0x28] sm:$0xff] %v4051
        %4068 = vst [vmem:[%s516 + $0x30] sm:$0xff] %v4052
        %4069 = vst [vmem:[%s516 + $0x38] sm:$0xff] %v4053
        %4070 = vst [vmem:[%s516 + $0x40] sm:$0xff] %v4054
        %4071 = vst [vmem:[%s516 + $0x48] sm:$0xff] %v4055
        %4072 = vst [vmem:[%s516 + $0x50] sm:$0xff] %v4056
        %4073 = vst [vmem:[%s516 + $0x58] sm:$0xff] %v4057
        %4074 = vst [vmem:[%s516 + $0x60] sm:$0xff] %v4058
        %4075 = vst [vmem:[%s516 + $0x68] sm:$0xff] %v4059
        %4076 = vst [vmem:[%s516 + $0x70] sm:$0xff] %v4060
        %4077 = vst [vmem:[%s516 + $0x78] sm:$0xff] %v4061
        %s4078 = sand.u32 %s318, 1
        %s4079 = scalar_lea.sflag [#allocation4], %s4078
        %s4080 = sand.u32 %s318, 1
        %s4081 = smul.addr %s4080, 128
        %s4082 = scalar_lea.vmem [#allocation11], %s4081
        // Predicated region
        $region93: #{tpu_custom_call.1} parent=71 // pred_check
          %p4083 = pneg %p328
        $region94: #{tpu_custom_call.1} parent=71 // pred_check_branch
          %4085 = sbr.rel (%p4083) target = $region96
        $region95: #{tpu_custom_call.1} parent=71 // pred_region
          %s4087 = ssub.s32 2048, 2048
          %4088 = vsyncadd %s4079, %s4087
          %s4089 = smul.addr %s32, 16
          %s4090 = smul.addr %s4089, 128
          %s4091 = scalar_lea.hbm %s13, %s4090
          %s4092 = sshll.u32 %s4082, 4
          %s4093 = int_to_ptr.vmem [resolvable:$true] %s4092
          %4098 = dma.vmem_to_hbm [thread:$0]  %s4093, 2048, %s4091, %s4079, 128, 128, 8
        $region96: #{tpu_custom_call.1} parent=71 // pred_fallthru
          _
      $region72: #{tpu_custom_call.1} parent=5 // pred_fallthru
        _
      %p4099 = scmp.le.s32.totalorder 2, %s27
      // Predicated region
      $region97: #{tpu_custom_call.1} parent=5 // pred_check
        %p4100 = pneg %p4099
      $region98: #{tpu_custom_call.1} parent=5 // pred_check_branch
        %4102 = sbr.rel (%p4100) target = $region100
      $region99: #{tpu_custom_call.1} parent=5 // pred_region
        %s4103 = ssub.s32 %s27, 2
        // Predicated region
        $region101: #{tpu_custom_call.1} parent=99 // pred_check
          %p4104 = pneg %p334
        $region102: #{tpu_custom_call.1} parent=99 // pred_check_branch
          %4106 = sbr.rel (%p4104) target = $region104
        $region103: #{tpu_custom_call.1} parent=99 // pred_region
          %s4107 = sand.u32 %s319, 1
          %s4108 = scalar_lea.sflag [#allocation4], %s4107
          %s4109 = sand.u32 %s319, 1
          %s4110 = smul.addr %s4109, 128
          %s4111 = scalar_lea.vmem [#allocation11], %s4110
          %4112 = dma.done %s4108, 2048
        $region104: #{tpu_custom_call.1} parent=99 // pred_fallthru
          _
      $region100: #{tpu_custom_call.1} parent=5 // pred_fallthru
        _
    $region6: #{tpu_custom_call.1} parent=1 // loop_footer
      %s31 = sadd.s32 1, %s27
    $region7: #{tpu_custom_call.1} parent=1 // loop_footer_branch
      %26 = sbr.rel target = $region3
    $region8: #{tpu_custom_call.1} parent=1 // loop_exit
      _
    %4113 = vsyncpa [#allocation3], 1
    %s4114 = scalar_lea.sflag [#allocation3], 1
    %4115 = vsyncpa %s4114, 1
    %4116 = vsyncpa [#allocation6], 1
    %4117 = vsyncpa [#allocation9], 1
    %4118 = vsyncpa [#allocation4], 1
    %s4119 = scalar_lea.sflag [#allocation4], 1
    %4120 = vsyncpa %s4119, 1

</llo_original>
